<compile_context>
chip_gen: v7x
topology: tpu7x:2x2x1
jax: 0.10.0
libtpu: 0.0.40
codegen_flags: <defaults>
</compile_context>

<pallas_src>
import functools

import jax
import jax.numpy as jnp
from jax import lax
from jax.experimental import pallas as pl
from jax.experimental.pallas import tpu as pltpu

LAMB_L = 0.02   # SVT threshold   (hardcoded in single_cell)
LAMB_S = 0.001  # mixed-norm threshold (hardcoded in single_cell)
_LANE = 128


def _round_up(x, m):
    return (x + m - 1) // m * m


# ------------------------------ Pallas kernels ------------------------------

def _precompute_kernel(np_cols, cdt, d_ref, w36_ref, b36_ref, cl_ref, cs_ref):
    """[C_L | C_S] = D @ [W3^T | W6^T] + [b1+b2+b3 | b4+b5+b6] (one MXU pass)."""
    d = d_ref[...].astype(cdt)
    both = jnp.dot(d, w36_ref[...],
                   preferred_element_type=jnp.float32) + b36_ref[...]
    cl_ref[...] = both[:, :np_cols]
    cs_ref[...] = both[:, np_cols:]


def _ista_step_kernel(cdt,
                      u_ref, sv_ref, vt_ref, s_ref, cl_ref, cs_ref,
                      w1t_ref, w2t_ref, w4t_ref, w5t_ref,
                      l_out, s_out, x_out):
    # --- SVT reconstruction: L_new = (U * max(sigma - lamb_L, 0)) @ V^T
    #     Contraction dim is padded to 128; padded sigmas are 0, so the
    #     padded columns of (U * thr) and padded rows of V^T contribute 0.
    s_thr = jnp.maximum(sv_ref[...] - LAMB_L, 0.0)                  # (1, Np)
    u_scaled = (u_ref[...] * s_thr).astype(cdt)                     # (TM, Np)
    l_new = jnp.dot(u_scaled, vt_ref[...].astype(cdt),
                    preferred_element_type=jnp.float32)             # (TM, Np)
    l_out[...] = l_new

    # --- S update: Z = C_S + L_new @ W4^T + S_old @ W5^T  (two accum. dots)
    l_c = l_new.astype(cdt)
    s_old = s_ref[...].astype(cdt)
    z = (cs_ref[...]
         + jnp.dot(l_c, w4t_ref[...], preferred_element_type=jnp.float32)
         + jnp.dot(s_old, w5t_ref[...], preferred_element_type=jnp.float32))

    # mixed soft-threshold (row-wise): Z * max(0, 1 - lamb_S / ||Z_row||_2)
    sumsq = jnp.sum(z * z, axis=1, keepdims=True)
    scale = jnp.maximum(0.0, 1.0 - LAMB_S * lax.rsqrt(sumsq + 1e-30))
    s_new = z * scale
    s_out[...] = s_new

    # --- next iteration's SVD input: X = C_L + L_new @ W1^T + S_new @ W2^T
    x_out[...] = (cl_ref[...]
                  + jnp.dot(l_c, w1t_ref[...], preferred_element_type=jnp.float32)
                  + jnp.dot(s_new.astype(cdt), w2t_ref[...],
                            preferred_element_type=jnp.float32))


# ------------------------------ pallas_call wrappers -------------------------

def _whole_vmem():
    return pl.BlockSpec(memory_space=pltpu.MemorySpace.VMEM)


def _precompute(d_p, w36, b36, np_cols, block_m, compute_dtype):
    M = d_p.shape[0]
    Np = np_cols
    kern = functools.partial(_precompute_kernel, np_cols, compute_dtype)
    out_shape = (jax.ShapeDtypeStruct((M, Np), jnp.float32),
                 jax.ShapeDtypeStruct((M, Np), jnp.float32))
    if block_m >= M:
        return pl.pallas_call(
            kern, out_shape=out_shape,
            in_specs=[_whole_vmem() for _ in range(3)],
            out_specs=(_whole_vmem(), _whole_vmem()),
        )(d_p, w36, b36)
    tm = block_m
    row = lambda i: (i, 0)
    const = lambda i: (0, 0)
    return pl.pallas_call(
        kern, out_shape=out_shape, grid=(M // tm,),
        in_specs=[pl.BlockSpec((tm, Np), row),
                  pl.BlockSpec((Np, 2 * Np), const),
                  pl.BlockSpec((1, 2 * Np), const)],
        out_specs=(pl.BlockSpec((tm, Np), row),
                   pl.BlockSpec((tm, Np), row)),
        compiler_params=pltpu.CompilerParams(
            dimension_semantics=("parallel",),
            vmem_limit_bytes=32 * 1024 * 1024),
    )(d_p, w36, b36)


def _ista_step(u_pad, sv_pad, vt_pad, s_old, c_l, c_s, w1t, w2t, w4t, w5t,
               *, compute_dtype, block_m):
    M, Np = s_old.shape
    kern = functools.partial(_ista_step_kernel, compute_dtype)
    out_shape = tuple(jax.ShapeDtypeStruct((M, Np), jnp.float32) for _ in range(3))
    args = (u_pad, sv_pad, vt_pad, s_old, c_l, c_s, w1t, w2t, w4t, w5t)
    if block_m >= M:
        return pl.pallas_call(
            kern, out_shape=out_shape,
            in_specs=[_whole_vmem() for _ in range(10)],
            out_specs=tuple(_whole_vmem() for _ in range(3)),
        )(*args)
    tm = block_m
    row = lambda i: (i, 0)
    const = lambda i: (0, 0)
    in_specs = [pl.BlockSpec((tm, Np), row),      # U (K padded to Np)
                pl.BlockSpec((1, Np), const),     # sigma (padded)
                pl.BlockSpec((Np, Np), const),    # V^T (padded)
                pl.BlockSpec((tm, Np), row),      # S_old
                pl.BlockSpec((tm, Np), row),      # C_L
                pl.BlockSpec((tm, Np), row),      # C_S
                pl.BlockSpec((Np, Np), const),    # W1^T
                pl.BlockSpec((Np, Np), const),    # W2^T
                pl.BlockSpec((Np, Np), const),    # W4^T
                pl.BlockSpec((Np, Np), const)]    # W5^T
    out_specs = tuple(pl.BlockSpec((tm, Np), row) for _ in range(3))
    return pl.pallas_call(
        kern, out_shape=out_shape, grid=(M // tm,),
        in_specs=in_specs, out_specs=out_specs,
        compiler_params=pltpu.CompilerParams(
            dimension_semantics=("parallel",),
            vmem_limit_bytes=32 * 1024 * 1024),
    )(*args)


# ------------------------------ ISTA forward ---------------------------------

def init_params(N, key):
    """Deterministic init matching nn.Linear default (uniform +/- 1/sqrt(N))."""
    bound = 1.0 / jnp.sqrt(jnp.float32(N))
    keys = jax.random.split(key, 12)
    params = {}
    for i in range(1, 7):
        params[f"W{i}"] = jax.random.uniform(
            keys[2 * (i - 1)], (N, N), jnp.float32, -bound, bound)
        params[f"b{i}"] = jax.random.uniform(
            keys[2 * (i - 1) + 1], (N,), jnp.float32, -bound, bound)
    # lamb_L = 0.02, lamb_S = 0.001 are fixed constants in single_cell; the
    # lamb_L weight check in torch forward() is a no-op (0.02 > 1e-4).
    return params


def ista_forward(params, D, iters, *, compute_dtype=jnp.float32, block_m=None):
    M, N = D.shape
    assert M >= N, "torch SVT code path requires M >= N"
    Np = _round_up(N, _LANE)
    f32 = jnp.float32
    cdt = compute_dtype
    if block_m is None or block_m >= M:
        block_m = M            # toy M: whole-array VMEM, no grid
    else:
        assert M % block_m == 0, "block_m must divide M"

    def pad_mat(w, rows, cols, dtype=f32):
        out = jnp.zeros((rows, cols), dtype)
        return out.at[:w.shape[0], :w.shape[1]].set(w.astype(dtype))

    # pre-transposed, lane-padded per-update weights (compute dtype operands,
    # f32 accumulation inside the kernel).
    w1t = pad_mat(params["W1"].T, Np, Np, cdt)
    w2t = pad_mat(params["W2"].T, Np, Np, cdt)
    w4t = pad_mat(params["W4"].T, Np, Np, cdt)
    w5t = pad_mat(params["W5"].T, Np, Np, cdt)

    # fused precompute weights / biases: D @ [W3^T | W6^T] + [bL | bS]
    w36 = (jnp.zeros((Np, 2 * Np), cdt)
           .at[:N, :N].set(params["W3"].T.astype(cdt))
           .at[:N, Np:Np + N].set(params["W6"].T.astype(cdt)))
    b36 = (jnp.zeros((1, 2 * Np), f32)
           .at[0, :N].set((params["b1"] + params["b2"] + params["b3"]).astype(f32))
           .at[0, Np:Np + N].set((params["b4"] + params["b5"] + params["b6"]).astype(f32)))

    d_p = pad_mat(D, M, Np, f32)

    # loop-invariant D projections, computed exactly once.
    c_l, c_s = _precompute(d_p, w36, b36, Np, block_m, cdt)

    L0 = jnp.zeros((M, Np), f32)
    S0 = jnp.zeros((M, Np), f32)
    X0 = c_l                                    # first cell: L = S = 0

    def body(_, carry):
        L, S, X = carry
        # TODO(synk): the SVD factorization has no Pallas primitive; it runs
        # via jnp.linalg.svd (XLA).  Everything else per iteration (SVT
        # reconstruct + mix_soft + next X) is one fused Pallas call.
        U, s_vec, Vt = jnp.linalg.svd(X[:, :N], full_matrices=False)   # K = N
        # pad the contraction dim to Np (padded sigmas are 0 -> unchanged).
        u_pad = jnp.zeros((M, Np), f32).at[:, :N].set(U)
        sv_pad = jnp.zeros((1, Np), f32).at[0, :N].set(s_vec)
        vt_pad = jnp.zeros((Np, Np), f32).at[:N, :N].set(Vt)
        L_new, S_new, X_new = _ista_step(
            u_pad, sv_pad, vt_pad, S, c_l, c_s, w1t, w2t, w4t, w5t,
            compute_dtype=cdt, block_m=block_m)
        return (L_new, S_new, X_new)

    # torch forward(): one single_cell before the loop + Iters in the loop.
    L, S, _ = lax.fori_loop(0, iters + 1, body, (L0, S0, X0))
    return L[:, :N], S[:, :N]


# ------------------------------ pure-JAX reference ---------------------------

def ista_forward_ref(params, D, iters):
    """Pure-JAX mirror of the torch module math (f32, highest matmul precision)."""
    M, N = D.shape
    f32 = jnp.float32
    prec = lax.Precision.HIGHEST

    def lin(x, i):
        return (jnp.dot(x, params[f"W{i}"].T.astype(f32), precision=prec)
                + params[f"b{i}"].astype(f32))

    def svt(X, lamb):
        U, s, Vt = jnp.linalg.svd(X, full_matrices=False)
        return jnp.dot(U * jnp.maximum(s - lamb, 0.0), Vt, precision=prec)

    def mix_soft(X, lamb):
        nrm = jnp.sqrt(jnp.sum(X * X, axis=1, keepdims=True))
        scale = jnp.maximum(0.0, 1.0 - lamb / jnp.maximum(nrm, 1e-30))
        return X * scale

    L = jnp.zeros((M, N), f32)
    S = jnp.zeros((M, N), f32)
    Df = D.astype(f32)
    for _ in range(iters + 1):
        L_new = svt(lin(Df, 3) + lin(L, 1) + lin(S, 2), LAMB_L)
        S = mix_soft(lin(Df, 6) + lin(L_new, 4) + lin(S, 5), LAMB_S)
        L = L_new
    return L, S


if __name__ == "__main__":
    # Module signature ISTA(M, N, Iters); forward takes D of shape (M, N).
    # Requires M >= N (torch SVT code only works in that regime).
    M, N, Iters = 16, 8, 3
    key = jax.random.PRNGKey(0)
    k_d, k_p = jax.random.split(key)
    D = jax.random.normal(k_d, (M, N), jnp.float32)
    params = init_params(N, k_p)

    # default path: f32, whole-array VMEM specs (no grid) for toy shapes.
    fwd = jax.jit(functools.partial(ista_forward, iters=Iters))
    L, S = fwd(params, D)
    jax.block_until_ready((L, S))
    assert L.shape == (M, N) and S.shape == (M, N)
    assert bool(jnp.all(jnp.isfinite(L))) and bool(jnp.all(jnp.isfinite(S)))

    # M-tiled path (grid over rows, "parallel" axis) must match the no-grid path.
    fwd_tiled = jax.jit(functools.partial(ista_forward, iters=Iters, block_m=8))
    Lt, St = fwd_tiled(params, D)
    jax.block_until_ready((Lt, St))
    assert float(jnp.max(jnp.abs(Lt - L))) < 1e-4
    assert float(jnp.max(jnp.abs(St - S))) < 1e-4

    # pure-JAX reference sanity check.
    Lr, Sr = jax.jit(functools.partial(ista_forward_ref, iters=Iters))(params, D)
    jax.block_until_ready((Lr, Sr))
    err = max(float(jnp.max(jnp.abs(L - Lr))), float(jnp.max(jnp.abs(S - Sr))))
    assert err < 1e-2, f"kernel vs reference max |diff| = {err}"

    # bf16-operand / f32-accumulate option (v6e/v7x MXU throughput path).
    fwd_bf16 = jax.jit(functools.partial(
        ista_forward, iters=Iters, compute_dtype=jnp.bfloat16))
    Lb, Sb = fwd_bf16(params, D)
    jax.block_until_ready((Lb, Sb))
    assert bool(jnp.all(jnp.isfinite(Lb))) and bool(jnp.all(jnp.isfinite(Sb)))

    print("KERNEL_OK")
</pallas_src>

<mosaic_0001>
module attributes {stable_mosaic.version = 11 : i64} {
  func.func @_precompute_kernel(%arg0: memref<16x128xf32, #tpu.memory_space<vmem>>, %arg1: memref<128x256xf32, #tpu.memory_space<vmem>>, %arg2: memref<1x256xf32, #tpu.memory_space<vmem>>, %arg3: memref<16x128xf32, #tpu.memory_space<vmem>>, %arg4: memref<16x128xf32, #tpu.memory_space<vmem>>) attributes {dimension_semantics = [], scalar_prefetch = 0 : i64, scratch_operands = 0 : i64, tpu.core_type = #tpu.core_type<tc>} {
    %c0 = arith.constant 0 : index
    %c0_0 = arith.constant 0 : index
    %0 = vector.load %arg0[%c0, %c0_0] : memref<16x128xf32, #tpu.memory_space<vmem>>, vector<16x128xf32>
    %c0_1 = arith.constant 0 : index
    %c0_2 = arith.constant 0 : index
    %1 = vector.load %arg1[%c0_1, %c0_2] : memref<128x256xf32, #tpu.memory_space<vmem>>, vector<128x256xf32>
    %cst = arith.constant dense<0.000000e+00> : vector<16x256xf32>
    %2 = tpu.matmul %0, %1, %cst {dimension_numbers = #tpu.dot_dimension_numbers<[1], [0], [0], [1], [0, 0, 1, 1], [], []>} : vector<16x128xf32>, vector<128x256xf32>, vector<16x256xf32> -> vector<16x256xf32>
    %c0_3 = arith.constant 0 : index
    %c0_4 = arith.constant 0 : index
    %3 = vector.load %arg2[%c0_3, %c0_4] : memref<1x256xf32, #tpu.memory_space<vmem>>, vector<1x256xf32>
    %4 = vector.broadcast %3 : vector<1x256xf32> to vector<16x256xf32>
    %5 = arith.addf %2, %4 : vector<16x256xf32>
    %6 = vector.extract_strided_slice %5 {offsets = [0, 0], sizes = [16, 128], strides = [1, 1]} : vector<16x256xf32> to vector<16x128xf32>
    %c0_5 = arith.constant 0 : index
    %c0_6 = arith.constant 0 : index
    %7 = vector.load %arg3[%c0_5, %c0_6] : memref<16x128xf32, #tpu.memory_space<vmem>>, vector<16x128xf32>
    tpu.vector_store %arg3[%c0_5, %c0_6], %6 {strides = array<i32>} : memref<16x128xf32, #tpu.memory_space<vmem>>, vector<16x128xf32>,
    %8 = vector.extract_strided_slice %5 {offsets = [0, 128], sizes = [16, 128], strides = [1, 1]} : vector<16x256xf32> to vector<16x128xf32>
    %c0_7 = arith.constant 0 : index
    %c0_8 = arith.constant 0 : index
    %9 = vector.load %arg4[%c0_7, %c0_8] : memref<16x128xf32, #tpu.memory_space<vmem>>, vector<16x128xf32>
    tpu.vector_store %arg4[%c0_7, %c0_8], %8 {strides = array<i32>} : memref<16x128xf32, #tpu.memory_space<vmem>>, vector<16x128xf32>,
    return
  }
}

module attributes {stable_mosaic.version = 11 : i64} {
  func.func @_ista_step_kernel(%arg0: memref<16x128xf32, #tpu.memory_space<vmem>>, %arg1: memref<1x128xf32, #tpu.memory_space<vmem>>, %arg2: memref<128x128xf32, #tpu.memory_space<vmem>>, %arg3: memref<16x128xf32, #tpu.memory_space<vmem>>, %arg4: memref<16x128xf32, #tpu.memory_space<vmem>>, %arg5: memref<16x128xf32, #tpu.memory_space<vmem>>, %arg6: memref<128x128xf32, #tpu.memory_space<vmem>>, %arg7: memref<128x128xf32, #tpu.memory_space<vmem>>, %arg8: memref<128x128xf32, #tpu.memory_space<vmem>>, %arg9: memref<128x128xf32, #tpu.memory_space<vmem>>, %arg10: memref<16x128xf32, #tpu.memory_space<vmem>>, %arg11: memref<16x128xf32, #tpu.memory_space<vmem>>, %arg12: memref<16x128xf32, #tpu.memory_space<vmem>>) attributes {dimension_semantics = [], scalar_prefetch = 0 : i64, scratch_operands = 0 : i64, tpu.core_type = #tpu.core_type<tc>} {
    %c0 = arith.constant 0 : index
    %c0_0 = arith.constant 0 : index
    %0 = vector.load %arg1[%c0, %c0_0] : memref<1x128xf32, #tpu.memory_space<vmem>>, vector<1x128xf32>
    %cst = arith.constant 2.000000e-02 : f32
    %1 = vector.broadcast %cst : f32 to vector<1x128xf32>
    %2 = arith.subf %0, %1 : vector<1x128xf32>
    %cst_1 = arith.constant 0.000000e+00 : f32
    %3 = vector.broadcast %cst_1 : f32 to vector<1x128xf32>
    %4 = arith.maximumf %2, %3 : vector<1x128xf32>
    %c0_2 = arith.constant 0 : index
    %c0_3 = arith.constant 0 : index
    %5 = vector.load %arg0[%c0_2, %c0_3] : memref<16x128xf32, #tpu.memory_space<vmem>>, vector<16x128xf32>
    %6 = vector.broadcast %4 : vector<1x128xf32> to vector<16x128xf32>
    %7 = arith.mulf %5, %6 : vector<16x128xf32>
    %c0_4 = arith.constant 0 : index
    %c0_5 = arith.constant 0 : index
    %8 = vector.load %arg2[%c0_4, %c0_5] : memref<128x128xf32, #tpu.memory_space<vmem>>, vector<128x128xf32>
    %cst_6 = arith.constant dense<0.000000e+00> : vector<16x128xf32>
    %9 = tpu.matmul %7, %8, %cst_6 {dimension_numbers = #tpu.dot_dimension_numbers<[1], [0], [0], [1], [0, 0, 1, 1], [], []>} : vector<16x128xf32>, vector<128x128xf32>, vector<16x128xf32> -> vector<16x128xf32>
    %c0_7 = arith.constant 0 : index
    %c0_8 = arith.constant 0 : index
    %10 = vector.load %arg10[%c0_7, %c0_8] : memref<16x128xf32, #tpu.memory_space<vmem>>, vector<16x128xf32>
    tpu.vector_store %arg10[%c0_7, %c0_8], %9 {strides = array<i32>} : memref<16x128xf32, #tpu.memory_space<vmem>>, vector<16x128xf32>,
    %c0_9 = arith.constant 0 : index
    %c0_10 = arith.constant 0 : index
    %11 = vector.load %arg3[%c0_9, %c0_10] : memref<16x128xf32, #tpu.memory_space<vmem>>, vector<16x128xf32>
    %c0_11 = arith.constant 0 : index
    %c0_12 = arith.constant 0 : index
    %12 = vector.load %arg5[%c0_11, %c0_12] : memref<16x128xf32, #tpu.memory_space<vmem>>, vector<16x128xf32>
    %c0_13 = arith.constant 0 : index
    %c0_14 = arith.constant 0 : index
    %13 = vector.load %arg8[%c0_13, %c0_14] : memref<128x128xf32, #tpu.memory_space<vmem>>, vector<128x128xf32>
    %cst_15 = arith.constant dense<0.000000e+00> : vector<16x128xf32>
    %14 = tpu.matmul %9, %13, %cst_15 {dimension_numbers = #tpu.dot_dimension_numbers<[1], [0], [0], [1], [0, 0, 1, 1], [], []>} : vector<16x128xf32>, vector<128x128xf32>, vector<16x128xf32> -> vector<16x128xf32>
    %15 = arith.addf %12, %14 : vector<16x128xf32>
    %c0_16 = arith.constant 0 : index
    %c0_17 = arith.constant 0 : index
    %16 = vector.load %arg9[%c0_16, %c0_17] : memref<128x128xf32, #tpu.memory_space<vmem>>, vector<128x128xf32>
    %cst_18 = arith.constant dense<0.000000e+00> : vector<16x128xf32>
    %17 = tpu.matmul %11, %16, %cst_18 {dimension_numbers = #tpu.dot_dimension_numbers<[1], [0], [0], [1], [0, 0, 1, 1], [], []>} : vector<16x128xf32>, vector<128x128xf32>, vector<16x128xf32> -> vector<16x128xf32>
    %18 = arith.addf %15, %17 : vector<16x128xf32>
    %19 = arith.mulf %18, %18 : vector<16x128xf32>
    %cst_19 = arith.constant dense<0.000000e+00> : vector<16xf32>
    %20 = vector.multi_reduction <add>, %19, %cst_19 [1] : vector<16x128xf32> to vector<16xf32>
    %21 = vector.shape_cast %20 : vector<16xf32> to vector<16x1xf32>
    %cst_20 = arith.constant 1.000000e-30 : f32
    %22 = vector.broadcast %cst_20 : f32 to vector<16x1xf32>
    %23 = arith.addf %21, %22 : vector<16x1xf32>
    %24 = math.rsqrt %23 : vector<16x1xf32>
    %cst_21 = arith.constant 1.000000e-03 : f32
    %25 = vector.broadcast %cst_21 : f32 to vector<16x1xf32>
    %26 = arith.mulf %25, %24 : vector<16x1xf32>
    %cst_22 = arith.constant 1.000000e+00 : f32
    %27 = vector.broadcast %cst_22 : f32 to vector<16x1xf32>
    %28 = arith.subf %27, %26 : vector<16x1xf32>
    %cst_23 = arith.constant 0.000000e+00 : f32
    %29 = vector.broadcast %cst_23 : f32 to vector<16x1xf32>
    %30 = arith.maximumf %29, %28 : vector<16x1xf32>
    %31 = vector.broadcast %30 : vector<16x1xf32> to vector<16x128xf32>
    %32 = arith.mulf %18, %31 : vector<16x128xf32>
    %c0_24 = arith.constant 0 : index
    %c0_25 = arith.constant 0 : index
    %33 = vector.load %arg11[%c0_24, %c0_25] : memref<16x128xf32, #tpu.memory_space<vmem>>, vector<16x128xf32>
    tpu.vector_store %arg11[%c0_24, %c0_25], %32 {strides = array<i32>} : memref<16x128xf32, #tpu.memory_space<vmem>>, vector<16x128xf32>,
    %c0_26 = arith.constant 0 : index
    %c0_27 = arith.constant 0 : index
    %34 = vector.load %arg4[%c0_26, %c0_27] : memref<16x128xf32, #tpu.memory_space<vmem>>, vector<16x128xf32>
    %c0_28 = arith.constant 0 : index
    %c0_29 = arith.constant 0 : index
    %35 = vector.load %arg6[%c0_28, %c0_29] : memref<128x128xf32, #tpu.memory_space<vmem>>, vector<128x128xf32>
    %cst_30 = arith.constant dense<0.000000e+00> : vector<16x128xf32>
    %36 = tpu.matmul %9, %35, %cst_30 {dimension_numbers = #tpu.dot_dimension_numbers<[1], [0], [0], [1], [0, 0, 1, 1], [], []>} : vector<16x128xf32>, vector<128x128xf32>, vector<16x128xf32> -> vector<16x128xf32>
    %37 = arith.addf %34, %36 : vector<16x128xf32>
    %c0_31 = arith.constant 0 : index
    %c0_32 = arith.constant 0 : index
    %38 = vector.load %arg7[%c0_31, %c0_32] : memref<128x128xf32, #tpu.memory_space<vmem>>, vector<128x128xf32>
    %cst_33 = arith.constant dense<0.000000e+00> : vector<16x128xf32>
    %39 = tpu.matmul %32, %38, %cst_33 {dimension_numbers = #tpu.dot_dimension_numbers<[1], [0], [0], [1], [0, 0, 1, 1], [], []>} : vector<16x128xf32>, vector<128x128xf32>, vector<16x128xf32> -> vector<16x128xf32>
    %40 = arith.addf %37, %39 : vector<16x128xf32>
    %c0_34 = arith.constant 0 : index
    %c0_35 = arith.constant 0 : index
    %41 = vector.load %arg12[%c0_34, %c0_35] : memref<16x128xf32, #tpu.memory_space<vmem>>, vector<16x128xf32>
    tpu.vector_store %arg12[%c0_34, %c0_35], %40 {strides = array<i32>} : memref<16x128xf32, #tpu.memory_space<vmem>>, vector<16x128xf32>,
    return
  }
}

</mosaic_0001>

<llo_original>
// kernel: custom-call.45
$region0: #{custom-call.45}
  %s0 = inlined_call_operand.hbm [shape: f32[16,128], index: 0, kind: output, shape index: {}]

// kernel: custom-call.59
$region0: #{custom-call.59}
  %s0 = inlined_call_operand.vmem [shape: f32[16,8], index: 0, kind: input, shape index: {}]
  %s1 = inlined_call_operand.vmem [shape: f32[16,8], index: 1, kind: output, shape index: {0}]
  %s2 = inlined_call_operand.vmem [shape: f32[8], index: 2, kind: output, shape index: {1}]
  %3 = xla_tuple %s1, %s2
  $region1: #{custom-call.59} parent=0
    #allocation0 [shape = 'u8[8192]{0}', space=vmem, size = 0x2000, scoped, tag = 'operand span for operand 0']
    #allocation1 [shape = 'u8[8192]{0}', space=vmem, size = 0x2000, scoped, tag = 'operand span for operand 1']
    #allocation2 [shape = 'u8[4096]{0}', space=vmem, size = 0x1000, scoped, tag = 'operand span for operand 2']
    #allocation3 [shape = 'u8[512]{0}', space=vmem, size = 0x400, scoped, tag = 'packed  for operand 2']
    #allocation4 [shape = 'f32[16,128]{1,0}', space=vmem, size = 0x2000, scoped, tag = 'scratch for Householder reflectors']
    // Predicated region
    $region2: #{custom-call.59} parent=1 // pred_check
      _
    $region3: #{custom-call.59} parent=1 // pred_check_branch
      %5 = sbr.rel (0) target = $region5
    $region4: #{custom-call.59} parent=1 // pred_region
      // Predicated region
      $region6: #{custom-call.59} parent=4 // pred_check
        _
      $region7: #{custom-call.59} parent=4 // pred_check_branch
        %7 = sbr.rel (0) target = $region9
      $region8: #{custom-call.59} parent=4 // pred_region
        // Predicated region
        $region21: #{custom-call.59} parent=8 // pred_check
          _
        $region22: #{custom-call.59} parent=8 // pred_check_branch
          %24 = sbr.rel (0) target = $region24
        $region23: #{custom-call.59} parent=8 // pred_region
          loop: start=0, step=1, limit=1
          $region25: #{custom-call.59} parent=23 // loop_pre_header
            _
          $region26: #{custom-call.59} parent=23 // loop_header
            %s26 = sphi 0, %s30
            %p27 = scmp.ge.s32.totalorder %s26, 1
            %s31 = sphi %s0, %s0
            %s32 = sphi [#allocation0], [#allocation0]
          $region27: #{custom-call.59} parent=23 // loop_header_branch
            %29 = sbr.rel (%p27) target = $region31
          $region28: #{custom-call.59} parent=23 // loop_body
            %v33 = vld [vmem:[%s31] sm:$0xff]
            %34 = vst [vmem:[%s32] sm:$0xff] %v33
            %v35 = vld [vmem:[%s31 + $0x8] sm:$0xff]
            %36 = vst [vmem:[%s32 + $0x8] sm:$0xff] %v35
          $region29: #{custom-call.59} parent=23 // loop_footer
            %s30 = sadd.s32 1, %s26
          $region30: #{custom-call.59} parent=23 // loop_footer_branch
            %25 = sbr.rel target = $region26
          $region31: #{custom-call.59} parent=23 // loop_exit
            _
        $region24: #{custom-call.59} parent=8 // pred_fallthru
          _
        // Predicated region
        $region32: #{custom-call.59} parent=8 // pred_check
          _
        $region33: #{custom-call.59} parent=8 // pred_check_branch
          %38 = sbr.rel target = $region35
        $region34: #{custom-call.59} parent=8 // pred_region
          _
        $region35: #{custom-call.59} parent=8 // pred_fallthru
          _
      $region9: #{custom-call.59} parent=4 // pred_fallthru
        _
      // Predicated region
      $region10: #{custom-call.59} parent=4 // pred_check
        _
      $region11: #{custom-call.59} parent=4 // pred_check_branch
        %9 = sbr.rel target = $region13
      $region12: #{custom-call.59} parent=4 // pred_region
        loop: start=0, step=1, limit=1
        $region14: #{custom-call.59} parent=12 // loop_pre_header
          _
        $region15: #{custom-call.59} parent=12 // loop_header
          %s12 = sphi 0, %s16
          %p13 = scmp.ge.s32.totalorder %s12, 1
          %s17 = sphi %s0, %s0
          %s18 = sphi [#allocation0], [#allocation0]
        $region16: #{custom-call.59} parent=12 // loop_header_branch
          %15 = sbr.rel (%p13) target = $region20
        $region17: #{custom-call.59} parent=12 // loop_body
          %v19 = vld [vmem:[%s17] sm:$0xff]
          %20 = vst [vmem:[%s18] sm:$0xff] %v19
          %v21 = vld [vmem:[%s17 + $0x8] sm:$0xff]
          %22 = vst [vmem:[%s18 + $0x8] sm:$0xff] %v21
        $region18: #{custom-call.59} parent=12 // loop_footer
          %s16 = sadd.s32 1, %s12
        $region19: #{custom-call.59} parent=12 // loop_footer_branch
          %11 = sbr.rel target = $region15
        $region20: #{custom-call.59} parent=12 // loop_exit
          _
      $region13: #{custom-call.59} parent=4 // pred_fallthru
        _
    $region5: #{custom-call.59} parent=1 // pred_fallthru
      _
    %39 = vnop
    %v40 = vld [vmem:[#allocation0] sm:$0xff]
    %41 = vst [vmem:[#allocation1] sm:$0xff] %v40
    %s42 = scalar_lea.vmem [#allocation1], 8
    %s43 = scalar_lea.vmem [#allocation0], 8
    %v44 = vld [vmem:[%s43] sm:$0xff]
    %45 = vst [vmem:[%s42] sm:$0xff] %v44
    %46 = vst [vmem:[#allocation2] sm:$0x1] 0.0
    loop: start=0, step=1, limit=8
    $region36: #{custom-call.59} parent=1 // loop_pre_header
      _
    $region37: #{custom-call.59} parent=1 // loop_header
      %s48 = sphi 0, %s52
      %p49 = scmp.ge.s32.totalorder %s48, 8
    $region38: #{custom-call.59} parent=1 // loop_header_branch
      %51 = sbr.rel (%p49) target = $region42
    $region39: #{custom-call.59} parent=1 // loop_body
      %v53 = vld [vmem:[#allocation1] sm:$0xff]
      %v54 = vlaneseq
      %v55 = vshrl.u32 %v54, 7
      %v57 = vstv %s48
      %vm58 = vcmp.gt.s32.totalorder %v55, %v57
      %v59 = vsel %vm58, %v53, 0.0
      %v60 = vmul.f32 %v59, %v59
      %s61 = scalar_lea.vmem [#allocation1], 8
      %v62 = vld [vmem:[%s61] sm:$0xff]
      %v63 = vlaneseq
      %v64 = vshrl.u32 %v63, 7
      %v65 = vadd.s32 %v64, 8
      %v66 = vstv %s48
      %vm67 = vcmp.gt.s32.totalorder %v65, %v66
      %vm68 = vcmp.lt.s32.totalorder %v65, 16
      %vm69 = vmand %vm67, %vm68
      %v70 = vsel %vm69, %v62, 0.0
      %v71 = vmul.f32 %v70, %v70
      %v72 = vadd.f32 %v60, %v71
      %v73 = vrot.slane %v72, 4
      %v74 = vadd.f32 %v72, %v73
      %v75 = vrot.slane %v74, 2
      %v76 = vadd.f32 %v74, %v75
      %v77 = vrot.slane %v76, 1
      %v78 = vadd.f32 %v76, %v77
      %v79 = vrsqrt.pop %v78
      %v80 = vmul.f32 %v78, %v79
      %vm81 = vcmp.eq.f32.partialorder %v78, inf
      %v82 = vsel %vm81, %v78, %v80
      %vm83 = vcmp.eq.f32.partialorder %v78, 0.0
      %v84 = vand.u32 %v78, 2147483648
      %v85 = vsel %vm83, %v84, %v82
      %vm86 = vcmp.eq.f32.partialorder %v78, 0.0
      %s87 = sshrl.u32 %s48, 3
      %s88 = sand.u32 %s48, 7
      %s89 = smul.addr %s87, 8
      %s90 = sadd.s32 %s88, %s89
      %s91 = scalar_lea.vmem [#allocation1], %s90
      %v92 = vld [vmem:[%s91] ss:$0 sm:$0xff]
      %v93 = vand.u32 2147483647, %v92
      %v94 = vmax.f32 %v93, 0.0
      %v95 = vand.u32 2147483647, %v85
      %v96 = vmax.f32 %v94, %v95
      %v97 = vrcp.pop %v96
      %v98 = vmul.f32 %v93, %v97
      %v99 = vmul.f32 %v98, %v98
      %v100 = vrcp.pop %v96
      %v101 = vmul.f32 0.0, %v100
      %v102 = vmul.f32 %v101, %v101
      %v103 = vadd.f32 %v99, %v102
      %v104 = vrcp.pop %v96
      %v105 = vmul.f32 %v95, %v104
      %v106 = vmul.f32 %v105, %v105
      %v107 = vadd.f32 %v103, %v106
      %vm108 = vcmp.eq.f32.partialorder %v96, 0.0
      %v109 = vrsqrt.pop %v107
      %v110 = vmul.f32 %v107, %v109
      %vm111 = vcmp.eq.f32.partialorder %v107, inf
      %v112 = vsel %vm111, %v107, %v110
      %vm113 = vcmp.eq.f32.partialorder %v107, 0.0
      %v114 = vand.u32 %v107, 2147483648
      %v115 = vsel %vm113, %v114, %v112
      %v116 = vmul.f32 %v96, %v115
      %v117 = vsel %vm108, 0.0, %v116
      %vm118 = vcmp.lt.f32.partialorder %v92, 0.0
      %v119 = vxor.u32 %v117, 2147483648
      %v120 = vsel %vm118, %v117, %v119
      %v121 = vsub.f32 %v120, %v92
      %v122 = vrcp.pop %v120
      %v123 = vmul.f32 %v121, %v122
      %v124 = vsel %vm86, %v92, %v120
      %v125 = vsel %vm86, 0.0, %v123
      %v126 = vsub.f32 %v92, %v124
      %s127 = smov [#allocation1]
      %v128 = vlaneseq
      %v129 = vshrl.u32 %v128, 7
      %v130 = vmov %v129
      %v131 = vld [vmem:[%s127] sm:$0xff]
      %v133 = vstv %s48
      %vm134 = vcmp.gt.s32.totalorder %v130, %v133
      %v135 = vsel %vm134, %v131, 0.0
      %v136 = vrcp.pop %v126
      %v137 = vmul.f32 %v135, %v136
      %v138 = vsel %vm86, 0.0, %v137
      %v139 = vstv %s48
      %v140 = vlaneseq
      %v141 = vand.u32 %v140, 127
      %vm142 = vcmp.eq.s32.totalorder %v141, %v139
      %v143 = vsel %vm142, %v138, 0.0
      %144 = vadd.xlane.f32.xlu0 %v143
      %v145 = vpop.xlane.xlu0 %144
      %146 = vst [vmem:[#allocation4] sm:$0xff] %v145
      %s147 = scalar_lea.vmem %s127, 8
      %v148 = vld [vmem:[%s147] sm:$0xff]
      %v149 = vadd.s32 %v130, 8
      %v150 = vstv %s48
      %vm151 = vcmp.gt.s32.totalorder %v149, %v150
      %vm152 = vcmp.lt.s32.totalorder %v149, 16
      %vm153 = vmand %vm151, %vm152
      %v154 = vsel %vm153, %v148, 0.0
      %v155 = vrcp.pop %v126
      %v156 = vmul.f32 %v154, %v155
      %v157 = vsel %vm86, 0.0, %v156
      %v158 = vstv %s48
      %v159 = vlaneseq
      %v160 = vand.u32 %v159, 127
      %vm161 = vcmp.eq.s32.totalorder %v160, %v158
      %v162 = vsel %vm161, %v157, 0.0
      %163 = vadd.xlane.f32.xlu0 %v162
      %v164 = vpop.xlane.xlu0 %163
      %s165 = scalar_lea.vmem [#allocation4], 8
      %166 = vst [vmem:[%s165] sm:$0xff] %v164
      %s167 = scalar_lea.vmem [#allocation4], %s48
      %168 = vst [vmem:[%s167] sm:$0x1] 1.0
      %v169 = vstv %s48
      %v170 = vlaneseq
      %v171 = vand.u32 %v170, 127
      %vm172 = vcmp.eq.s32.totalorder %v171, %v169
      %v173 = vsel %vm172, %v125, 0.0
      %174 = vadd.xlane.f32.xlu0 %v173
      %v175 = vpop.xlane.xlu0 %174
      %v176 = vstv %s48
      %v177 = vlaneseq
      %v178 = vand.u32 %v177, 127
      %vm179 = vcmp.eq.s32.totalorder %v178, %v176
      %v180 = vld [vmem:[#allocation2] ss:$0 sm:$0xff]
      %v181 = vsel %vm179, %v175, %v180
      %182 = vst [vmem:[#allocation2] sm:$0x1] %v181
      %s183 = smov [#allocation1]
      %s184 = smov [#allocation4]
      %v185 = vlaneseq
      %v186 = vshrl.u32 %v185, 7
      %v187 = vmov %v186
      %v189 = vld [vmem:[%s184] sm:$0xff]
      %v190 = vld [vmem:[%s183] sm:$0xff]
      %v191 = vmul.f32 %v189, %v190
      %v192 = vadd.s32 %v187, 8
      %s193 = scalar_lea.vmem %s184, 8
      %v194 = vld [vmem:[%s193] sm:$0xff]
      %s195 = scalar_lea.vmem %s183, 8
      %v196 = vld [vmem:[%s195] sm:$0xff]
      %v197 = vmul.f32 %v194, %v196
      %vm198 = vcmp.lt.s32.totalorder %v192, 16
      %v199 = vsel %vm198, %v197, 0.0
      %v200 = vadd.f32 %v191, %v199
      %v201 = vrot.slane %v200, 4
      %v202 = vadd.f32 %v200, %v201
      %v203 = vrot.slane %v202, 2
      %v204 = vadd.f32 %v202, %v203
      %v205 = vrot.slane %v204, 1
      %v206 = vadd.f32 %v204, %v205
      %s207 = smov %s183
      %s208 = smov %s184
      %v209 = vlaneseq
      %v210 = vshrl.u32 %v209, 7
      %v211 = vmov %v210
      %v212 = vmul.f32 %v206, %v175
      %v214 = vlaneseq
      %v215 = vand.u32 %v214, 127
      %v216 = vld [vmem:[%s208] sm:$0xff]
      %v217 = vmul.f32 %v216, %v212
      %v218 = vld [vmem:[%s207] sm:$0xff]
      %v219 = vstv %s48
      %vm220 = vcmp.gt.s32.totalorder %v215, %v219
      %v221 = vsub.f32 %v218, %v217
      %v222 = vsel %vm220, %v221, %v218
      %v223 = vstv %s48
      %v224 = vlaneseq
      %v225 = vand.u32 %v224, 127
      %vm226 = vcmp.eq.s32.totalorder %v225, %v223
      %v227 = vstv %s48
      %vm228 = vcmp.ge.s32.totalorder %v211, %v227
      %vm229 = vmand %vm226, %vm228
      %v230 = vsel %vm229, %v216, %v222
      %231 = vst [vmem:[%s207] sm:$0xff] %v230
      %v232 = vadd.s32 %v211, 8
      %v233 = vlaneseq
      %v234 = vand.u32 %v233, 127
      %s235 = scalar_lea.vmem %s208, 8
      %v236 = vld [vmem:[%s235] sm:$0xff]
      %v237 = vmul.f32 %v236, %v212
      %s238 = scalar_lea.vmem %s207, 8
      %v239 = vld [vmem:[%s238] sm:$0xff]
      %v240 = vstv %s48
      %vm241 = vcmp.gt.s32.totalorder %v234, %v240
      %v242 = vsub.f32 %v239, %v237
      %v243 = vsel %vm241, %v242, %v239
      %v244 = vstv %s48
      %v245 = vlaneseq
      %v246 = vand.u32 %v245, 127
      %vm247 = vcmp.eq.s32.totalorder %v246, %v244
      %v248 = vstv %s48
      %vm249 = vcmp.ge.s32.totalorder %v232, %v248
      %vm250 = vmand %vm247, %vm249
      %v251 = vsel %vm250, %v236, %v243
      %252 = vst [vmem:[%s238] sm:$0xff] %v251
      %s253 = scalar_lea.vmem %s207, %s48
      %v254 = vld [vmem:[%s253] ss:$0 sm:$0xff]
      %v255 = vstv %s48
      %v256 = vlaneseq
      %v257 = vand.u32 %v256, 127
      %vm258 = vcmp.eq.s32.totalorder %v257, %v255
      %v259 = vsel %vm258, %v124, %v254
      %260 = vst [vmem:[%s253] sm:$0x1] %v259
    $region40: #{custom-call.59} parent=1 // loop_footer
      %s52 = sadd.s32 1, %s48
    $region41: #{custom-call.59} parent=1 // loop_footer_branch
      %47 = sbr.rel target = $region37
    $region42: #{custom-call.59} parent=1 // loop_exit
      _
    %s262 = sshllo.u32 0, 1
    %v264 = vld [vmem:[#allocation2] sm:%s262]
    %s265 = sshllo.u32 0, 1
    %266 = vst [vmem:[#allocation3] sm:%s265] %v264
    // Predicated region
    $region43: #{custom-call.59} parent=1 // pred_check
      _
    $region44: #{custom-call.59} parent=1 // pred_check_branch
      %268 = sbr.rel (0) target = $region46
    $region45: #{custom-call.59} parent=1 // pred_region
      // Predicated region
      $region47: #{custom-call.59} parent=45 // pred_check
        _
      $region48: #{custom-call.59} parent=45 // pred_check_branch
        %270 = sbr.rel (0) target = $region50
      $region49: #{custom-call.59} parent=45 // pred_region
        // Predicated region
        $region62: #{custom-call.59} parent=49 // pred_check
          _
        $region63: #{custom-call.59} parent=49 // pred_check_branch
          %287 = sbr.rel (0) target = $region65
        $region64: #{custom-call.59} parent=49 // pred_region
          loop: start=0, step=1, limit=1
          $region66: #{custom-call.59} parent=64 // loop_pre_header
            _
          $region67: #{custom-call.59} parent=64 // loop_header
            %s289 = sphi 0, %s293
            %p290 = scmp.ge.s32.totalorder %s289, 1
            %s294 = sphi [#allocation1], [#allocation1]
            %s295 = sphi %s1, %s1
          $region68: #{custom-call.59} parent=64 // loop_header_branch
            %292 = sbr.rel (%p290) target = $region72
          $region69: #{custom-call.59} parent=64 // loop_body
            %v296 = vld [vmem:[%s294] sm:$0xff]
            %297 = vst [vmem:[%s295] sm:$0xff] %v296
            %v298 = vld [vmem:[%s294 + $0x8] sm:$0xff]
            %299 = vst [vmem:[%s295 + $0x8] sm:$0xff] %v298
          $region70: #{custom-call.59} parent=64 // loop_footer
            %s293 = sadd.s32 1, %s289
          $region71: #{custom-call.59} parent=64 // loop_footer_branch
            %288 = sbr.rel target = $region67
          $region72: #{custom-call.59} parent=64 // loop_exit
            _
        $region65: #{custom-call.59} parent=49 // pred_fallthru
          _
        // Predicated region
        $region73: #{custom-call.59} parent=49 // pred_check
          _
        $region74: #{custom-call.59} parent=49 // pred_check_branch
          %301 = sbr.rel target = $region76
        $region75: #{custom-call.59} parent=49 // pred_region
          _
        $region76: #{custom-call.59} parent=49 // pred_fallthru
          _
      $region50: #{custom-call.59} parent=45 // pred_fallthru
        _
      // Predicated region
      $region51: #{custom-call.59} parent=45 // pred_check
        _
      $region52: #{custom-call.59} parent=45 // pred_check_branch
        %272 = sbr.rel target = $region54
      $region53: #{custom-call.59} parent=45 // pred_region
        loop: start=0, step=1, limit=1
        $region55: #{custom-call.59} parent=53 // loop_pre_header
          _
        $region56: #{custom-call.59} parent=53 // loop_header
          %s275 = sphi 0, %s279
          %p276 = scmp.ge.s32.totalorder %s275, 1
          %s280 = sphi [#allocation1], [#allocation1]
          %s281 = sphi %s1, %s1
        $region57: #{custom-call.59} parent=53 // loop_header_branch
          %278 = sbr.rel (%p276) target = $region61
        $region58: #{custom-call.59} parent=53 // loop_body
          %v282 = vld [vmem:[%s280] sm:$0xff]
          %283 = vst [vmem:[%s281] sm:$0xff] %v282
          %v284 = vld [vmem:[%s280 + $0x8] sm:$0xff]
          %285 = vst [vmem:[%s281 + $0x8] sm:$0xff] %v284
        $region59: #{custom-call.59} parent=53 // loop_footer
          %s279 = sadd.s32 1, %s275
        $region60: #{custom-call.59} parent=53 // loop_footer_branch
          %274 = sbr.rel target = $region56
        $region61: #{custom-call.59} parent=53 // loop_exit
          _
      $region54: #{custom-call.59} parent=45 // pred_fallthru
        _
    $region46: #{custom-call.59} parent=1 // pred_fallthru
      _
    %302 = vnop
    // Predicated region
    $region77: #{custom-call.59} parent=1 // pred_check
      _
    $region78: #{custom-call.59} parent=1 // pred_check_branch
      %304 = sbr.rel (0) target = $region80
    $region79: #{custom-call.59} parent=1 // pred_region
      // Predicated region
      $region81: #{custom-call.59} parent=79 // pred_check
        _
      $region82: #{custom-call.59} parent=79 // pred_check_branch
        %306 = sbr.rel (0) target = $region84
      $region83: #{custom-call.59} parent=79 // pred_region
        // Predicated region
        $region85: #{custom-call.59} parent=83 // pred_check
          _
        $region86: #{custom-call.59} parent=83 // pred_check_branch
          %308 = sbr.rel target = $region88
        $region87: #{custom-call.59} parent=83 // pred_region
          // Predicated region
          $region100: #{custom-call.59} parent=87 // pred_check
            _
          $region101: #{custom-call.59} parent=87 // pred_check_branch
            %323 = sbr.rel (0) target = $region103
          $region102: #{custom-call.59} parent=87 // pred_region
            loop: start=0, step=1, limit=1
            $region104: #{custom-call.59} parent=102 // loop_pre_header
              _
            $region105: #{custom-call.59} parent=102 // loop_header
              %s326 = sphi 0, %s330
              %p327 = scmp.ge.s32.totalorder %s326, 1
              %s331 = sphi [#allocation3], [#allocation3]
              %s332 = sphi %s2, %s2
            $region106: #{custom-call.59} parent=102 // loop_header_branch
              %329 = sbr.rel (%p327) target = $region110
            $region107: #{custom-call.59} parent=102 // loop_body
              %v333 = vld [vmem:[%s331] sm:$0x1]
              %334 = vst [vmem:[%s332] sm:$0x1] %v333
            $region108: #{custom-call.59} parent=102 // loop_footer
              %s330 = sadd.s32 1, %s326
            $region109: #{custom-call.59} parent=102 // loop_footer_branch
              %325 = sbr.rel target = $region105
            $region110: #{custom-call.59} parent=102 // loop_exit
              _
          $region103: #{custom-call.59} parent=87 // pred_fallthru
            _
        $region88: #{custom-call.59} parent=83 // pred_fallthru
          _
        // Predicated region
        $region89: #{custom-call.59} parent=83 // pred_check
          _
        $region90: #{custom-call.59} parent=83 // pred_check_branch
          %310 = sbr.rel (0) target = $region92
        $region91: #{custom-call.59} parent=83 // pred_region
          loop: start=0, step=1, limit=1
          $region93: #{custom-call.59} parent=91 // loop_pre_header
            _
          $region94: #{custom-call.59} parent=91 // loop_header
            %s313 = sphi 0, %s317
            %p314 = scmp.ge.s32.totalorder %s313, 1
            %s318 = sphi [#allocation3], [#allocation3]
            %s319 = sphi %s2, %s2
          $region95: #{custom-call.59} parent=91 // loop_header_branch
            %316 = sbr.rel (%p314) target = $region99
          $region96: #{custom-call.59} parent=91 // loop_body
            %v320 = vld [vmem:[%s318] sm:$0x1]
            %321 = vst [vmem:[%s319] sm:$0x1] %v320
          $region97: #{custom-call.59} parent=91 // loop_footer
            %s317 = sadd.s32 1, %s313
          $region98: #{custom-call.59} parent=91 // loop_footer_branch
            %312 = sbr.rel target = $region94
          $region99: #{custom-call.59} parent=91 // loop_exit
            _
        $region92: #{custom-call.59} parent=83 // pred_fallthru
          _
      $region84: #{custom-call.59} parent=79 // pred_fallthru
        _
      %335 = vnop
    $region80: #{custom-call.59} parent=1 // pred_fallthru
      _
    // Predicated region
    $region111: #{custom-call.59} parent=1 // pred_check
      _
    $region112: #{custom-call.59} parent=1 // pred_check_branch
      %337 = sbr.rel (0) target = $region114
    $region113: #{custom-call.59} parent=1 // pred_region
      _
    $region114: #{custom-call.59} parent=1 // pred_fallthru
      _

// kernel: custom-call.63
$region0: #{custom-call.63}
  %s0 = inlined_call_operand.vmem [shape: f32[8,8], index: 0, kind: input, shape index: {}]
  %s1 = inlined_call_operand.vmem [shape: f32[8,8], index: 1, kind: output, shape index: {}]
  $region1: #{custom-call.63} parent=0
    #allocation0 [shape = 'u8[4096]{0}', space=vmem, size = 0x1000, scoped, tag = 'operand span for operand 0']
    #allocation1 [shape = 'u8[4096]{0}', space=vmem, size = 0x1000, scoped, tag = 'operand span for operand 1']
    %p3 = scmp.gt.s32.totalorder 8, 0
    // Predicated region
    $region2: #{custom-call.63} parent=1 // pred_check
      %p4 = pneg %p3
    $region3: #{custom-call.63} parent=1 // pred_check_branch
      %6 = sbr.rel (%p4) target = $region5
    $region4: #{custom-call.63} parent=1 // pred_region
      %s7 = sshra.s32 8, 3
      %p8 = scmp.gt.s32.totalorder %s7, 0
      // Predicated region
      $region6: #{custom-call.63} parent=4 // pred_check
        %p9 = pneg %p8
      $region7: #{custom-call.63} parent=4 // pred_check_branch
        %11 = sbr.rel (%p9) target = $region9
      $region8: #{custom-call.63} parent=4 // pred_region
        %s12 = ssub.s32 %s7, 1
        %s13 = smul.u32 %s12, 128
        %s14 = sshra.s32 %s13, 4
        %s15 = scalar_lea.vmem %s0, %s14
        %v16 = vld [vmem:[%s0] sm:$0xff]
        // While loop
        $region10: #{custom-call.63} parent=8 // loop_pre_header
          _
        $region11: #{custom-call.63} parent=8 // loop_header
          %s17 = sphi %s0, %s39
          %s18 = sphi [#allocation0], %s40
          %v19 = vphi %v16, %v41
          %s20 = ssub.s32 %s15, 64
          %p21 = scmp.gt.s32.totalorder %s17, %s20
        $region12: #{custom-call.63} parent=8 // loop_header_branch
          %23 = sbr.rel (%p21) target = $region16
        $region13: #{custom-call.63} parent=8 // loop_body
          %24 = vst [vmem:[%s18] sm:$0xff] %v19
          %v25 = vld [vmem:[%s17 + $0x8] sm:$0xff]
          %26 = vst [vmem:[%s18 + $0x8] sm:$0xff] %v25
          %v27 = vld [vmem:[%s17 + $0x10] sm:$0xff]
          %28 = vst [vmem:[%s18 + $0x10] sm:$0xff] %v27
          %v29 = vld [vmem:[%s17 + $0x18] sm:$0xff]
          %30 = vst [vmem:[%s18 + $0x18] sm:$0xff] %v29
          %v31 = vld [vmem:[%s17 + $0x20] sm:$0xff]
          %32 = vst [vmem:[%s18 + $0x20] sm:$0xff] %v31
          %v33 = vld [vmem:[%s17 + $0x28] sm:$0xff]
          %34 = vst [vmem:[%s18 + $0x28] sm:$0xff] %v33
          %v35 = vld [vmem:[%s17 + $0x30] sm:$0xff]
          %36 = vst [vmem:[%s18 + $0x30] sm:$0xff] %v35
          %v37 = vld [vmem:[%s17 + $0x38] sm:$0xff]
          %38 = vst [vmem:[%s18 + $0x38] sm:$0xff] %v37
        $region14: #{custom-call.63} parent=8 // loop_footer
          %s39 = scalar_lea.vmem %s17, 64
          %s40 = scalar_lea.vmem %s18, 64
          %v41 = vld [vmem:[%s17 + $0x40] sm:$0xff]
        $region15: #{custom-call.63} parent=8 // loop_footer_branch
          %42 = sbr.rel target = $region11
        $region16: #{custom-call.63} parent=8 // loop_exit
          _
        // While loop
        $region17: #{custom-call.63} parent=8 // loop_pre_header
          _
        $region18: #{custom-call.63} parent=8 // loop_header
          %s43 = sphi %s17, %s51
          %s44 = sphi %s18, %s52
          %v45 = vphi %v19, %v45
          %p46 = scmp.gt.s32.totalorder %s43, %s15
        $region19: #{custom-call.63} parent=8 // loop_header_branch
          %48 = sbr.rel (%p46) target = $region23
        $region20: #{custom-call.63} parent=8 // loop_body
          %v49 = vld [vmem:[%s43] sm:$0xff]
          %50 = vst [vmem:[%s44] sm:$0xff] %v49
        $region21: #{custom-call.63} parent=8 // loop_footer
          %s51 = scalar_lea.vmem %s43, 8
          %s52 = scalar_lea.vmem %s44, 8
        $region22: #{custom-call.63} parent=8 // loop_footer_branch
          %53 = sbr.rel target = $region18
        $region23: #{custom-call.63} parent=8 // loop_exit
          _
      $region9: #{custom-call.63} parent=4 // pred_fallthru
        _
      %s54 = sand.u32 8, 7
      %s55 = sshllo.u32 0, %s54
      %s56 = smul.u32 %s7, 128
      %s57 = sshra.s32 %s56, 4
      %s58 = scalar_lea.vmem [#allocation0], %s57
      %s59 = smul.u32 %s7, 128
      %s60 = sshra.s32 %s59, 4
      %s61 = scalar_lea.vmem %s0, %s60
      %v62 = vld [vmem:[%s61] sm:%s55]
      %63 = vst [vmem:[%s58] sm:%s55] %v62
    $region5: #{custom-call.63} parent=1 // pred_fallthru
      _
    %v64 = vlaneseq
    %v65 = vand.u32 %v64, 127
    %v66 = vlaneseq
    %v67 = vshrl.u32 %v66, 7
    %vm69 = vcmp.eq.s32.totalorder %v65, %v67
    %v70 = vld [vmem:[#allocation0] sm:$0xff]
    %v71 = vlaneseq
    %v72 = vand.u32 %v71, 127
    %vm73 = vcmp.eq.s32.totalorder %v72, 0
    %v74 = vsel %vm73, %v70, 1.0
    %v75 = vsel %vm69, %v74, 0.0
    %s76 = scalar_lea.vmem [#allocation0], 1
    %v77 = vld [vmem:[%s76] ss:$0 sm:$0xff]
    %vm78 = vcmask 64512
    %v79 = vsel %vm78, %v77, 0.0
    %v80 = vlaneseq
    %v81 = vand.u32 %v80, 127
    %vm82 = vcmp.eq.s32.totalorder %v81, 1
    %v83 = vmul.f32 %v79, %v75
    %84 = vadd.xlane.f32.xlu0 %v83
    %v85 = vpop.xlane.xlu0 %84
    %v86 = vsel %vm82, %v85, %v75
    %s87 = scalar_lea.vmem [#allocation0], 2
    %v88 = vld [vmem:[%s87] ss:$0 sm:$0xff]
    %vm89 = vcmask 64512
    %v90 = vsel %vm89, %v88, 0.0
    %v91 = vlaneseq
    %v92 = vand.u32 %v91, 127
    %vm93 = vcmp.eq.s32.totalorder %v92, 2
    %v94 = vmul.f32 %v90, %v86
    %95 = vadd.xlane.f32.xlu0 %v94
    %v96 = vpop.xlane.xlu0 %95
    %v97 = vsel %vm93, %v96, %v86
    %s98 = scalar_lea.vmem [#allocation0], 3
    %v99 = vld [vmem:[%s98] ss:$0 sm:$0xff]
    %vm100 = vcmask 64512
    %v101 = vsel %vm100, %v99, 0.0
    %v102 = vlaneseq
    %v103 = vand.u32 %v102, 127
    %vm104 = vcmp.eq.s32.totalorder %v103, 3
    %v105 = vmul.f32 %v101, %v97
    %106 = vadd.xlane.f32.xlu0 %v105
    %v107 = vpop.xlane.xlu0 %106
    %v108 = vsel %vm104, %v107, %v97
    %s109 = scalar_lea.vmem [#allocation0], 4
    %v110 = vld [vmem:[%s109] ss:$0 sm:$0xff]
    %vm111 = vcmask 64512
    %v112 = vsel %vm111, %v110, 0.0
    %v113 = vlaneseq
    %v114 = vand.u32 %v113, 127
    %vm115 = vcmp.eq.s32.totalorder %v114, 4
    %v116 = vmul.f32 %v112, %v108
    %117 = vadd.xlane.f32.xlu0 %v116
    %v118 = vpop.xlane.xlu0 %117
    %v119 = vsel %vm115, %v118, %v108
    %s120 = scalar_lea.vmem [#allocation0], 5
    %v121 = vld [vmem:[%s120] ss:$0 sm:$0xff]
    %vm122 = vcmask 64512
    %v123 = vsel %vm122, %v121, 0.0
    %v124 = vlaneseq
    %v125 = vand.u32 %v124, 127
    %vm126 = vcmp.eq.s32.totalorder %v125, 5
    %v127 = vmul.f32 %v123, %v119
    %128 = vadd.xlane.f32.xlu0 %v127
    %v129 = vpop.xlane.xlu0 %128
    %v130 = vsel %vm126, %v129, %v119
    %s131 = scalar_lea.vmem [#allocation0], 6
    %v132 = vld [vmem:[%s131] ss:$0 sm:$0xff]
    %vm133 = vcmask 64512
    %v134 = vsel %vm133, %v132, 0.0
    %v135 = vlaneseq
    %v136 = vand.u32 %v135, 127
    %vm137 = vcmp.eq.s32.totalorder %v136, 6
    %v138 = vmul.f32 %v134, %v130
    %139 = vadd.xlane.f32.xlu0 %v138
    %v140 = vpop.xlane.xlu0 %139
    %v141 = vsel %vm137, %v140, %v130
    %s142 = scalar_lea.vmem [#allocation0], 7
    %v143 = vld [vmem:[%s142] ss:$0 sm:$0xff]
    %vm144 = vcmask 64512
    %v145 = vsel %vm144, %v143, 0.0
    %v146 = vlaneseq
    %v147 = vand.u32 %v146, 127
    %vm148 = vcmp.eq.s32.totalorder %v147, 7
    %v149 = vmul.f32 %v145, %v141
    %150 = vadd.xlane.f32.xlu0 %v149
    %v151 = vpop.xlane.xlu0 %150
    %v152 = vsel %vm148, %v151, %v141
    %153 = vst [vmem:[#allocation1] sm:$0xff] %v152
    %p155 = scmp.gt.s32.totalorder 8, 0
    // Predicated region
    $region24: #{custom-call.63} parent=1 // pred_check
      %p156 = pneg %p155
    $region25: #{custom-call.63} parent=1 // pred_check_branch
      %158 = sbr.rel (%p156) target = $region27
    $region26: #{custom-call.63} parent=1 // pred_region
      %s159 = sshra.s32 8, 3
      %p160 = scmp.gt.s32.totalorder %s159, 0
      // Predicated region
      $region28: #{custom-call.63} parent=26 // pred_check
        %p161 = pneg %p160
      $region29: #{custom-call.63} parent=26 // pred_check_branch
        %163 = sbr.rel (%p161) target = $region31
      $region30: #{custom-call.63} parent=26 // pred_region
        %s164 = ssub.s32 %s159, 1
        %s165 = smul.u32 %s164, 128
        %s166 = sshra.s32 %s165, 4
        %s167 = scalar_lea.vmem [#allocation1], %s166
        %v168 = vld [vmem:[#allocation1] sm:$0xff]
        // While loop
        $region32: #{custom-call.63} parent=30 // loop_pre_header
          _
        $region33: #{custom-call.63} parent=30 // loop_header
          %s169 = sphi [#allocation1], %s191
          %s170 = sphi %s1, %s192
          %v171 = vphi %v168, %v193
          %s172 = ssub.s32 %s167, 64
          %p173 = scmp.gt.s32.totalorder %s169, %s172
        $region34: #{custom-call.63} parent=30 // loop_header_branch
          %175 = sbr.rel (%p173) target = $region38
        $region35: #{custom-call.63} parent=30 // loop_body
          %176 = vst [vmem:[%s170] sm:$0xff] %v171
          %v177 = vld [vmem:[%s169 + $0x8] sm:$0xff]
          %178 = vst [vmem:[%s170 + $0x8] sm:$0xff] %v177
          %v179 = vld [vmem:[%s169 + $0x10] sm:$0xff]
          %180 = vst [vmem:[%s170 + $0x10] sm:$0xff] %v179
          %v181 = vld [vmem:[%s169 + $0x18] sm:$0xff]
          %182 = vst [vmem:[%s170 + $0x18] sm:$0xff] %v181
          %v183 = vld [vmem:[%s169 + $0x20] sm:$0xff]
          %184 = vst [vmem:[%s170 + $0x20] sm:$0xff] %v183
          %v185 = vld [vmem:[%s169 + $0x28] sm:$0xff]
          %186 = vst [vmem:[%s170 + $0x28] sm:$0xff] %v185
          %v187 = vld [vmem:[%s169 + $0x30] sm:$0xff]
          %188 = vst [vmem:[%s170 + $0x30] sm:$0xff] %v187
          %v189 = vld [vmem:[%s169 + $0x38] sm:$0xff]
          %190 = vst [vmem:[%s170 + $0x38] sm:$0xff] %v189
        $region36: #{custom-call.63} parent=30 // loop_footer
          %s191 = scalar_lea.vmem %s169, 64
          %s192 = scalar_lea.vmem %s170, 64
          %v193 = vld [vmem:[%s169 + $0x40] sm:$0xff]
        $region37: #{custom-call.63} parent=30 // loop_footer_branch
          %194 = sbr.rel target = $region33
        $region38: #{custom-call.63} parent=30 // loop_exit
          _
        // While loop
        $region39: #{custom-call.63} parent=30 // loop_pre_header
          _
        $region40: #{custom-call.63} parent=30 // loop_header
          %s195 = sphi %s169, %s203
          %s196 = sphi %s170, %s204
          %v197 = vphi %v171, %v197
          %p198 = scmp.gt.s32.totalorder %s195, %s167
        $region41: #{custom-call.63} parent=30 // loop_header_branch
          %200 = sbr.rel (%p198) target = $region45
        $region42: #{custom-call.63} parent=30 // loop_body
          %v201 = vld [vmem:[%s195] sm:$0xff]
          %202 = vst [vmem:[%s196] sm:$0xff] %v201
        $region43: #{custom-call.63} parent=30 // loop_footer
          %s203 = scalar_lea.vmem %s195, 8
          %s204 = scalar_lea.vmem %s196, 8
        $region44: #{custom-call.63} parent=30 // loop_footer_branch
          %205 = sbr.rel target = $region40
        $region45: #{custom-call.63} parent=30 // loop_exit
          _
      $region31: #{custom-call.63} parent=26 // pred_fallthru
        _
      %s206 = sand.u32 8, 7
      %s207 = sshllo.u32 0, %s206
      %s208 = smul.u32 %s159, 128
      %s209 = sshra.s32 %s208, 4
      %s210 = scalar_lea.vmem %s1, %s209
      %s211 = smul.u32 %s159, 128
      %s212 = sshra.s32 %s211, 4
      %s213 = scalar_lea.vmem [#allocation1], %s212
      %v214 = vld [vmem:[%s213] sm:%s207]
      %215 = vst [vmem:[%s210] sm:%s207] %v214
    $region27: #{custom-call.63} parent=1 // pred_fallthru
      _

// kernel: ista_forward.1
$region0: #{ista_forward.1}
  #allocation0 [shape = 'u32[]', space=smem, size = 0x4, offset = 0x4, fixed_abs, tag = 'smem constant byte address 0x4 - core index']
  #allocation1 [shape = 'u32[144,128]{1,0:T(1,128)}', space=vmem, size = 0x12000, scoped, tag = 'internal scratch']
  %s0 = inlined_call_operand.vmem [shape: f32[16,128], index: 0, kind: input, shape index: {}]
  %s1 = inlined_call_operand.vmem [shape: f32[128,256], index: 1, kind: input, shape index: {}]
  %s2 = inlined_call_operand.vmem [shape: f32[1,256], index: 2, kind: input, shape index: {}]
  %s3 = inlined_call_operand.vmem [shape: f32[16,128], index: 3, kind: output, shape index: {0}]
  %s4 = inlined_call_operand.vmem [shape: f32[16,128], index: 4, kind: output, shape index: {1}]
  %5 = xla_tuple %s3, %s4
  %s6 = sld [smem:[#allocation0]]
  $region30: #{ista_forward.1} parent=0
    _
  %s8 = ssub.s32 1, %s6
  %s9 = scalar_select 0, %s8, %s6
  // Predicated region
  $region2: #{ista_forward.1} parent=0 // pred_check
    _
  $region3: #{ista_forward.1} parent=0 // pred_check_branch
    %11 = sbr.rel (0) target = $region5
  $region4: #{ista_forward.1} parent=0 // pred_region
    _
  $region5: #{ista_forward.1} parent=0 // pred_fallthru
    _
  // Predicated region
  $region6: #{ista_forward.1} parent=0 // pred_check
    _
  $region7: #{ista_forward.1} parent=0 // pred_check_branch
    %13 = sbr.rel (0) target = $region9
  $region8: #{ista_forward.1} parent=0 // pred_region
    _
  $region9: #{ista_forward.1} parent=0 // pred_fallthru
    _
  // Predicated region
  $region10: #{ista_forward.1} parent=0 // pred_check
    _
  $region11: #{ista_forward.1} parent=0 // pred_check_branch
    %15 = sbr.rel (0) target = $region13
  $region12: #{ista_forward.1} parent=0 // pred_region
    _
  $region13: #{ista_forward.1} parent=0 // pred_fallthru
    _
  %v16 = vld [vmem:[%s0] sm:$0xff]
  %v17 = vld [vmem:[%s0 + $0x8] sm:$0xff]
  %v18 = vld [vmem:[%s1] sm:$0xff]
  %v19 = vld [vmem:[%s1 + $0x8] sm:$0xff]
  %v20 = vld [vmem:[%s1 + $0x10] sm:$0xff]
  %v21 = vld [vmem:[%s1 + $0x18] sm:$0xff]
  %v22 = vld [vmem:[%s1 + $0x20] sm:$0xff]
  %v23 = vld [vmem:[%s1 + $0x28] sm:$0xff]
  %v24 = vld [vmem:[%s1 + $0x30] sm:$0xff]
  %v25 = vld [vmem:[%s1 + $0x38] sm:$0xff]
  %v26 = vld [vmem:[%s1 + $0x40] sm:$0xff]
  %v27 = vld [vmem:[%s1 + $0x48] sm:$0xff]
  %v28 = vld [vmem:[%s1 + $0x50] sm:$0xff]
  %v29 = vld [vmem:[%s1 + $0x58] sm:$0xff]
  %v30 = vld [vmem:[%s1 + $0x60] sm:$0xff]
  %v31 = vld [vmem:[%s1 + $0x68] sm:$0xff]
  %v32 = vld [vmem:[%s1 + $0x70] sm:$0xff]
  %v33 = vld [vmem:[%s1 + $0x78] sm:$0xff]
  %v34 = vld [vmem:[%s1 + $0x80] sm:$0xff]
  %v35 = vld [vmem:[%s1 + $0x88] sm:$0xff]
  %v36 = vld [vmem:[%s1 + $0x90] sm:$0xff]
  %v37 = vld [vmem:[%s1 + $0x98] sm:$0xff]
  %v38 = vld [vmem:[%s1 + $0xa0] sm:$0xff]
  %v39 = vld [vmem:[%s1 + $0xa8] sm:$0xff]
  %v40 = vld [vmem:[%s1 + $0xb0] sm:$0xff]
  %v41 = vld [vmem:[%s1 + $0xb8] sm:$0xff]
  %v42 = vld [vmem:[%s1 + $0xc0] sm:$0xff]
  %v43 = vld [vmem:[%s1 + $0xc8] sm:$0xff]
  %v44 = vld [vmem:[%s1 + $0xd0] sm:$0xff]
  %v45 = vld [vmem:[%s1 + $0xd8] sm:$0xff]
  %v46 = vld [vmem:[%s1 + $0xe0] sm:$0xff]
  %v47 = vld [vmem:[%s1 + $0xe8] sm:$0xff]
  %v48 = vld [vmem:[%s1 + $0xf0] sm:$0xff]
  %v49 = vld [vmem:[%s1 + $0xf8] sm:$0xff]
  %v50 = vld [vmem:[%s2] sm:$0x3]
  %v52 = vlaneseq
  %v53 = vshrl.u32 %v52, 7
  %v54 = vsub.s32 0, %v53
  %v55 = vrot.slane %v50, %v54
  %v56 = vlaneseq
  %v57 = vshrl.u32 %v56, 7
  %v58 = vsub.s32 1, %v57
  %v59 = vrot.slane %v50, %v58
  %62 = vmatprep.subr.mxu0 %v19
  %63 = vmatpush1.msra.mxu0 %v18
  %64 = vmatprep.subr.mxu0 %v21
  %65 = vmatpush1.msra.mxu0 %v20
  %66 = vmatprep.subr.mxu0 %v23
  %67 = vmatpush1.msra.mxu0 %v22
  %68 = vmatprep.subr.mxu0 %v25
  %69 = vmatpush1.msra.mxu0 %v24
  %70 = vmatprep.subr.mxu0 %v27
  %71 = vmatpush1.msra.mxu0 %v26
  %72 = vmatprep.subr.mxu0 %v29
  %73 = vmatpush1.msra.mxu0 %v28
  %74 = vmatprep.subr.mxu0 %v31
  %75 = vmatpush1.msra.mxu0 %v30
  %76 = vmatprep.subr.mxu0 %v33
  %77 = vmatpush1.msra.mxu0 %v32
  %78 = vmatprep.subr.mxu0 %v35
  %79 = vmatpush1.msra.mxu0 %v34
  %80 = vmatprep.subr.mxu0 %v37
  %81 = vmatpush1.msra.mxu0 %v36
  %82 = vmatprep.subr.mxu0 %v39
  %83 = vmatpush1.msra.mxu0 %v38
  %84 = vmatprep.subr.mxu0 %v41
  %85 = vmatpush1.msra.mxu0 %v40
  %86 = vmatprep.subr.mxu0 %v43
  %87 = vmatpush1.msra.mxu0 %v42
  %88 = vmatprep.subr.mxu0 %v45
  %89 = vmatpush1.msra.mxu0 %v44
  %90 = vmatprep.subr.mxu0 %v47
  %91 = vmatpush1.msra.mxu0 %v46
  %92 = vmatprep.subr.mxu0 %v49
  %93 = vmatpush1.msra.mxu0 %v48
  %94 = vmatprep.subr.mxu0 0.0
  %95 = vmatpush1.msra.mxu0 0.0
  %96 = vmatprep.subr.mxu0 0.0
  %97 = vmatpush1.msra.mxu0 0.0
  %98 = vmatprep.subr.mxu0 0.0
  %99 = vmatpush1.msra.mxu0 0.0
  %100 = vmatprep.subr.mxu0 0.0
  %101 = vmatpush1.msra.mxu0 0.0
  %102 = vmatprep.subr.mxu0 0.0
  %103 = vmatpush1.msra.mxu0 0.0
  %104 = vmatprep.subr.mxu0 0.0
  %105 = vmatpush1.msra.mxu0 0.0
  %106 = vmatprep.subr.mxu0 0.0
  %107 = vmatpush1.msra.mxu0 0.0
  %108 = vmatprep.subr.mxu0 0.0
  %109 = vmatpush1.msra.mxu0 0.0
  %110 = vmatprep.subr.mxu0 0.0
  %111 = vmatpush1.msra.mxu0 0.0
  %112 = vmatprep.subr.mxu0 0.0
  %113 = vmatpush1.msra.mxu0 0.0
  %114 = vmatprep.subr.mxu0 0.0
  %115 = vmatpush1.msra.mxu0 0.0
  %116 = vmatprep.subr.mxu0 0.0
  %117 = vmatpush1.msra.mxu0 0.0
  %118 = vmatprep.subr.mxu0 0.0
  %119 = vmatpush1.msra.mxu0 0.0
  %120 = vmatprep.subr.mxu0 0.0
  %121 = vmatpush1.msra.mxu0 0.0
  %122 = vmatprep.subr.mxu0 0.0
  %123 = vmatpush1.msra.mxu0 0.0
  %124 = vmatprep.subr.mxu0 0.0
  %125 = vmatpush1.msra.mxu0 0.0
  %126 = vmatprep.mubr.f32.mxu0 0.0
  %127 = vmatmul.mubr.f32.gmra.mrb[0].mxu0 %v16
  %v128 = vpop.f32.mrb[0].mxu0
  %v129 = vadd.f32 %v55, %v128
  %v130 = vpop.f32.mrb[0].mxu0
  %v131 = vadd.f32 %v59, %v130
  %132 = vmatprep.mubr.f32.mxu0 0.0
  %133 = vmatmul.mubr.f32.gmra.mrb[0].mxu0 %v17
  %v134 = vpop.f32.mrb[0].mxu0
  %v135 = vadd.f32 %v55, %v134
  %v136 = vpop.f32.mrb[0].mxu0
  %v137 = vadd.f32 %v59, %v136
  %138 = vdwg.mxu0
  %139 = vst [vmem:[%s3] sm:$0xff] %v129
  %140 = vst [vmem:[%s3 + $0x8] sm:$0xff] %v135
  %141 = vst [vmem:[%s4] sm:$0xff] %v131
  %142 = vst [vmem:[%s4 + $0x8] sm:$0xff] %v137
  // Predicated region
  $region14: #{ista_forward.1} parent=0 // pred_check
    _
  $region15: #{ista_forward.1} parent=0 // pred_check_branch
    %144 = sbr.rel (0) target = $region17
  $region16: #{ista_forward.1} parent=0 // pred_region
    _
  $region17: #{ista_forward.1} parent=0 // pred_fallthru
    _
  // Predicated region
  $region18: #{ista_forward.1} parent=0 // pred_check
    _
  $region19: #{ista_forward.1} parent=0 // pred_check_branch
    %146 = sbr.rel (0) target = $region21
  $region20: #{ista_forward.1} parent=0 // pred_region
    _
  $region21: #{ista_forward.1} parent=0 // pred_fallthru
    _
  // Predicated region
  $region22: #{ista_forward.1} parent=0 // pred_check
    _
  $region23: #{ista_forward.1} parent=0 // pred_check_branch
    %148 = sbr.rel (0) target = $region25
  $region24: #{ista_forward.1} parent=0 // pred_region
    _
  $region25: #{ista_forward.1} parent=0 // pred_fallthru
    _
  // Predicated region
  $region26: #{ista_forward.1} parent=0 // pred_check
    _
  $region27: #{ista_forward.1} parent=0 // pred_check_branch
    %150 = sbr.rel (0) target = $region29
  $region28: #{ista_forward.1} parent=0 // pred_region
    _
  $region29: #{ista_forward.1} parent=0 // pred_fallthru
    _

// kernel: custom-call.64
$region0: #{custom-call.64}
  %s0 = inlined_call_operand.vmem [shape: f32[8,8], index: 0, kind: input, shape index: {}]
  %s1 = inlined_call_operand.vmem [shape: f32[8,8], index: 1, kind: output, shape index: {}]
  $region1: #{custom-call.64} parent=0
    #allocation0 [shape = 'u8[4096]{0}', space=vmem, size = 0x1000, scoped, tag = 'operand span for operand 0']
    #allocation1 [shape = 'u8[4096]{0}', space=vmem, size = 0x1000, scoped, tag = 'operand span for operand 1']
    // Predicated region
    $region2: #{custom-call.64} parent=1 // pred_check
      _
    $region3: #{custom-call.64} parent=1 // pred_check_branch
      %3 = sbr.rel (0) target = $region5
    $region4: #{custom-call.64} parent=1 // pred_region
      // Predicated region
      $region6: #{custom-call.64} parent=4 // pred_check
        _
      $region7: #{custom-call.64} parent=4 // pred_check_branch
        %5 = sbr.rel (0) target = $region9
      $region8: #{custom-call.64} parent=4 // pred_region
        // Predicated region
        $region21: #{custom-call.64} parent=8 // pred_check
          _
        $region22: #{custom-call.64} parent=8 // pred_check_branch
          %20 = sbr.rel (0) target = $region24
        $region23: #{custom-call.64} parent=8 // pred_region
          loop: start=0, step=1, limit=1
          $region25: #{custom-call.64} parent=23 // loop_pre_header
            _
          $region26: #{custom-call.64} parent=23 // loop_header
            %s22 = sphi 0, %s26
            %p23 = scmp.ge.s32.totalorder %s22, 1
            %s27 = sphi %s0, %s0
            %s28 = sphi [#allocation0], [#allocation0]
          $region27: #{custom-call.64} parent=23 // loop_header_branch
            %25 = sbr.rel (%p23) target = $region31
          $region28: #{custom-call.64} parent=23 // loop_body
            %v29 = vld [vmem:[%s27] sm:$0xff]
            %30 = vst [vmem:[%s28] sm:$0xff] %v29
          $region29: #{custom-call.64} parent=23 // loop_footer
            %s26 = sadd.s32 1, %s22
          $region30: #{custom-call.64} parent=23 // loop_footer_branch
            %21 = sbr.rel target = $region26
          $region31: #{custom-call.64} parent=23 // loop_exit
            _
        $region24: #{custom-call.64} parent=8 // pred_fallthru
          _
        // Predicated region
        $region32: #{custom-call.64} parent=8 // pred_check
          _
        $region33: #{custom-call.64} parent=8 // pred_check_branch
          %32 = sbr.rel target = $region35
        $region34: #{custom-call.64} parent=8 // pred_region
          _
        $region35: #{custom-call.64} parent=8 // pred_fallthru
          _
      $region9: #{custom-call.64} parent=4 // pred_fallthru
        _
      // Predicated region
      $region10: #{custom-call.64} parent=4 // pred_check
        _
      $region11: #{custom-call.64} parent=4 // pred_check_branch
        %7 = sbr.rel target = $region13
      $region12: #{custom-call.64} parent=4 // pred_region
        loop: start=0, step=1, limit=1
        $region14: #{custom-call.64} parent=12 // loop_pre_header
          _
        $region15: #{custom-call.64} parent=12 // loop_header
          %s10 = sphi 0, %s14
          %p11 = scmp.ge.s32.totalorder %s10, 1
          %s15 = sphi %s0, %s0
          %s16 = sphi [#allocation0], [#allocation0]
        $region16: #{custom-call.64} parent=12 // loop_header_branch
          %13 = sbr.rel (%p11) target = $region20
        $region17: #{custom-call.64} parent=12 // loop_body
          %v17 = vld [vmem:[%s15] sm:$0xff]
          %18 = vst [vmem:[%s16] sm:$0xff] %v17
        $region18: #{custom-call.64} parent=12 // loop_footer
          %s14 = sadd.s32 1, %s10
        $region19: #{custom-call.64} parent=12 // loop_footer_branch
          %9 = sbr.rel target = $region15
        $region20: #{custom-call.64} parent=12 // loop_exit
          _
      $region13: #{custom-call.64} parent=4 // pred_fallthru
        _
    $region5: #{custom-call.64} parent=1 // pred_fallthru
      _
    %33 = vnop
    %34 = vst [vmem:[#allocation1] sm:$0xff] 0.0
    %vm35 = vcmask 7168
    %v36 = vld [vmem:[#allocation1] ss:$0 sm:$0xff]
    %v37 = vld [vmem:[#allocation0] ss:$0 sm:$0xff]
    %v38 = vmul.f32 %v36, %v36
    %39 = vadd.xlane.f32.xlu0 %v38
    %v40 = vpop.xlane.xlu0 %39
    %v41 = vsub.f32 %v37, %v40
    %v42 = vrsqrt.pop %v41
    %v43 = vld [vmem:[#allocation0] sm:$0xff]
    %v44 = vld [vmem:[#allocation1] sm:$0xff]
    %v45 = vmul.f32 %v44, %v36
    %46 = vadd.xlane.f32.xlu0 %v45
    %v47 = vpop.xlane.xlu0 %46
    %v48 = vsub.f32 %v43, %v47
    %v49 = vmul.f32 %v48, %v42
    %v50 = vsel %vm35, %v49, 0.0
    %v51 = vadd.f32 %v44, %v50
    %52 = vst [vmem:[#allocation1] sm:$0xff] %v51
    %vm53 = vcmask 15368
    %s54 = scalar_lea.vmem [#allocation1], 1
    %v55 = vld [vmem:[%s54] ss:$0 sm:$0xff]
    %s56 = scalar_lea.vmem [#allocation0], 1
    %v57 = vld [vmem:[%s56] ss:$0 sm:$0xff]
    %v58 = vmul.f32 %v55, %v55
    %59 = vadd.xlane.f32.xlu0 %v58
    %v60 = vpop.xlane.xlu0 %59
    %v61 = vsub.f32 %v57, %v60
    %v62 = vrsqrt.pop %v61
    %v63 = vld [vmem:[#allocation0] sm:$0xff]
    %v64 = vld [vmem:[#allocation1] sm:$0xff]
    %v65 = vmul.f32 %v64, %v55
    %66 = vadd.xlane.f32.xlu0 %v65
    %v67 = vpop.xlane.xlu0 %66
    %v68 = vsub.f32 %v63, %v67
    %v69 = vmul.f32 %v68, %v62
    %vm70 = vcmask 1047553
    %vm71 = vmand %vm53, %vm70
    %v72 = vsel %vm71, %v69, 0.0
    %v73 = vadd.f32 %v64, %v72
    %74 = vst [vmem:[#allocation1] sm:$0xff] %v73
    %vm75 = vcmask 23568
    %s76 = scalar_lea.vmem [#allocation1], 2
    %v77 = vld [vmem:[%s76] ss:$0 sm:$0xff]
    %s78 = scalar_lea.vmem [#allocation0], 2
    %v79 = vld [vmem:[%s78] ss:$0 sm:$0xff]
    %v80 = vmul.f32 %v77, %v77
    %81 = vadd.xlane.f32.xlu0 %v80
    %v82 = vpop.xlane.xlu0 %81
    %v83 = vsub.f32 %v79, %v82
    %v84 = vrsqrt.pop %v83
    %v85 = vld [vmem:[#allocation0] sm:$0xff]
    %v86 = vld [vmem:[#allocation1] sm:$0xff]
    %v87 = vmul.f32 %v86, %v77
    %88 = vadd.xlane.f32.xlu0 %v87
    %v89 = vpop.xlane.xlu0 %88
    %v90 = vsub.f32 %v85, %v89
    %v91 = vmul.f32 %v90, %v84
    %vm92 = vcmask 1047554
    %vm93 = vmand %vm75, %vm92
    %v94 = vsel %vm93, %v91, 0.0
    %v95 = vadd.f32 %v86, %v94
    %96 = vst [vmem:[#allocation1] sm:$0xff] %v95
    %vm97 = vcmask 31768
    %s98 = scalar_lea.vmem [#allocation1], 3
    %v99 = vld [vmem:[%s98] ss:$0 sm:$0xff]
    %s100 = scalar_lea.vmem [#allocation0], 3
    %v101 = vld [vmem:[%s100] ss:$0 sm:$0xff]
    %v102 = vmul.f32 %v99, %v99
    %103 = vadd.xlane.f32.xlu0 %v102
    %v104 = vpop.xlane.xlu0 %103
    %v105 = vsub.f32 %v101, %v104
    %v106 = vrsqrt.pop %v105
    %v107 = vld [vmem:[#allocation0] sm:$0xff]
    %v108 = vld [vmem:[#allocation1] sm:$0xff]
    %v109 = vmul.f32 %v108, %v99
    %110 = vadd.xlane.f32.xlu0 %v109
    %v111 = vpop.xlane.xlu0 %110
    %v112 = vsub.f32 %v107, %v111
    %v113 = vmul.f32 %v112, %v106
    %vm114 = vcmask 1047555
    %vm115 = vmand %vm97, %vm114
    %v116 = vsel %vm115, %v113, 0.0
    %v117 = vadd.f32 %v108, %v116
    %118 = vst [vmem:[#allocation1] sm:$0xff] %v117
    %vm119 = vcmask 39968
    %s120 = scalar_lea.vmem [#allocation1], 4
    %v121 = vld [vmem:[%s120] ss:$0 sm:$0xff]
    %s122 = scalar_lea.vmem [#allocation0], 4
    %v123 = vld [vmem:[%s122] ss:$0 sm:$0xff]
    %v124 = vmul.f32 %v121, %v121
    %125 = vadd.xlane.f32.xlu0 %v124
    %v126 = vpop.xlane.xlu0 %125
    %v127 = vsub.f32 %v123, %v126
    %v128 = vrsqrt.pop %v127
    %v129 = vld [vmem:[#allocation0] sm:$0xff]
    %v130 = vld [vmem:[#allocation1] sm:$0xff]
    %v131 = vmul.f32 %v130, %v121
    %132 = vadd.xlane.f32.xlu0 %v131
    %v133 = vpop.xlane.xlu0 %132
    %v134 = vsub.f32 %v129, %v133
    %v135 = vmul.f32 %v134, %v128
    %vm136 = vcmask 1047556
    %vm137 = vmand %vm119, %vm136
    %v138 = vsel %vm137, %v135, 0.0
    %v139 = vadd.f32 %v130, %v138
    %140 = vst [vmem:[#allocation1] sm:$0xff] %v139
    %vm141 = vcmask 48168
    %s142 = scalar_lea.vmem [#allocation1], 5
    %v143 = vld [vmem:[%s142] ss:$0 sm:$0xff]
    %s144 = scalar_lea.vmem [#allocation0], 5
    %v145 = vld [vmem:[%s144] ss:$0 sm:$0xff]
    %v146 = vmul.f32 %v143, %v143
    %147 = vadd.xlane.f32.xlu0 %v146
    %v148 = vpop.xlane.xlu0 %147
    %v149 = vsub.f32 %v145, %v148
    %v150 = vrsqrt.pop %v149
    %v151 = vld [vmem:[#allocation0] sm:$0xff]
    %v152 = vld [vmem:[#allocation1] sm:$0xff]
    %v153 = vmul.f32 %v152, %v143
    %154 = vadd.xlane.f32.xlu0 %v153
    %v155 = vpop.xlane.xlu0 %154
    %v156 = vsub.f32 %v151, %v155
    %v157 = vmul.f32 %v156, %v150
    %vm158 = vcmask 1047557
    %vm159 = vmand %vm141, %vm158
    %v160 = vsel %vm159, %v157, 0.0
    %v161 = vadd.f32 %v152, %v160
    %162 = vst [vmem:[#allocation1] sm:$0xff] %v161
    %vm163 = vcmask 56368
    %s164 = scalar_lea.vmem [#allocation1], 6
    %v165 = vld [vmem:[%s164] ss:$0 sm:$0xff]
    %s166 = scalar_lea.vmem [#allocation0], 6
    %v167 = vld [vmem:[%s166] ss:$0 sm:$0xff]
    %v168 = vmul.f32 %v165, %v165
    %169 = vadd.xlane.f32.xlu0 %v168
    %v170 = vpop.xlane.xlu0 %169
    %v171 = vsub.f32 %v167, %v170
    %v172 = vrsqrt.pop %v171
    %v173 = vld [vmem:[#allocation0] sm:$0xff]
    %v174 = vld [vmem:[#allocation1] sm:$0xff]
    %v175 = vmul.f32 %v174, %v165
    %176 = vadd.xlane.f32.xlu0 %v175
    %v177 = vpop.xlane.xlu0 %176
    %v178 = vsub.f32 %v173, %v177
    %v179 = vmul.f32 %v178, %v172
    %vm180 = vcmask 1047558
    %vm181 = vmand %vm163, %vm180
    %v182 = vsel %vm181, %v179, 0.0
    %v183 = vadd.f32 %v174, %v182
    %184 = vst [vmem:[#allocation1] sm:$0xff] %v183
    %vm185 = vcmask 64568
    %s186 = scalar_lea.vmem [#allocation1], 7
    %v187 = vld [vmem:[%s186] ss:$0 sm:$0xff]
    %s188 = scalar_lea.vmem [#allocation0], 7
    %v189 = vld [vmem:[%s188] ss:$0 sm:$0xff]
    %v190 = vmul.f32 %v187, %v187
    %191 = vadd.xlane.f32.xlu0 %v190
    %v192 = vpop.xlane.xlu0 %191
    %v193 = vsub.f32 %v189, %v192
    %v194 = vrsqrt.pop %v193
    %v195 = vld [vmem:[#allocation0] sm:$0xff]
    %v196 = vld [vmem:[#allocation1] sm:$0xff]
    %v197 = vmul.f32 %v196, %v187
    %198 = vadd.xlane.f32.xlu0 %v197
    %v199 = vpop.xlane.xlu0 %198
    %v200 = vsub.f32 %v195, %v199
    %v201 = vmul.f32 %v200, %v194
    %vm202 = vcmask 1047559
    %vm203 = vmand %vm185, %vm202
    %v204 = vsel %vm203, %v201, 0.0
    %v205 = vadd.f32 %v196, %v204
    %206 = vst [vmem:[#allocation1] sm:$0xff] %v205
    // Predicated region
    $region36: #{custom-call.64} parent=1 // pred_check
      _
    $region37: #{custom-call.64} parent=1 // pred_check_branch
      %208 = sbr.rel (0) target = $region39
    $region38: #{custom-call.64} parent=1 // pred_region
      // Predicated region
      $region40: #{custom-call.64} parent=38 // pred_check
        _
      $region41: #{custom-call.64} parent=38 // pred_check_branch
        %210 = sbr.rel (0) target = $region43
      $region42: #{custom-call.64} parent=38 // pred_region
        // Predicated region
        $region55: #{custom-call.64} parent=42 // pred_check
          _
        $region56: #{custom-call.64} parent=42 // pred_check_branch
          %225 = sbr.rel (0) target = $region58
        $region57: #{custom-call.64} parent=42 // pred_region
          loop: start=0, step=1, limit=1
          $region59: #{custom-call.64} parent=57 // loop_pre_header
            _
          $region60: #{custom-call.64} parent=57 // loop_header
            %s227 = sphi 0, %s231
            %p228 = scmp.ge.s32.totalorder %s227, 1
            %s232 = sphi [#allocation1], [#allocation1]
            %s233 = sphi %s1, %s1
          $region61: #{custom-call.64} parent=57 // loop_header_branch
            %230 = sbr.rel (%p228) target = $region65
          $region62: #{custom-call.64} parent=57 // loop_body
            %v234 = vld [vmem:[%s232] sm:$0xff]
            %235 = vst [vmem:[%s233] sm:$0xff] %v234
          $region63: #{custom-call.64} parent=57 // loop_footer
            %s231 = sadd.s32 1, %s227
          $region64: #{custom-call.64} parent=57 // loop_footer_branch
            %226 = sbr.rel target = $region60
          $region65: #{custom-call.64} parent=57 // loop_exit
            _
        $region58: #{custom-call.64} parent=42 // pred_fallthru
          _
        // Predicated region
        $region66: #{custom-call.64} parent=42 // pred_check
          _
        $region67: #{custom-call.64} parent=42 // pred_check_branch
          %237 = sbr.rel target = $region69
        $region68: #{custom-call.64} parent=42 // pred_region
          _
        $region69: #{custom-call.64} parent=42 // pred_fallthru
          _
      $region43: #{custom-call.64} parent=38 // pred_fallthru
        _
      // Predicated region
      $region44: #{custom-call.64} parent=38 // pred_check
        _
      $region45: #{custom-call.64} parent=38 // pred_check_branch
        %212 = sbr.rel target = $region47
      $region46: #{custom-call.64} parent=38 // pred_region
        loop: start=0, step=1, limit=1
        $region48: #{custom-call.64} parent=46 // loop_pre_header
          _
        $region49: #{custom-call.64} parent=46 // loop_header
          %s215 = sphi 0, %s219
          %p216 = scmp.ge.s32.totalorder %s215, 1
          %s220 = sphi [#allocation1], [#allocation1]
          %s221 = sphi %s1, %s1
        $region50: #{custom-call.64} parent=46 // loop_header_branch
          %218 = sbr.rel (%p216) target = $region54
        $region51: #{custom-call.64} parent=46 // loop_body
          %v222 = vld [vmem:[%s220] sm:$0xff]
          %223 = vst [vmem:[%s221] sm:$0xff] %v222
        $region52: #{custom-call.64} parent=46 // loop_footer
          %s219 = sadd.s32 1, %s215
        $region53: #{custom-call.64} parent=46 // loop_footer_branch
          %214 = sbr.rel target = $region49
        $region54: #{custom-call.64} parent=46 // loop_exit
          _
      $region47: #{custom-call.64} parent=38 // pred_fallthru
        _
    $region39: #{custom-call.64} parent=1 // pred_fallthru
      _
    %238 = vnop

// kernel: custom-call.65
$region0: #{custom-call.65}
  %s0 = inlined_call_operand.vmem [shape: f32[1,8,8], index: 0, kind: input, shape index: {}]
  %s1 = inlined_call_operand.vmem [shape: f32[1,8,8], index: 1, kind: output, shape index: {}]
  $region1: #{custom-call.65} parent=0
    #allocation0 [shape = 'u8[4096]{0}', space=vmem, size = 0x1000, scoped, tag = 'operand span for operand 0']
    #allocation1 [shape = 'u8[4096]{0}', space=vmem, size = 0x1000, scoped, tag = 'operand span for operand 1']
    #allocation2 [shape = 'f32[8,8]{1,0}', space=vmem, size = 0x1000, scoped, tag = 'rescaled input a']
    // Predicated region
    $region2: #{custom-call.65} parent=1 // pred_check
      _
    $region3: #{custom-call.65} parent=1 // pred_check_branch
      %3 = sbr.rel (0) target = $region5
    $region4: #{custom-call.65} parent=1 // pred_region
      // Predicated region
      $region6: #{custom-call.65} parent=4 // pred_check
        _
      $region7: #{custom-call.65} parent=4 // pred_check_branch
        %5 = sbr.rel (0) target = $region9
      $region8: #{custom-call.65} parent=4 // pred_region
        // Predicated region
        $region21: #{custom-call.65} parent=8 // pred_check
          _
        $region22: #{custom-call.65} parent=8 // pred_check_branch
          %20 = sbr.rel (0) target = $region24
        $region23: #{custom-call.65} parent=8 // pred_region
          loop: start=0, step=1, limit=1
          $region25: #{custom-call.65} parent=23 // loop_pre_header
            _
          $region26: #{custom-call.65} parent=23 // loop_header
            %s22 = sphi 0, %s26
            %p23 = scmp.ge.s32.totalorder %s22, 1
            %s27 = sphi %s0, %s0
            %s28 = sphi [#allocation0], [#allocation0]
          $region27: #{custom-call.65} parent=23 // loop_header_branch
            %25 = sbr.rel (%p23) target = $region31
          $region28: #{custom-call.65} parent=23 // loop_body
            %v29 = vld [vmem:[%s27] sm:$0xff]
            %30 = vst [vmem:[%s28] sm:$0xff] %v29
          $region29: #{custom-call.65} parent=23 // loop_footer
            %s26 = sadd.s32 1, %s22
          $region30: #{custom-call.65} parent=23 // loop_footer_branch
            %21 = sbr.rel target = $region26
          $region31: #{custom-call.65} parent=23 // loop_exit
            _
        $region24: #{custom-call.65} parent=8 // pred_fallthru
          _
        // Predicated region
        $region32: #{custom-call.65} parent=8 // pred_check
          _
        $region33: #{custom-call.65} parent=8 // pred_check_branch
          %32 = sbr.rel target = $region35
        $region34: #{custom-call.65} parent=8 // pred_region
          _
        $region35: #{custom-call.65} parent=8 // pred_fallthru
          _
      $region9: #{custom-call.65} parent=4 // pred_fallthru
        _
      // Predicated region
      $region10: #{custom-call.65} parent=4 // pred_check
        _
      $region11: #{custom-call.65} parent=4 // pred_check_branch
        %7 = sbr.rel target = $region13
      $region12: #{custom-call.65} parent=4 // pred_region
        loop: start=0, step=1, limit=1
        $region14: #{custom-call.65} parent=12 // loop_pre_header
          _
        $region15: #{custom-call.65} parent=12 // loop_header
          %s10 = sphi 0, %s14
          %p11 = scmp.ge.s32.totalorder %s10, 1
          %s15 = sphi %s0, %s0
          %s16 = sphi [#allocation0], [#allocation0]
        $region16: #{custom-call.65} parent=12 // loop_header_branch
          %13 = sbr.rel (%p11) target = $region20
        $region17: #{custom-call.65} parent=12 // loop_body
          %v17 = vld [vmem:[%s15] sm:$0xff]
          %18 = vst [vmem:[%s16] sm:$0xff] %v17
        $region18: #{custom-call.65} parent=12 // loop_footer
          %s14 = sadd.s32 1, %s10
        $region19: #{custom-call.65} parent=12 // loop_footer_branch
          %9 = sbr.rel target = $region15
        $region20: #{custom-call.65} parent=12 // loop_exit
          _
      $region13: #{custom-call.65} parent=4 // pred_fallthru
        _
    $region5: #{custom-call.65} parent=1 // pred_fallthru
      _
    %33 = vnop
    %v34 = vlaneseq
    %v35 = vand.u32 %v34, 127
    %vm36 = vcmp.lt.s32.totalorder %v35, 8
    %v37 = vlaneseq
    %v38 = vshrl.u32 %v37, 7
    %vm40 = vcmp.eq.s32.totalorder %v38, %v35
    %v41 = vld [vmem:[#allocation0] sm:$0xff]
    %v42 = vsel %vm40, %v41, 0.0
    %43 = vadd.xlane.f32.xlu0 %v42
    %v44 = vpop.xlane.xlu0 %43
    %vm45 = vcmp.ge.s32.totalorder %v38, %v35
    %vm46 = vmand %vm45, %vm36
    %v47 = vsel %vm46, %v41, 0.0
    %v48 = vrcp.pop %v44
    %v49 = vmul.f32 %v47, %v48
    %50 = vst [vmem:[#allocation2] sm:$0xff] %v49
    %v51 = vlaneseq
    %v52 = vand.u32 %v51, 127
    %v53 = vlaneseq
    %v54 = vshrl.u32 %v53, 7
    %vm56 = vcmp.eq.s32.totalorder %v52, %v54
    %v57 = vlaneseq
    %v58 = vand.u32 %v57, 127
    %vm59 = vcmp.eq.s32.totalorder %v58, 0
    %v60 = vsel %vm59, 1.0, -1.0
    %v61 = vsel %vm56, %v60, 0.0
    %s62 = scalar_lea.vmem [#allocation2], 1
    %v63 = vld [vmem:[%s62] ss:$0 sm:$0xff]
    %v64 = vxor.u32 %v63, 2147483648
    %v65 = vlaneseq
    %v66 = vand.u32 %v65, 127
    %vm67 = vcmp.eq.s32.totalorder %v66, 1
    %v68 = vmul.f32 %v64, %v61
    %69 = vadd.xlane.f32.xlu0 %v68
    %v70 = vpop.xlane.xlu0 %69
    %v71 = vsel %vm67, %v70, %v61
    %s72 = scalar_lea.vmem [#allocation2], 2
    %v73 = vld [vmem:[%s72] ss:$0 sm:$0xff]
    %v74 = vxor.u32 %v73, 2147483648
    %v75 = vlaneseq
    %v76 = vand.u32 %v75, 127
    %vm77 = vcmp.eq.s32.totalorder %v76, 2
    %v78 = vmul.f32 %v74, %v71
    %79 = vadd.xlane.f32.xlu0 %v78
    %v80 = vpop.xlane.xlu0 %79
    %v81 = vsel %vm77, %v80, %v71
    %s82 = scalar_lea.vmem [#allocation2], 3
    %v83 = vld [vmem:[%s82] ss:$0 sm:$0xff]
    %v84 = vxor.u32 %v83, 2147483648
    %v85 = vlaneseq
    %v86 = vand.u32 %v85, 127
    %vm87 = vcmp.eq.s32.totalorder %v86, 3
    %v88 = vmul.f32 %v84, %v81
    %89 = vadd.xlane.f32.xlu0 %v88
    %v90 = vpop.xlane.xlu0 %89
    %v91 = vsel %vm87, %v90, %v81
    %s92 = scalar_lea.vmem [#allocation2], 4
    %v93 = vld [vmem:[%s92] ss:$0 sm:$0xff]
    %v94 = vxor.u32 %v93, 2147483648
    %v95 = vlaneseq
    %v96 = vand.u32 %v95, 127
    %vm97 = vcmp.eq.s32.totalorder %v96, 4
    %v98 = vmul.f32 %v94, %v91
    %99 = vadd.xlane.f32.xlu0 %v98
    %v100 = vpop.xlane.xlu0 %99
    %v101 = vsel %vm97, %v100, %v91
    %s102 = scalar_lea.vmem [#allocation2], 5
    %v103 = vld [vmem:[%s102] ss:$0 sm:$0xff]
    %v104 = vxor.u32 %v103, 2147483648
    %v105 = vlaneseq
    %v106 = vand.u32 %v105, 127
    %vm107 = vcmp.eq.s32.totalorder %v106, 5
    %v108 = vmul.f32 %v104, %v101
    %109 = vadd.xlane.f32.xlu0 %v108
    %v110 = vpop.xlane.xlu0 %109
    %v111 = vsel %vm107, %v110, %v101
    %s112 = scalar_lea.vmem [#allocation2], 6
    %v113 = vld [vmem:[%s112] ss:$0 sm:$0xff]
    %v114 = vxor.u32 %v113, 2147483648
    %v115 = vlaneseq
    %v116 = vand.u32 %v115, 127
    %vm117 = vcmp.eq.s32.totalorder %v116, 6
    %v118 = vmul.f32 %v114, %v111
    %119 = vadd.xlane.f32.xlu0 %v118
    %v120 = vpop.xlane.xlu0 %119
    %v121 = vsel %vm117, %v120, %v111
    %s122 = scalar_lea.vmem [#allocation2], 7
    %v123 = vld [vmem:[%s122] ss:$0 sm:$0xff]
    %v124 = vxor.u32 %v123, 2147483648
    %v125 = vlaneseq
    %v126 = vand.u32 %v125, 127
    %vm127 = vcmp.eq.s32.totalorder %v126, 7
    %v128 = vmul.f32 %v124, %v121
    %129 = vadd.xlane.f32.xlu0 %v128
    %v130 = vpop.xlane.xlu0 %129
    %v131 = vsel %vm127, %v130, %v121
    %v132 = vrcp.pop %v44
    %v133 = vmul.f32 %v131, %v132
    %vm134 = vweird.f32 %v44
    %v135 = vsel %vm134, %v131, %v133
    %136 = vst [vmem:[#allocation1] sm:$0xff] %v135
    // Predicated region
    $region36: #{custom-call.65} parent=1 // pred_check
      _
    $region37: #{custom-call.65} parent=1 // pred_check_branch
      %138 = sbr.rel (0) target = $region39
    $region38: #{custom-call.65} parent=1 // pred_region
      // Predicated region
      $region40: #{custom-call.65} parent=38 // pred_check
        _
      $region41: #{custom-call.65} parent=38 // pred_check_branch
        %140 = sbr.rel (0) target = $region43
      $region42: #{custom-call.65} parent=38 // pred_region
        // Predicated region
        $region55: #{custom-call.65} parent=42 // pred_check
          _
        $region56: #{custom-call.65} parent=42 // pred_check_branch
          %155 = sbr.rel (0) target = $region58
        $region57: #{custom-call.65} parent=42 // pred_region
          loop: start=0, step=1, limit=1
          $region59: #{custom-call.65} parent=57 // loop_pre_header
            _
          $region60: #{custom-call.65} parent=57 // loop_header
            %s157 = sphi 0, %s161
            %p158 = scmp.ge.s32.totalorder %s157, 1
            %s162 = sphi [#allocation1], [#allocation1]
            %s163 = sphi %s1, %s1
          $region61: #{custom-call.65} parent=57 // loop_header_branch
            %160 = sbr.rel (%p158) target = $region65
          $region62: #{custom-call.65} parent=57 // loop_body
            %v164 = vld [vmem:[%s162] sm:$0xff]
            %165 = vst [vmem:[%s163] sm:$0xff] %v164
          $region63: #{custom-call.65} parent=57 // loop_footer
            %s161 = sadd.s32 1, %s157
          $region64: #{custom-call.65} parent=57 // loop_footer_branch
            %156 = sbr.rel target = $region60
          $region65: #{custom-call.65} parent=57 // loop_exit
            _
        $region58: #{custom-call.65} parent=42 // pred_fallthru
          _
        // Predicated region
        $region66: #{custom-call.65} parent=42 // pred_check
          _
        $region67: #{custom-call.65} parent=42 // pred_check_branch
          %167 = sbr.rel target = $region69
        $region68: #{custom-call.65} parent=42 // pred_region
          _
        $region69: #{custom-call.65} parent=42 // pred_fallthru
          _
      $region43: #{custom-call.65} parent=38 // pred_fallthru
        _
      // Predicated region
      $region44: #{custom-call.65} parent=38 // pred_check
        _
      $region45: #{custom-call.65} parent=38 // pred_check_branch
        %142 = sbr.rel target = $region47
      $region46: #{custom-call.65} parent=38 // pred_region
        loop: start=0, step=1, limit=1
        $region48: #{custom-call.65} parent=46 // loop_pre_header
          _
        $region49: #{custom-call.65} parent=46 // loop_header
          %s145 = sphi 0, %s149
          %p146 = scmp.ge.s32.totalorder %s145, 1
          %s150 = sphi [#allocation1], [#allocation1]
          %s151 = sphi %s1, %s1
        $region50: #{custom-call.65} parent=46 // loop_header_branch
          %148 = sbr.rel (%p146) target = $region54
        $region51: #{custom-call.65} parent=46 // loop_body
          %v152 = vld [vmem:[%s150] sm:$0xff]
          %153 = vst [vmem:[%s151] sm:$0xff] %v152
        $region52: #{custom-call.65} parent=46 // loop_footer
          %s149 = sadd.s32 1, %s145
        $region53: #{custom-call.65} parent=46 // loop_footer_branch
          %144 = sbr.rel target = $region49
        $region54: #{custom-call.65} parent=46 // loop_exit
          _
      $region47: #{custom-call.65} parent=38 // pred_fallthru
        _
    $region39: #{custom-call.65} parent=1 // pred_fallthru
      _
    %168 = vnop

// kernel: custom-call.61
$region0: #{custom-call.61}
  %s0 = inlined_call_operand.vmem [shape: f32[4,4], index: 0, kind: input, shape index: {}]
  %s1 = inlined_call_operand.vmem [shape: f32[4,4], index: 1, kind: input, shape index: {}]
  %s2 = inlined_call_operand.vmem [shape: f32[4,4], index: 2, kind: input, shape index: {}]
  %s3 = inlined_call_operand.vmem [shape: f32[4,4], index: 3, kind: input, shape index: {}]
  %s4 = inlined_call_operand.vmem [shape: f32[4], index: 4, kind: output, shape index: {0}]
  %s5 = inlined_call_operand.vmem [shape: f32[4], index: 5, kind: output, shape index: {1}]
  %s6 = inlined_call_operand.vmem [shape: f32[4,4], index: 6, kind: output, shape index: {2}]
  %s7 = inlined_call_operand.vmem [shape: f32[4,4], index: 7, kind: output, shape index: {3}]
  %s8 = inlined_call_operand.vmem [shape: f32[4,4], index: 8, kind: output, shape index: {4}]
  %s9 = inlined_call_operand.vmem [shape: f32[4,4], index: 9, kind: output, shape index: {5}]
  %10 = xla_tuple %s4, %s5, %s6, %s7, %s8, %s9
  $region1: #{custom-call.61} parent=0
    #allocation0 [shape = 'u8[4096]{0}', space=vmem, size = 0x1000, scoped, tag = 'operand span for operand 0']
    #allocation1 [shape = 'u8[2048]{0}', space=vmem, size = 0x800, scoped, tag = 'packed  for operand 0']
    #allocation2 [shape = 'u8[4096]{0}', space=vmem, size = 0x1000, scoped, tag = 'operand span for operand 1']
    #allocation3 [shape = 'u8[2048]{0}', space=vmem, size = 0x800, scoped, tag = 'packed  for operand 1']
    #allocation4 [shape = 'u8[4096]{0}', space=vmem, size = 0x1000, scoped, tag = 'operand span for operand 2']
    #allocation5 [shape = 'u8[2048]{0}', space=vmem, size = 0x800, scoped, tag = 'packed  for operand 2']
    #allocation6 [shape = 'u8[4096]{0}', space=vmem, size = 0x1000, scoped, tag = 'operand span for operand 3']
    #allocation7 [shape = 'u8[2048]{0}', space=vmem, size = 0x800, scoped, tag = 'packed  for operand 3']
    #allocation8 [shape = 'u8[4096]{0}', space=vmem, size = 0x1000, scoped, tag = 'operand span for operand 4']
    #allocation9 [shape = 'u8[512]{0}', space=vmem, size = 0x400, scoped, tag = 'packed  for operand 4']
    #allocation10 [shape = 'u8[4096]{0}', space=vmem, size = 0x1000, scoped, tag = 'operand span for operand 5']
    #allocation11 [shape = 'u8[512]{0}', space=vmem, size = 0x400, scoped, tag = 'packed  for operand 5']
    #allocation12 [shape = 'u8[4096]{0}', space=vmem, size = 0x1000, scoped, tag = 'operand span for operand 6']
    #allocation13 [shape = 'u8[2048]{0}', space=vmem, size = 0x800, scoped, tag = 'packed  for operand 6']
    #allocation14 [shape = 'u8[4096]{0}', space=vmem, size = 0x1000, scoped, tag = 'operand span for operand 7']
    #allocation15 [shape = 'u8[2048]{0}', space=vmem, size = 0x800, scoped, tag = 'packed  for operand 7']
    #allocation16 [shape = 'u8[4096]{0}', space=vmem, size = 0x1000, scoped, tag = 'operand span for operand 8']
    #allocation17 [shape = 'u8[2048]{0}', space=vmem, size = 0x800, scoped, tag = 'packed  for operand 8']
    #allocation18 [shape = 'u8[4096]{0}', space=vmem, size = 0x1000, scoped, tag = 'operand span for operand 9']
    #allocation19 [shape = 'u8[2048]{0}', space=vmem, size = 0x800, scoped, tag = 'packed  for operand 9']
    #allocation20 [shape = 'f32[4,4]{1,0}', space=vmem, size = 0x1000, scoped, tag = 'a top-left matrix']
    #allocation21 [shape = 'f32[4,4]{1,0}', space=vmem, size = 0x1000, scoped, tag = 'a top-right matrix']
    #allocation22 [shape = 'f32[4,4]{1,0}', space=vmem, size = 0x1000, scoped, tag = 'a bottom-left matrix']
    #allocation23 [shape = 'f32[4,4]{1,0}', space=vmem, size = 0x1000, scoped, tag = 'a bottom-right matrix']
    %p12 = scmp.gt.s32.totalorder 4, 0
    // Predicated region
    $region2: #{custom-call.61} parent=1 // pred_check
      %p13 = pneg %p12
    $region3: #{custom-call.61} parent=1 // pred_check_branch
      %15 = sbr.rel (%p13) target = $region5
    $region4: #{custom-call.61} parent=1 // pred_region
      %s16 = sshra.s32 4, 3
      %p17 = scmp.gt.s32.totalorder %s16, 0
      // Predicated region
      $region6: #{custom-call.61} parent=4 // pred_check
        %p18 = pneg %p17
      $region7: #{custom-call.61} parent=4 // pred_check_branch
        %20 = sbr.rel (%p18) target = $region9
      $region8: #{custom-call.61} parent=4 // pred_region
        %s21 = ssub.s32 %s16, 1
        %s22 = smul.u32 %s21, 128
        %s23 = sshra.s32 %s22, 4
        %s24 = scalar_lea.vmem %s0, %s23
        %v25 = vld [vmem:[%s0] sm:$0xff]
        // While loop
        $region10: #{custom-call.61} parent=8 // loop_pre_header
          _
        $region11: #{custom-call.61} parent=8 // loop_header
          %s26 = sphi %s0, %s48
          %s27 = sphi [#allocation1], %s49
          %v28 = vphi %v25, %v50
          %s29 = ssub.s32 %s24, 64
          %p30 = scmp.gt.s32.totalorder %s26, %s29
        $region12: #{custom-call.61} parent=8 // loop_header_branch
          %32 = sbr.rel (%p30) target = $region16
        $region13: #{custom-call.61} parent=8 // loop_body
          %33 = vst [vmem:[%s27] sm:$0xff] %v28
          %v34 = vld [vmem:[%s26 + $0x8] sm:$0xff]
          %35 = vst [vmem:[%s27 + $0x8] sm:$0xff] %v34
          %v36 = vld [vmem:[%s26 + $0x10] sm:$0xff]
          %37 = vst [vmem:[%s27 + $0x10] sm:$0xff] %v36
          %v38 = vld [vmem:[%s26 + $0x18] sm:$0xff]
          %39 = vst [vmem:[%s27 + $0x18] sm:$0xff] %v38
          %v40 = vld [vmem:[%s26 + $0x20] sm:$0xff]
          %41 = vst [vmem:[%s27 + $0x20] sm:$0xff] %v40
          %v42 = vld [vmem:[%s26 + $0x28] sm:$0xff]
          %43 = vst [vmem:[%s27 + $0x28] sm:$0xff] %v42
          %v44 = vld [vmem:[%s26 + $0x30] sm:$0xff]
          %45 = vst [vmem:[%s27 + $0x30] sm:$0xff] %v44
          %v46 = vld [vmem:[%s26 + $0x38] sm:$0xff]
          %47 = vst [vmem:[%s27 + $0x38] sm:$0xff] %v46
        $region14: #{custom-call.61} parent=8 // loop_footer
          %s48 = scalar_lea.vmem %s26, 64
          %s49 = scalar_lea.vmem %s27, 64
          %v50 = vld [vmem:[%s26 + $0x40] sm:$0xff]
        $region15: #{custom-call.61} parent=8 // loop_footer_branch
          %51 = sbr.rel target = $region11
        $region16: #{custom-call.61} parent=8 // loop_exit
          _
        // While loop
        $region17: #{custom-call.61} parent=8 // loop_pre_header
          _
        $region18: #{custom-call.61} parent=8 // loop_header
          %s52 = sphi %s26, %s60
          %s53 = sphi %s27, %s61
          %v54 = vphi %v28, %v54
          %p55 = scmp.gt.s32.totalorder %s52, %s24
        $region19: #{custom-call.61} parent=8 // loop_header_branch
          %57 = sbr.rel (%p55) target = $region23
        $region20: #{custom-call.61} parent=8 // loop_body
          %v58 = vld [vmem:[%s52] sm:$0xff]
          %59 = vst [vmem:[%s53] sm:$0xff] %v58
        $region21: #{custom-call.61} parent=8 // loop_footer
          %s60 = scalar_lea.vmem %s52, 8
          %s61 = scalar_lea.vmem %s53, 8
        $region22: #{custom-call.61} parent=8 // loop_footer_branch
          %62 = sbr.rel target = $region18
        $region23: #{custom-call.61} parent=8 // loop_exit
          _
      $region9: #{custom-call.61} parent=4 // pred_fallthru
        _
      %s63 = sand.u32 4, 7
      %s64 = sshllo.u32 0, %s63
      %s65 = smul.u32 %s16, 128
      %s66 = sshra.s32 %s65, 4
      %s67 = scalar_lea.vmem [#allocation1], %s66
      %s68 = smul.u32 %s16, 128
      %s69 = sshra.s32 %s68, 4
      %s70 = scalar_lea.vmem %s0, %s69
      %v71 = vld [vmem:[%s70] sm:%s64]
      %72 = vst [vmem:[%s67] sm:%s64] %v71
    $region5: #{custom-call.61} parent=1 // pred_fallthru
      _
    %p74 = scmp.gt.s32.totalorder 4, 0
    // Predicated region
    $region24: #{custom-call.61} parent=1 // pred_check
      %p75 = pneg %p74
    $region25: #{custom-call.61} parent=1 // pred_check_branch
      %77 = sbr.rel (%p75) target = $region27
    $region26: #{custom-call.61} parent=1 // pred_region
      %s78 = sshra.s32 4, 3
      %p79 = scmp.gt.s32.totalorder %s78, 0
      // Predicated region
      $region28: #{custom-call.61} parent=26 // pred_check
        %p80 = pneg %p79
      $region29: #{custom-call.61} parent=26 // pred_check_branch
        %82 = sbr.rel (%p80) target = $region31
      $region30: #{custom-call.61} parent=26 // pred_region
        %s83 = ssub.s32 %s78, 1
        %s84 = smul.u32 %s83, 128
        %s85 = sshra.s32 %s84, 4
        %s86 = scalar_lea.vmem %s1, %s85
        %v87 = vld [vmem:[%s1] sm:$0xff]
        // While loop
        $region32: #{custom-call.61} parent=30 // loop_pre_header
          _
        $region33: #{custom-call.61} parent=30 // loop_header
          %s88 = sphi %s1, %s110
          %s89 = sphi [#allocation3], %s111
          %v90 = vphi %v87, %v112
          %s91 = ssub.s32 %s86, 64
          %p92 = scmp.gt.s32.totalorder %s88, %s91
        $region34: #{custom-call.61} parent=30 // loop_header_branch
          %94 = sbr.rel (%p92) target = $region38
        $region35: #{custom-call.61} parent=30 // loop_body
          %95 = vst [vmem:[%s89] sm:$0xff] %v90
          %v96 = vld [vmem:[%s88 + $0x8] sm:$0xff]
          %97 = vst [vmem:[%s89 + $0x8] sm:$0xff] %v96
          %v98 = vld [vmem:[%s88 + $0x10] sm:$0xff]
          %99 = vst [vmem:[%s89 + $0x10] sm:$0xff] %v98
          %v100 = vld [vmem:[%s88 + $0x18] sm:$0xff]
          %101 = vst [vmem:[%s89 + $0x18] sm:$0xff] %v100
          %v102 = vld [vmem:[%s88 + $0x20] sm:$0xff]
          %103 = vst [vmem:[%s89 + $0x20] sm:$0xff] %v102
          %v104 = vld [vmem:[%s88 + $0x28] sm:$0xff]
          %105 = vst [vmem:[%s89 + $0x28] sm:$0xff] %v104
          %v106 = vld [vmem:[%s88 + $0x30] sm:$0xff]
          %107 = vst [vmem:[%s89 + $0x30] sm:$0xff] %v106
          %v108 = vld [vmem:[%s88 + $0x38] sm:$0xff]
          %109 = vst [vmem:[%s89 + $0x38] sm:$0xff] %v108
        $region36: #{custom-call.61} parent=30 // loop_footer
          %s110 = scalar_lea.vmem %s88, 64
          %s111 = scalar_lea.vmem %s89, 64
          %v112 = vld [vmem:[%s88 + $0x40] sm:$0xff]
        $region37: #{custom-call.61} parent=30 // loop_footer_branch
          %113 = sbr.rel target = $region33
        $region38: #{custom-call.61} parent=30 // loop_exit
          _
        // While loop
        $region39: #{custom-call.61} parent=30 // loop_pre_header
          _
        $region40: #{custom-call.61} parent=30 // loop_header
          %s114 = sphi %s88, %s122
          %s115 = sphi %s89, %s123
          %v116 = vphi %v90, %v116
          %p117 = scmp.gt.s32.totalorder %s114, %s86
        $region41: #{custom-call.61} parent=30 // loop_header_branch
          %119 = sbr.rel (%p117) target = $region45
        $region42: #{custom-call.61} parent=30 // loop_body
          %v120 = vld [vmem:[%s114] sm:$0xff]
          %121 = vst [vmem:[%s115] sm:$0xff] %v120
        $region43: #{custom-call.61} parent=30 // loop_footer
          %s122 = scalar_lea.vmem %s114, 8
          %s123 = scalar_lea.vmem %s115, 8
        $region44: #{custom-call.61} parent=30 // loop_footer_branch
          %124 = sbr.rel target = $region40
        $region45: #{custom-call.61} parent=30 // loop_exit
          _
      $region31: #{custom-call.61} parent=26 // pred_fallthru
        _
      %s125 = sand.u32 4, 7
      %s126 = sshllo.u32 0, %s125
      %s127 = smul.u32 %s78, 128
      %s128 = sshra.s32 %s127, 4
      %s129 = scalar_lea.vmem [#allocation3], %s128
      %s130 = smul.u32 %s78, 128
      %s131 = sshra.s32 %s130, 4
      %s132 = scalar_lea.vmem %s1, %s131
      %v133 = vld [vmem:[%s132] sm:%s126]
      %134 = vst [vmem:[%s129] sm:%s126] %v133
    $region27: #{custom-call.61} parent=1 // pred_fallthru
      _
    %p136 = scmp.gt.s32.totalorder 4, 0
    // Predicated region
    $region46: #{custom-call.61} parent=1 // pred_check
      %p137 = pneg %p136
    $region47: #{custom-call.61} parent=1 // pred_check_branch
      %139 = sbr.rel (%p137) target = $region49
    $region48: #{custom-call.61} parent=1 // pred_region
      %s140 = sshra.s32 4, 3
      %p141 = scmp.gt.s32.totalorder %s140, 0
      // Predicated region
      $region50: #{custom-call.61} parent=48 // pred_check
        %p142 = pneg %p141
      $region51: #{custom-call.61} parent=48 // pred_check_branch
        %144 = sbr.rel (%p142) target = $region53
      $region52: #{custom-call.61} parent=48 // pred_region
        %s145 = ssub.s32 %s140, 1
        %s146 = smul.u32 %s145, 128
        %s147 = sshra.s32 %s146, 4
        %s148 = scalar_lea.vmem %s2, %s147
        %v149 = vld [vmem:[%s2] sm:$0xff]
        // While loop
        $region54: #{custom-call.61} parent=52 // loop_pre_header
          _
        $region55: #{custom-call.61} parent=52 // loop_header
          %s150 = sphi %s2, %s172
          %s151 = sphi [#allocation5], %s173
          %v152 = vphi %v149, %v174
          %s153 = ssub.s32 %s148, 64
          %p154 = scmp.gt.s32.totalorder %s150, %s153
        $region56: #{custom-call.61} parent=52 // loop_header_branch
          %156 = sbr.rel (%p154) target = $region60
        $region57: #{custom-call.61} parent=52 // loop_body
          %157 = vst [vmem:[%s151] sm:$0xff] %v152
          %v158 = vld [vmem:[%s150 + $0x8] sm:$0xff]
          %159 = vst [vmem:[%s151 + $0x8] sm:$0xff] %v158
          %v160 = vld [vmem:[%s150 + $0x10] sm:$0xff]
          %161 = vst [vmem:[%s151 + $0x10] sm:$0xff] %v160
          %v162 = vld [vmem:[%s150 + $0x18] sm:$0xff]
          %163 = vst [vmem:[%s151 + $0x18] sm:$0xff] %v162
          %v164 = vld [vmem:[%s150 + $0x20] sm:$0xff]
          %165 = vst [vmem:[%s151 + $0x20] sm:$0xff] %v164
          %v166 = vld [vmem:[%s150 + $0x28] sm:$0xff]
          %167 = vst [vmem:[%s151 + $0x28] sm:$0xff] %v166
          %v168 = vld [vmem:[%s150 + $0x30] sm:$0xff]
          %169 = vst [vmem:[%s151 + $0x30] sm:$0xff] %v168
          %v170 = vld [vmem:[%s150 + $0x38] sm:$0xff]
          %171 = vst [vmem:[%s151 + $0x38] sm:$0xff] %v170
        $region58: #{custom-call.61} parent=52 // loop_footer
          %s172 = scalar_lea.vmem %s150, 64
          %s173 = scalar_lea.vmem %s151, 64
          %v174 = vld [vmem:[%s150 + $0x40] sm:$0xff]
        $region59: #{custom-call.61} parent=52 // loop_footer_branch
          %175 = sbr.rel target = $region55
        $region60: #{custom-call.61} parent=52 // loop_exit
          _
        // While loop
        $region61: #{custom-call.61} parent=52 // loop_pre_header
          _
        $region62: #{custom-call.61} parent=52 // loop_header
          %s176 = sphi %s150, %s184
          %s177 = sphi %s151, %s185
          %v178 = vphi %v152, %v178
          %p179 = scmp.gt.s32.totalorder %s176, %s148
        $region63: #{custom-call.61} parent=52 // loop_header_branch
          %181 = sbr.rel (%p179) target = $region67
        $region64: #{custom-call.61} parent=52 // loop_body
          %v182 = vld [vmem:[%s176] sm:$0xff]
          %183 = vst [vmem:[%s177] sm:$0xff] %v182
        $region65: #{custom-call.61} parent=52 // loop_footer
          %s184 = scalar_lea.vmem %s176, 8
          %s185 = scalar_lea.vmem %s177, 8
        $region66: #{custom-call.61} parent=52 // loop_footer_branch
          %186 = sbr.rel target = $region62
        $region67: #{custom-call.61} parent=52 // loop_exit
          _
      $region53: #{custom-call.61} parent=48 // pred_fallthru
        _
      %s187 = sand.u32 4, 7
      %s188 = sshllo.u32 0, %s187
      %s189 = smul.u32 %s140, 128
      %s190 = sshra.s32 %s189, 4
      %s191 = scalar_lea.vmem [#allocation5], %s190
      %s192 = smul.u32 %s140, 128
      %s193 = sshra.s32 %s192, 4
      %s194 = scalar_lea.vmem %s2, %s193
      %v195 = vld [vmem:[%s194] sm:%s188]
      %196 = vst [vmem:[%s191] sm:%s188] %v195
    $region49: #{custom-call.61} parent=1 // pred_fallthru
      _
    %p198 = scmp.gt.s32.totalorder 4, 0
    // Predicated region
    $region68: #{custom-call.61} parent=1 // pred_check
      %p199 = pneg %p198
    $region69: #{custom-call.61} parent=1 // pred_check_branch
      %201 = sbr.rel (%p199) target = $region71
    $region70: #{custom-call.61} parent=1 // pred_region
      %s202 = sshra.s32 4, 3
      %p203 = scmp.gt.s32.totalorder %s202, 0
      // Predicated region
      $region72: #{custom-call.61} parent=70 // pred_check
        %p204 = pneg %p203
      $region73: #{custom-call.61} parent=70 // pred_check_branch
        %206 = sbr.rel (%p204) target = $region75
      $region74: #{custom-call.61} parent=70 // pred_region
        %s207 = ssub.s32 %s202, 1
        %s208 = smul.u32 %s207, 128
        %s209 = sshra.s32 %s208, 4
        %s210 = scalar_lea.vmem %s3, %s209
        %v211 = vld [vmem:[%s3] sm:$0xff]
        // While loop
        $region76: #{custom-call.61} parent=74 // loop_pre_header
          _
        $region77: #{custom-call.61} parent=74 // loop_header
          %s212 = sphi %s3, %s234
          %s213 = sphi [#allocation7], %s235
          %v214 = vphi %v211, %v236
          %s215 = ssub.s32 %s210, 64
          %p216 = scmp.gt.s32.totalorder %s212, %s215
        $region78: #{custom-call.61} parent=74 // loop_header_branch
          %218 = sbr.rel (%p216) target = $region82
        $region79: #{custom-call.61} parent=74 // loop_body
          %219 = vst [vmem:[%s213] sm:$0xff] %v214
          %v220 = vld [vmem:[%s212 + $0x8] sm:$0xff]
          %221 = vst [vmem:[%s213 + $0x8] sm:$0xff] %v220
          %v222 = vld [vmem:[%s212 + $0x10] sm:$0xff]
          %223 = vst [vmem:[%s213 + $0x10] sm:$0xff] %v222
          %v224 = vld [vmem:[%s212 + $0x18] sm:$0xff]
          %225 = vst [vmem:[%s213 + $0x18] sm:$0xff] %v224
          %v226 = vld [vmem:[%s212 + $0x20] sm:$0xff]
          %227 = vst [vmem:[%s213 + $0x20] sm:$0xff] %v226
          %v228 = vld [vmem:[%s212 + $0x28] sm:$0xff]
          %229 = vst [vmem:[%s213 + $0x28] sm:$0xff] %v228
          %v230 = vld [vmem:[%s212 + $0x30] sm:$0xff]
          %231 = vst [vmem:[%s213 + $0x30] sm:$0xff] %v230
          %v232 = vld [vmem:[%s212 + $0x38] sm:$0xff]
          %233 = vst [vmem:[%s213 + $0x38] sm:$0xff] %v232
        $region80: #{custom-call.61} parent=74 // loop_footer
          %s234 = scalar_lea.vmem %s212, 64
          %s235 = scalar_lea.vmem %s213, 64
          %v236 = vld [vmem:[%s212 + $0x40] sm:$0xff]
        $region81: #{custom-call.61} parent=74 // loop_footer_branch
          %237 = sbr.rel target = $region77
        $region82: #{custom-call.61} parent=74 // loop_exit
          _
        // While loop
        $region83: #{custom-call.61} parent=74 // loop_pre_header
          _
        $region84: #{custom-call.61} parent=74 // loop_header
          %s238 = sphi %s212, %s246
          %s239 = sphi %s213, %s247
          %v240 = vphi %v214, %v240
          %p241 = scmp.gt.s32.totalorder %s238, %s210
        $region85: #{custom-call.61} parent=74 // loop_header_branch
          %243 = sbr.rel (%p241) target = $region89
        $region86: #{custom-call.61} parent=74 // loop_body
          %v244 = vld [vmem:[%s238] sm:$0xff]
          %245 = vst [vmem:[%s239] sm:$0xff] %v244
        $region87: #{custom-call.61} parent=74 // loop_footer
          %s246 = scalar_lea.vmem %s238, 8
          %s247 = scalar_lea.vmem %s239, 8
        $region88: #{custom-call.61} parent=74 // loop_footer_branch
          %248 = sbr.rel target = $region84
        $region89: #{custom-call.61} parent=74 // loop_exit
          _
      $region75: #{custom-call.61} parent=70 // pred_fallthru
        _
      %s249 = sand.u32 4, 7
      %s250 = sshllo.u32 0, %s249
      %s251 = smul.u32 %s202, 128
      %s252 = sshra.s32 %s251, 4
      %s253 = scalar_lea.vmem [#allocation7], %s252
      %s254 = smul.u32 %s202, 128
      %s255 = sshra.s32 %s254, 4
      %s256 = scalar_lea.vmem %s3, %s255
      %v257 = vld [vmem:[%s256] sm:%s250]
      %258 = vst [vmem:[%s253] sm:%s250] %v257
    $region71: #{custom-call.61} parent=1 // pred_fallthru
      _
    %s260 = sshllo.u32 0, 4
    %v261 = vld [vmem:[#allocation1] sm:%s260]
    %262 = vst [vmem:[#allocation0] sm:%s260] %v261
    %s264 = sshllo.u32 0, 4
    %v265 = vld [vmem:[#allocation3] sm:%s264]
    %266 = vst [vmem:[#allocation2] sm:%s264] %v265
    %s268 = sshllo.u32 0, 4
    %v269 = vld [vmem:[#allocation5] sm:%s268]
    %270 = vst [vmem:[#allocation4] sm:%s268] %v269
    %s272 = sshllo.u32 0, 4
    %v273 = vld [vmem:[#allocation7] sm:%s272]
    %274 = vst [vmem:[#allocation6] sm:%s272] %v273
    %s275 = smov [#allocation20]
    %v276 = vld [vmem:[#allocation0] sm:$0xff]
    %277 = vst [vmem:[%s275] sm:$0xff] %v276
    %s278 = smov [#allocation21]
    %v279 = vld [vmem:[#allocation2] sm:$0xff]
    %280 = vst [vmem:[%s278] sm:$0xff] %v279
    %s281 = smov [#allocation22]
    %v282 = vld [vmem:[#allocation4] sm:$0xff]
    %283 = vst [vmem:[%s281] sm:$0xff] %v282
    %s284 = smov [#allocation23]
    %v285 = vld [vmem:[#allocation6] sm:$0xff]
    %286 = vst [vmem:[%s284] sm:$0xff] %v285
    %287 = vst [vmem:[#allocation12] sm:$0xff] 0.0
    %288 = vst [vmem:[#allocation14] sm:$0xff] 0.0
    %289 = vst [vmem:[#allocation16] sm:$0xff] 0.0
    %290 = vst [vmem:[#allocation18] sm:$0xff] 0.0
    %s291 = smov [#allocation12]
    %v292 = vlaneseq
    %v293 = vand.u32 %v292, 127
    %v294 = vmov %v293
    %v295 = vlaneseq
    %v296 = vshrl.u32 %v295, 7
    %v297 = vmov %v296
    %v298 = vld [vmem:[%s291] sm:$0xf]
    %vm301 = vcmp.eq.s32.totalorder %v297, %v294
    %v302 = vsel %vm301, 1.0, %v298
    %303 = vst [vmem:[%s291] sm:$0xf] %v302
    %s304 = smov [#allocation18]
    %v305 = vlaneseq
    %v306 = vand.u32 %v305, 127
    %v307 = vmov %v306
    %v308 = vlaneseq
    %v309 = vshrl.u32 %v308, 7
    %v310 = vmov %v309
    %v311 = vld [vmem:[%s304] sm:$0xf]
    %vm314 = vcmp.eq.s32.totalorder %v310, %v307
    %v315 = vsel %vm314, 1.0, %v311
    %316 = vst [vmem:[%s304] sm:$0xf] %v315
    // While loop
    $region90: #{custom-call.61} parent=1 // loop_pre_header
      _
    $region91: #{custom-call.61} parent=1 // loop_header
      %s318 = sphi 0, %s860
      %v319 = vlaneseq
      %v320 = vand.u32 %v319, 127
      %v321 = vmov %v320
      %v322 = vlaneseq
      %v323 = vshrl.u32 %v322, 7
      %v324 = vmov %v323
      %s325 = smov [#allocation20]
      %v326 = vlaneseq
      %v327 = vand.u32 %v326, 127
      %vm328 = vcmp.ge.s32.totalorder %v327, 0
      %vm329 = vcmp.lt.s32.totalorder %v327, 4
      %vm330 = vmand %vm328, %vm329
      %v331 = vld [vmem:[%s325] sm:$0xf]
      %v332 = vsel %vm330, %v331, 0.0
      %v333 = vmul.f32 %v332, %v332
      %vm336 = vcmp.eq.s32.totalorder %v324, %v321
      %v337 = vsel %vm336, 0.0, %v333
      %v338 = vlaneseq
      %v339 = vand.u32 %v338, 127
      %v340 = vmov %v339
      %v341 = vlaneseq
      %v342 = vshrl.u32 %v341, 7
      %v343 = vmov %v342
      %s344 = smov [#allocation21]
      %v345 = vlaneseq
      %v346 = vand.u32 %v345, 127
      %vm347 = vcmp.ge.s32.totalorder %v346, 0
      %vm348 = vcmp.lt.s32.totalorder %v346, 4
      %vm349 = vmand %vm347, %vm348
      %v350 = vld [vmem:[%s344] sm:$0xf]
      %v351 = vsel %vm349, %v350, 0.0
      %v352 = vmul.f32 %v351, %v351
      %v353 = vadd.f32 %v337, %v352
      %v354 = vadd.f32 %v333, %v352
      %v355 = vlaneseq
      %v356 = vand.u32 %v355, 127
      %v357 = vmov %v356
      %v358 = vlaneseq
      %v359 = vshrl.u32 %v358, 7
      %v360 = vmov %v359
      %s361 = smov [#allocation22]
      %v362 = vlaneseq
      %v363 = vand.u32 %v362, 127
      %vm364 = vcmp.ge.s32.totalorder %v363, 0
      %vm365 = vcmp.lt.s32.totalorder %v363, 4
      %vm366 = vmand %vm364, %vm365
      %v367 = vld [vmem:[%s361] sm:$0xf]
      %v368 = vsel %vm366, %v367, 0.0
      %v369 = vmul.f32 %v368, %v368
      %v370 = vadd.f32 %v353, %v369
      %v371 = vadd.f32 %v354, %v369
      %v372 = vlaneseq
      %v373 = vand.u32 %v372, 127
      %v374 = vmov %v373
      %v375 = vlaneseq
      %v376 = vshrl.u32 %v375, 7
      %v377 = vmov %v376
      %s378 = smov [#allocation23]
      %v379 = vlaneseq
      %v380 = vand.u32 %v379, 127
      %vm381 = vcmp.ge.s32.totalorder %v380, 0
      %vm382 = vcmp.lt.s32.totalorder %v380, 4
      %vm383 = vmand %vm381, %vm382
      %v384 = vld [vmem:[%s378] sm:$0xf]
      %v385 = vsel %vm383, %v384, 0.0
      %v386 = vmul.f32 %v385, %v385
      %vm389 = vcmp.eq.s32.totalorder %v377, %v374
      %v390 = vsel %vm389, 0.0, %v386
      %v391 = vadd.f32 %v370, %v390
      %v392 = vadd.f32 %v371, %v386
      %393 = vadd.xlane.f32.xlu0 %v392
      %v394 = vpop.xlane.xlu0 %393
      %v395 = vrot.slane %v394, 4
      %v396 = vadd.f32 %v394, %v395
      %v397 = vrot.slane %v396, 2
      %v398 = vadd.f32 %v396, %v397
      %v399 = vrot.slane %v398, 1
      %v400 = vadd.f32 %v398, %v399
      %401 = vadd.xlane.f32.xlu0 %v391
      %v402 = vpop.xlane.xlu0 %401
      %v403 = vrot.slane %v402, 4
      %v404 = vadd.f32 %v402, %v403
      %v405 = vrot.slane %v404, 2
      %v406 = vadd.f32 %v404, %v405
      %v407 = vrot.slane %v406, 1
      %v408 = vadd.f32 %v406, %v407
      %s409 = vtos %v408
      %s410 = vtos %v400
      %s411 = smul.f32 1e-10, %s410
      %p412 = scmp.le.f32.partialorder %s409, %s411
      %p413 = scmp.ge.s32.totalorder %s318, 15
      %p414 = por %p412, %p413
    $region92: #{custom-call.61} parent=1 // loop_header_branch
      %862 = sbr.rel (%p414) target = $region96
    $region93: #{custom-call.61} parent=1 // loop_body
      loop: start=0, step=1, limit=7
      $region97: #{custom-call.61} parent=93 // loop_pre_header
        _
      $region98: #{custom-call.61} parent=93 // loop_header
        %s416 = sphi 0, %s420
        %p417 = scmp.ge.s32.totalorder %s416, 7
      $region99: #{custom-call.61} parent=93 // loop_header_branch
        %419 = sbr.rel (%p417) target = $region103
      $region100: #{custom-call.61} parent=93 // loop_body
        #allocation24 [shape = 'f32[1024]{0}', space=vmem, size = 0x1000, scoped, tag = 'a_tl_diag vmem']
        #allocation25 [shape = 'f32[1024]{0}', space=vmem, size = 0x1000, scoped, tag = 'a_tr_diag vmem']
        #allocation26 [shape = 'f32[1024]{0}', space=vmem, size = 0x1000, scoped, tag = 'a_br_diag vmem']
        #allocation27 [shape = 'f32[1024]{0}', space=vmem, size = 0x1000, scoped, tag = 'rt1 vmem']
        #allocation28 [shape = 'f32[1024]{0}', space=vmem, size = 0x1000, scoped, tag = 'rt2 vmem']
        #allocation29 [shape = 'f32[1024]{0}', space=vmem, size = 0x1000, scoped, tag = 'c vmem']
        #allocation30 [shape = 'f32[1024]{0}', space=vmem, size = 0x1000, scoped, tag = 's vmem']
        #allocation31 [shape = 'f32[4096]{0}', space=vmem, size = 0x4000, scoped, tag = 'c broadcast']
        #allocation32 [shape = 'f32[4096]{0}', space=vmem, size = 0x4000, scoped, tag = 's broadcast']
        %s421 = smov [#allocation20]
        %s422 = smov [#allocation24]
        %v423 = vlaneseq
        %v424 = vand.u32 %v423, 127
        %v425 = vmov %v424
        %v426 = vlaneseq
        %v427 = vshrl.u32 %v426, 7
        %v428 = vmov %v427
        %v429 = vld [vmem:[%s421] sm:$0xf]
        %vm432 = vcmp.eq.s32.totalorder %v428, %v425
        %v433 = vsel %vm432, %v429, 0.0
        %v434 = vrot.slane %v433, 4
        %v435 = vadd.f32 %v433, %v434
        %v436 = vrot.slane %v435, 2
        %v437 = vadd.f32 %v435, %v436
        %v438 = vrot.slane %v437, 1
        %v439 = vadd.f32 %v437, %v438
        %440 = vst [vmem:[%s422] sm:$0x1] %v439
        %s441 = smov [#allocation21]
        %s442 = smov [#allocation25]
        %v443 = vlaneseq
        %v444 = vand.u32 %v443, 127
        %v445 = vmov %v444
        %v446 = vlaneseq
        %v447 = vshrl.u32 %v446, 7
        %v448 = vmov %v447
        %v449 = vld [vmem:[%s441] sm:$0xf]
        %vm452 = vcmp.eq.s32.totalorder %v448, %v445
        %v453 = vsel %vm452, %v449, 0.0
        %v454 = vrot.slane %v453, 4
        %v455 = vadd.f32 %v453, %v454
        %v456 = vrot.slane %v455, 2
        %v457 = vadd.f32 %v455, %v456
        %v458 = vrot.slane %v457, 1
        %v459 = vadd.f32 %v457, %v458
        %460 = vst [vmem:[%s442] sm:$0x1] %v459
        %s461 = smov [#allocation23]
        %s462 = smov [#allocation26]
        %v463 = vlaneseq
        %v464 = vand.u32 %v463, 127
        %v465 = vmov %v464
        %v466 = vlaneseq
        %v467 = vshrl.u32 %v466, 7
        %v468 = vmov %v467
        %v469 = vld [vmem:[%s461] sm:$0xf]
        %vm472 = vcmp.eq.s32.totalorder %v468, %v465
        %v473 = vsel %vm472, %v469, 0.0
        %v474 = vrot.slane %v473, 4
        %v475 = vadd.f32 %v473, %v474
        %v476 = vrot.slane %v475, 2
        %v477 = vadd.f32 %v475, %v476
        %v478 = vrot.slane %v477, 1
        %v479 = vadd.f32 %v477, %v478
        %480 = vst [vmem:[%s462] sm:$0x1] %v479
        %s481 = smov [#allocation29]
        %s482 = smov [#allocation30]
        %s483 = smov [#allocation24]
        %v484 = vld [vmem:[%s483] sm:$0xff]
        %s485 = smov [#allocation25]
        %v486 = vld [vmem:[%s485] sm:$0xff]
        %s487 = smov [#allocation26]
        %v488 = vld [vmem:[%s487] sm:$0xff]
        %v489 = vsub.f32 %v488, %v484
        %v490 = vmul.f32 2.0, %v486
        %v491 = vrcp.pop %v490
        %v492 = vmul.f32 %v489, %v491
        %vm493 = vcmp.ge.f32.partialorder %v492, 0.0
        %v494 = vmul.f32 %v492, %v492
        %v495 = vadd.f32 1.0, %v494
        %v496 = vrsqrt.pop %v495
        %v497 = vmul.f32 %v495, %v496
        %vm498 = vcmp.eq.f32.partialorder %v495, inf
        %v499 = vsel %vm498, %v495, %v497
        %vm500 = vcmp.eq.f32.partialorder %v495, 0.0
        %v501 = vand.u32 %v495, 2147483648
        %v502 = vsel %vm500, %v501, %v499
        %v503 = vxor.u32 %v502, 2147483648
        %v504 = vsel %vm493, %v502, %v503
        %v505 = vadd.f32 %v492, %v504
        %v506 = vrcp.pop %v505
        %v507 = vand.u32 2147483647, %v484
        %v508 = vand.u32 2147483647, %v486
        %v509 = vand.u32 2147483647, %v488
        %v510 = vmin.f32 %v507, %v509
        %v511 = vmul.f32 1.1920929e-08, %v510
        %vm512 = vcmp.le.f32.partialorder %v508, %v511
        %v513 = vsel %vm512, 0.0, %v506
        %v514 = vmul.f32 %v513, %v513
        %v515 = vadd.f32 1.0, %v514
        %v516 = vrsqrt.pop %v515
        %v517 = vmul.f32 %v513, %v516
        %v518 = vmul.f32 %v513, %v486
        %v519 = vsub.f32 %v484, %v518
        %v520 = vmul.f32 %v513, %v486
        %v521 = vadd.f32 %v488, %v520
        %s522 = smov [#allocation27]
        %523 = vst [vmem:[%s522] sm:$0xff] %v519
        %s524 = smov [#allocation28]
        %525 = vst [vmem:[%s524] sm:$0xff] %v521
        %s526 = smov %s481
        %527 = vst [vmem:[%s526] sm:$0xff] %v516
        %s528 = smov %s482
        %529 = vst [vmem:[%s528] sm:$0xff] %v517
        %s530 = smov [#allocation29]
        %v531 = vld [vmem:[%s530] ss:$0 sm:$0xff]
        %v532 = vlaneseq
        %v533 = vand.u32 %v532, 127
        %v534 = vmov %v533
        %v535 = vlaneseq
        %v536 = vshrl.u32 %v535, 7
        %v537 = vmov %v536
        %vm539 = vcmp.eq.s32.totalorder %v537, %v534
        %v540 = vsel %vm539, %v531, 0.0
        %541 = vadd.xlane.f32.xlu0 %v540
        %v542 = vpop.xlane.xlu0 %541
        %s543 = smov [#allocation31]
        %544 = vst [vmem:[%s543] sm:$0xff] %v542
        %s545 = smov [#allocation30]
        %v546 = vld [vmem:[%s545] ss:$0 sm:$0xff]
        %v547 = vlaneseq
        %v548 = vand.u32 %v547, 127
        %v549 = vmov %v548
        %v550 = vlaneseq
        %v551 = vshrl.u32 %v550, 7
        %v552 = vmov %v551
        %vm554 = vcmp.eq.s32.totalorder %v552, %v549
        %v555 = vsel %vm554, %v546, 0.0
        %556 = vadd.xlane.f32.xlu0 %v555
        %v557 = vpop.xlane.xlu0 %556
        %s558 = smov [#allocation32]
        %559 = vst [vmem:[%s558] sm:$0xff] %v557
        %s560 = smov [#allocation31]
        %v561 = vld [vmem:[%s560] sm:$0xff]
        %s562 = smov [#allocation32]
        %v563 = vld [vmem:[%s562] sm:$0xff]
        %s564 = smov [#allocation20]
        %s565 = smov [#allocation21]
        %s566 = smov [#allocation22]
        %s567 = smov [#allocation23]
        %v568 = vld [vmem:[%s564] sm:$0xf]
        %v569 = vld [vmem:[%s565] sm:$0xf]
        %v570 = vld [vmem:[%s566] sm:$0xf]
        %v571 = vld [vmem:[%s567] sm:$0xf]
        %v572 = vmul.f32 %v561, %v568
        %v573 = vmul.f32 %v563, %v570
        %v574 = vsub.f32 %v572, %v573
        %v575 = vmul.f32 %v561, %v569
        %v576 = vmul.f32 %v563, %v571
        %v577 = vsub.f32 %v575, %v576
        %v578 = vmul.f32 %v563, %v568
        %v579 = vmul.f32 %v561, %v570
        %v580 = vadd.f32 %v578, %v579
        %v581 = vmul.f32 %v563, %v569
        %v582 = vmul.f32 %v561, %v571
        %v583 = vadd.f32 %v581, %v582
        %584 = vst [vmem:[%s564] sm:$0xf] %v574
        %585 = vst [vmem:[%s565] sm:$0xf] %v577
        %586 = vst [vmem:[%s566] sm:$0xf] %v580
        %587 = vst [vmem:[%s567] sm:$0xf] %v583
        %s588 = smov [#allocation29]
        %v589 = vld [vmem:[%s588] ss:$0 sm:$0xff]
        %s590 = smov [#allocation30]
        %v591 = vld [vmem:[%s590] ss:$0 sm:$0xff]
        %s592 = smov [#allocation20]
        %s593 = smov [#allocation21]
        %s594 = smov [#allocation22]
        %s595 = smov [#allocation23]
        %v596 = vld [vmem:[%s592] sm:$0xf]
        %v597 = vld [vmem:[%s593] sm:$0xf]
        %v598 = vld [vmem:[%s594] sm:$0xf]
        %v599 = vld [vmem:[%s595] sm:$0xf]
        %v600 = vmul.f32 %v589, %v596
        %v601 = vmul.f32 %v591, %v597
        %v602 = vsub.f32 %v600, %v601
        %v603 = vmul.f32 %v591, %v596
        %v604 = vmul.f32 %v589, %v597
        %v605 = vadd.f32 %v603, %v604
        %v606 = vmul.f32 %v589, %v598
        %v607 = vmul.f32 %v591, %v599
        %v608 = vsub.f32 %v606, %v607
        %v609 = vmul.f32 %v591, %v598
        %v610 = vmul.f32 %v589, %v599
        %v611 = vadd.f32 %v609, %v610
        %612 = vst [vmem:[%s592] sm:$0xf] %v602
        %613 = vst [vmem:[%s593] sm:$0xf] %v605
        %614 = vst [vmem:[%s594] sm:$0xf] %v608
        %615 = vst [vmem:[%s595] sm:$0xf] %v611
        %s616 = smov [#allocation20]
        %s617 = smov [#allocation27]
        %v618 = vlaneseq
        %v619 = vand.u32 %v618, 127
        %v620 = vmov %v619
        %v621 = vlaneseq
        %v622 = vshrl.u32 %v621, 7
        %v623 = vmov %v622
        %v624 = vld [vmem:[%s617] ss:$0 sm:$0xff]
        %v625 = vld [vmem:[%s616] sm:$0xf]
        %vm628 = vcmp.eq.s32.totalorder %v623, %v620
        %v629 = vsel %vm628, %v624, %v625
        %630 = vst [vmem:[%s616] sm:$0xf] %v629
        %s631 = smov [#allocation21]
        %v632 = vlaneseq
        %v633 = vand.u32 %v632, 127
        %v634 = vmov %v633
        %v635 = vlaneseq
        %v636 = vshrl.u32 %v635, 7
        %v637 = vmov %v636
        %v638 = vld [vmem:[%s631] sm:$0xf]
        %vm641 = vcmp.eq.s32.totalorder %v637, %v634
        %v642 = vsel %vm641, 0.0, %v638
        %643 = vst [vmem:[%s631] sm:$0xf] %v642
        %s644 = smov [#allocation22]
        %v645 = vlaneseq
        %v646 = vand.u32 %v645, 127
        %v647 = vmov %v646
        %v648 = vlaneseq
        %v649 = vshrl.u32 %v648, 7
        %v650 = vmov %v649
        %v651 = vld [vmem:[%s644] sm:$0xf]
        %vm654 = vcmp.eq.s32.totalorder %v650, %v647
        %v655 = vsel %vm654, 0.0, %v651
        %656 = vst [vmem:[%s644] sm:$0xf] %v655
        %s657 = smov [#allocation23]
        %s658 = smov [#allocation28]
        %v659 = vlaneseq
        %v660 = vand.u32 %v659, 127
        %v661 = vmov %v660
        %v662 = vlaneseq
        %v663 = vshrl.u32 %v662, 7
        %v664 = vmov %v663
        %v665 = vld [vmem:[%s658] ss:$0 sm:$0xff]
        %v666 = vld [vmem:[%s657] sm:$0xf]
        %vm669 = vcmp.eq.s32.totalorder %v664, %v661
        %v670 = vsel %vm669, %v665, %v666
        %671 = vst [vmem:[%s657] sm:$0xf] %v670
        %s672 = smov [#allocation20]
        %s673 = smov [#allocation21]
        %v674 = vld [vmem:[%s673] sm:$0xf]
        %675 = vrot.lane.b32.xlu0 %v674, 1
        %v676 = vpop.permute.xlu0 %675
        %v677 = vld [vmem:[%s672] sm:$0xf]
        %v678 = vld [vmem:[%s672] sm:$0xf]
        %679 = vrot.lane.b32.xlu0 %v678, 1
        %v680 = vpop.permute.xlu0 %679
        %v681 = vlaneseq
        %v682 = vand.u32 %v681, 127
        %vm683 = vcmp.eq.s32.totalorder %v682, 0
        %v684 = vsel %vm683, %v678, %v680
        %v685 = vlaneseq
        %v686 = vand.u32 %v685, 127
        %vm687 = vcmp.eq.s32.totalorder %v686, 1
        %v688 = vsel %vm687, %v676, %v684
        %v689 = vlaneseq
        %v690 = vand.u32 %v689, 127
        %vm691 = vcmp.ge.s32.totalorder %v690, 0
        %vm692 = vcmp.lt.s32.totalorder %v690, 4
        %vm693 = vmand %vm691, %vm692
        %v694 = vsel %vm693, %v688, 0.0
        %v695 = vld [vmem:[%s673] sm:$0xf]
        %696 = vrot.lane.b32.xlu0 %v695, 127
        %v697 = vpop.permute.xlu0 %696
        %v698 = vlaneseq
        %v699 = vand.u32 %v698, 127
        %vm700 = vcmp.eq.s32.totalorder %v699, 3
        %v701 = vsel %vm700, %v677, %v697
        %702 = vst [vmem:[%s672] sm:$0xf] %v694
        %703 = vst [vmem:[%s673] sm:$0xf] %v701
        %s704 = smov [#allocation22]
        %s705 = smov [#allocation23]
        %v706 = vld [vmem:[%s705] sm:$0xf]
        %707 = vrot.lane.b32.xlu0 %v706, 1
        %v708 = vpop.permute.xlu0 %707
        %v709 = vld [vmem:[%s704] sm:$0xf]
        %v710 = vld [vmem:[%s704] sm:$0xf]
        %711 = vrot.lane.b32.xlu0 %v710, 1
        %v712 = vpop.permute.xlu0 %711
        %v713 = vlaneseq
        %v714 = vand.u32 %v713, 127
        %vm715 = vcmp.eq.s32.totalorder %v714, 0
        %v716 = vsel %vm715, %v710, %v712
        %v717 = vlaneseq
        %v718 = vand.u32 %v717, 127
        %vm719 = vcmp.eq.s32.totalorder %v718, 1
        %v720 = vsel %vm719, %v708, %v716
        %v721 = vlaneseq
        %v722 = vand.u32 %v721, 127
        %vm723 = vcmp.ge.s32.totalorder %v722, 0
        %vm724 = vcmp.lt.s32.totalorder %v722, 4
        %vm725 = vmand %vm723, %vm724
        %v726 = vsel %vm725, %v720, 0.0
        %v727 = vld [vmem:[%s705] sm:$0xf]
        %728 = vrot.lane.b32.xlu0 %v727, 127
        %v729 = vpop.permute.xlu0 %728
        %v730 = vlaneseq
        %v731 = vand.u32 %v730, 127
        %vm732 = vcmp.eq.s32.totalorder %v731, 3
        %v733 = vsel %vm732, %v709, %v729
        %734 = vst [vmem:[%s704] sm:$0xf] %v726
        %735 = vst [vmem:[%s705] sm:$0xf] %v733
        %s736 = smov [#allocation20]
        %s737 = smov [#allocation22]
        %v738 = vld [vmem:[%s736] ss:$0 sm:$0xff]
        %s740 = scalar_lea.vmem %s736, 4294967295
        %v741 = vld [vmem:[%s740] sm:$0xe]
        %v742 = vlaneseq
        %v743 = vshrl.u32 %v742, 7
        %vm744 = vcmp.eq.s32.totalorder %v743, 0
        %v745 = vsel %vm744, %v738, %v741
        %s746 = scalar_lea.vmem %s736, 3
        %v747 = vld [vmem:[%s746] ss:$0 sm:$0xff]
        %748 = vst [vmem:[%s736] sm:$0xf] %v745
        %v749 = vld [vmem:[%s737] ss:$0 sm:$0xff]
        %s750 = scalar_lea.vmem %s736, 1
        %751 = vst [vmem:[%s750] sm:$0x1] %v749
        %s752 = scalar_lea.vmem %s737, 1
        %v753 = vld [vmem:[%s752] sm:$0x7]
        %v754 = vlaneseq
        %v755 = vshrl.u32 %v754, 7
        %vm756 = vcmp.eq.s32.totalorder %v755, 3
        %v757 = vsel %vm756, %v747, %v753
        %v758 = vld [vmem:[%s737] ss:$0 sm:$0xff]
        %759 = vst [vmem:[%s737] sm:$0xf] %v757
        %s760 = smov [#allocation21]
        %s761 = smov [#allocation23]
        %v762 = vld [vmem:[%s760] ss:$0 sm:$0xff]
        %s764 = scalar_lea.vmem %s760, 4294967295
        %v765 = vld [vmem:[%s764] sm:$0xe]
        %v766 = vlaneseq
        %v767 = vshrl.u32 %v766, 7
        %vm768 = vcmp.eq.s32.totalorder %v767, 0
        %v769 = vsel %vm768, %v762, %v765
        %s770 = scalar_lea.vmem %s760, 3
        %v771 = vld [vmem:[%s770] ss:$0 sm:$0xff]
        %772 = vst [vmem:[%s760] sm:$0xf] %v769
        %v773 = vld [vmem:[%s761] ss:$0 sm:$0xff]
        %s774 = scalar_lea.vmem %s760, 1
        %775 = vst [vmem:[%s774] sm:$0x1] %v773
        %s776 = scalar_lea.vmem %s761, 1
        %v777 = vld [vmem:[%s776] sm:$0x7]
        %v778 = vlaneseq
        %v779 = vshrl.u32 %v778, 7
        %vm780 = vcmp.eq.s32.totalorder %v779, 3
        %v781 = vsel %vm780, %v771, %v777
        %v782 = vld [vmem:[%s761] ss:$0 sm:$0xff]
        %783 = vst [vmem:[%s761] sm:$0xf] %v781
        %s784 = smov [#allocation31]
        %v785 = vld [vmem:[%s784] sm:$0xff]
        %s786 = smov [#allocation32]
        %v787 = vld [vmem:[%s786] sm:$0xff]
        %s788 = smov [#allocation12]
        %s789 = smov [#allocation14]
        %s790 = smov [#allocation16]
        %s791 = smov [#allocation18]
        %v792 = vld [vmem:[%s788] sm:$0xf]
        %v793 = vld [vmem:[%s789] sm:$0xf]
        %v794 = vld [vmem:[%s790] sm:$0xf]
        %v795 = vld [vmem:[%s791] sm:$0xf]
        %v796 = vmul.f32 %v785, %v792
        %v797 = vmul.f32 %v787, %v794
        %v798 = vsub.f32 %v796, %v797
        %v799 = vmul.f32 %v785, %v793
        %v800 = vmul.f32 %v787, %v795
        %v801 = vsub.f32 %v799, %v800
        %v802 = vmul.f32 %v787, %v792
        %v803 = vmul.f32 %v785, %v794
        %v804 = vadd.f32 %v802, %v803
        %v805 = vmul.f32 %v787, %v793
        %v806 = vmul.f32 %v785, %v795
        %v807 = vadd.f32 %v805, %v806
        %808 = vst [vmem:[%s788] sm:$0xf] %v798
        %809 = vst [vmem:[%s789] sm:$0xf] %v801
        %810 = vst [vmem:[%s790] sm:$0xf] %v804
        %811 = vst [vmem:[%s791] sm:$0xf] %v807
        %s812 = smov [#allocation12]
        %s813 = smov [#allocation16]
        %v814 = vld [vmem:[%s812] ss:$0 sm:$0xff]
        %s816 = scalar_lea.vmem %s812, 4294967295
        %v817 = vld [vmem:[%s816] sm:$0xe]
        %v818 = vlaneseq
        %v819 = vshrl.u32 %v818, 7
        %vm820 = vcmp.eq.s32.totalorder %v819, 0
        %v821 = vsel %vm820, %v814, %v817
        %s822 = scalar_lea.vmem %s812, 3
        %v823 = vld [vmem:[%s822] ss:$0 sm:$0xff]
        %824 = vst [vmem:[%s812] sm:$0xf] %v821
        %v825 = vld [vmem:[%s813] ss:$0 sm:$0xff]
        %s826 = scalar_lea.vmem %s812, 1
        %827 = vst [vmem:[%s826] sm:$0x1] %v825
        %s828 = scalar_lea.vmem %s813, 1
        %v829 = vld [vmem:[%s828] sm:$0x7]
        %v830 = vlaneseq
        %v831 = vshrl.u32 %v830, 7
        %vm832 = vcmp.eq.s32.totalorder %v831, 3
        %v833 = vsel %vm832, %v823, %v829
        %v834 = vld [vmem:[%s813] ss:$0 sm:$0xff]
        %835 = vst [vmem:[%s813] sm:$0xf] %v833
        %s836 = smov [#allocation14]
        %s837 = smov [#allocation18]
        %v838 = vld [vmem:[%s836] ss:$0 sm:$0xff]
        %s840 = scalar_lea.vmem %s836, 4294967295
        %v841 = vld [vmem:[%s840] sm:$0xe]
        %v842 = vlaneseq
        %v843 = vshrl.u32 %v842, 7
        %vm844 = vcmp.eq.s32.totalorder %v843, 0
        %v845 = vsel %vm844, %v838, %v841
        %s846 = scalar_lea.vmem %s836, 3
        %v847 = vld [vmem:[%s846] ss:$0 sm:$0xff]
        %848 = vst [vmem:[%s836] sm:$0xf] %v845
        %v849 = vld [vmem:[%s837] ss:$0 sm:$0xff]
        %s850 = scalar_lea.vmem %s836, 1
        %851 = vst [vmem:[%s850] sm:$0x1] %v849
        %s852 = scalar_lea.vmem %s837, 1
        %v853 = vld [vmem:[%s852] sm:$0x7]
        %v854 = vlaneseq
        %v855 = vshrl.u32 %v854, 7
        %vm856 = vcmp.eq.s32.totalorder %v855, 3
        %v857 = vsel %vm856, %v847, %v853
        %v858 = vld [vmem:[%s837] ss:$0 sm:$0xff]
        %859 = vst [vmem:[%s837] sm:$0xf] %v857
      $region101: #{custom-call.61} parent=93 // loop_footer
        %s420 = sadd.s32 1, %s416
      $region102: #{custom-call.61} parent=93 // loop_footer_branch
        %415 = sbr.rel target = $region98
      $region103: #{custom-call.61} parent=93 // loop_exit
        _
      %s860 = sadd.s32 %s318, 1
    $region94: #{custom-call.61} parent=1 // loop_footer
      _
    $region95: #{custom-call.61} parent=1 // loop_footer_branch
      %317 = sbr.rel target = $region91
    $region96: #{custom-call.61} parent=1 // loop_exit
      _
    %s863 = smov [#allocation20]
    %s864 = smov [#allocation8]
    %v865 = vlaneseq
    %v866 = vand.u32 %v865, 127
    %v867 = vmov %v866
    %v868 = vlaneseq
    %v869 = vshrl.u32 %v868, 7
    %v870 = vmov %v869
    %v871 = vld [vmem:[%s863] sm:$0xf]
    %vm874 = vcmp.eq.s32.totalorder %v870, %v867
    %v875 = vsel %vm874, %v871, 0.0
    %v876 = vrot.slane %v875, 4
    %v877 = vadd.f32 %v875, %v876
    %v878 = vrot.slane %v877, 2
    %v879 = vadd.f32 %v877, %v878
    %v880 = vrot.slane %v879, 1
    %v881 = vadd.f32 %v879, %v880
    %882 = vst [vmem:[%s864] sm:$0x1] %v881
    %s883 = smov [#allocation23]
    %s884 = smov [#allocation10]
    %v885 = vlaneseq
    %v886 = vand.u32 %v885, 127
    %v887 = vmov %v886
    %v888 = vlaneseq
    %v889 = vshrl.u32 %v888, 7
    %v890 = vmov %v889
    %v891 = vld [vmem:[%s883] sm:$0xf]
    %vm894 = vcmp.eq.s32.totalorder %v890, %v887
    %v895 = vsel %vm894, %v891, 0.0
    %v896 = vrot.slane %v895, 4
    %v897 = vadd.f32 %v895, %v896
    %v898 = vrot.slane %v897, 2
    %v899 = vadd.f32 %v897, %v898
    %v900 = vrot.slane %v899, 1
    %v901 = vadd.f32 %v899, %v900
    %902 = vst [vmem:[%s884] sm:$0x1] %v901
    %s904 = sshllo.u32 0, 1
    %v906 = vld [vmem:[#allocation8] sm:%s904]
    %s907 = sshllo.u32 0, 1
    %908 = vst [vmem:[#allocation9] sm:%s907] %v906
    %s910 = sshllo.u32 0, 1
    %v912 = vld [vmem:[#allocation10] sm:%s910]
    %s913 = sshllo.u32 0, 1
    %914 = vst [vmem:[#allocation11] sm:%s913] %v912
    %s916 = sshllo.u32 0, 4
    %v918 = vld [vmem:[#allocation12] sm:%s916]
    %s919 = sshllo.u32 0, 4
    %920 = vst [vmem:[#allocation13] sm:%s919] %v918
    %s922 = sshllo.u32 0, 4
    %v924 = vld [vmem:[#allocation14] sm:%s922]
    %s925 = sshllo.u32 0, 4
    %926 = vst [vmem:[#allocation15] sm:%s925] %v924
    %s928 = sshllo.u32 0, 4
    %v930 = vld [vmem:[#allocation16] sm:%s928]
    %s931 = sshllo.u32 0, 4
    %932 = vst [vmem:[#allocation17] sm:%s931] %v930
    %s934 = sshllo.u32 0, 4
    %v936 = vld [vmem:[#allocation18] sm:%s934]
    %s937 = sshllo.u32 0, 4
    %938 = vst [vmem:[#allocation19] sm:%s937] %v936
    // Predicated region
    $region104: #{custom-call.61} parent=1 // pred_check
      _
    $region105: #{custom-call.61} parent=1 // pred_check_branch
      %940 = sbr.rel (0) target = $region107
    $region106: #{custom-call.61} parent=1 // pred_region
      %p942 = scmp.gt.s32.totalorder 1, 0
      // Predicated region
      $region108: #{custom-call.61} parent=106 // pred_check
        %p943 = pneg %p942
      $region109: #{custom-call.61} parent=106 // pred_check_branch
        %945 = sbr.rel (%p943) target = $region111
      $region110: #{custom-call.61} parent=106 // pred_region
        %s946 = sshra.s32 1, 3
        %p947 = scmp.gt.s32.totalorder %s946, 0
        // Predicated region
        $region112: #{custom-call.61} parent=110 // pred_check
          %p948 = pneg %p947
        $region113: #{custom-call.61} parent=110 // pred_check_branch
          %950 = sbr.rel (%p948) target = $region115
        $region114: #{custom-call.61} parent=110 // pred_region
          %s951 = ssub.s32 %s946, 1
          %s952 = smul.u32 %s951, 128
          %s953 = sshra.s32 %s952, 4
          %s954 = scalar_lea.vmem [#allocation9], %s953
          %v955 = vld [vmem:[#allocation9] sm:$0xff]
          // While loop
          $region116: #{custom-call.61} parent=114 // loop_pre_header
            _
          $region117: #{custom-call.61} parent=114 // loop_header
            %s956 = sphi [#allocation9], %s978
            %s957 = sphi %s4, %s979
            %v958 = vphi %v955, %v980
            %s959 = ssub.s32 %s954, 64
            %p960 = scmp.gt.s32.totalorder %s956, %s959
          $region118: #{custom-call.61} parent=114 // loop_header_branch
            %962 = sbr.rel (%p960) target = $region122
          $region119: #{custom-call.61} parent=114 // loop_body
            %963 = vst [vmem:[%s957] sm:$0xff] %v958
            %v964 = vld [vmem:[%s956 + $0x8] sm:$0xff]
            %965 = vst [vmem:[%s957 + $0x8] sm:$0xff] %v964
            %v966 = vld [vmem:[%s956 + $0x10] sm:$0xff]
            %967 = vst [vmem:[%s957 + $0x10] sm:$0xff] %v966
            %v968 = vld [vmem:[%s956 + $0x18] sm:$0xff]
            %969 = vst [vmem:[%s957 + $0x18] sm:$0xff] %v968
            %v970 = vld [vmem:[%s956 + $0x20] sm:$0xff]
            %971 = vst [vmem:[%s957 + $0x20] sm:$0xff] %v970
            %v972 = vld [vmem:[%s956 + $0x28] sm:$0xff]
            %973 = vst [vmem:[%s957 + $0x28] sm:$0xff] %v972
            %v974 = vld [vmem:[%s956 + $0x30] sm:$0xff]
            %975 = vst [vmem:[%s957 + $0x30] sm:$0xff] %v974
            %v976 = vld [vmem:[%s956 + $0x38] sm:$0xff]
            %977 = vst [vmem:[%s957 + $0x38] sm:$0xff] %v976
          $region120: #{custom-call.61} parent=114 // loop_footer
            %s978 = scalar_lea.vmem %s956, 64
            %s979 = scalar_lea.vmem %s957, 64
            %v980 = vld [vmem:[%s956 + $0x40] sm:$0xff]
          $region121: #{custom-call.61} parent=114 // loop_footer_branch
            %981 = sbr.rel target = $region117
          $region122: #{custom-call.61} parent=114 // loop_exit
            _
          // While loop
          $region123: #{custom-call.61} parent=114 // loop_pre_header
            _
          $region124: #{custom-call.61} parent=114 // loop_header
            %s982 = sphi %s956, %s990
            %s983 = sphi %s957, %s991
            %v984 = vphi %v958, %v984
            %p985 = scmp.gt.s32.totalorder %s982, %s954
          $region125: #{custom-call.61} parent=114 // loop_header_branch
            %987 = sbr.rel (%p985) target = $region129
          $region126: #{custom-call.61} parent=114 // loop_body
            %v988 = vld [vmem:[%s982] sm:$0xff]
            %989 = vst [vmem:[%s983] sm:$0xff] %v988
          $region127: #{custom-call.61} parent=114 // loop_footer
            %s990 = scalar_lea.vmem %s982, 8
            %s991 = scalar_lea.vmem %s983, 8
          $region128: #{custom-call.61} parent=114 // loop_footer_branch
            %992 = sbr.rel target = $region124
          $region129: #{custom-call.61} parent=114 // loop_exit
            _
        $region115: #{custom-call.61} parent=110 // pred_fallthru
          _
        %s993 = sand.u32 1, 7
        %s994 = sshllo.u32 0, %s993
        %s995 = smul.u32 %s946, 128
        %s996 = sshra.s32 %s995, 4
        %s997 = scalar_lea.vmem %s4, %s996
        %s998 = smul.u32 %s946, 128
        %s999 = sshra.s32 %s998, 4
        %s1000 = scalar_lea.vmem [#allocation9], %s999
        %v1001 = vld [vmem:[%s1000] sm:%s994]
        %1002 = vst [vmem:[%s997] sm:%s994] %v1001
      $region111: #{custom-call.61} parent=106 // pred_fallthru
        _
    $region107: #{custom-call.61} parent=1 // pred_fallthru
      _
    // Predicated region
    $region130: #{custom-call.61} parent=1 // pred_check
      _
    $region131: #{custom-call.61} parent=1 // pred_check_branch
      %1004 = sbr.rel (0) target = $region133
    $region132: #{custom-call.61} parent=1 // pred_region
      %p1006 = scmp.gt.s32.totalorder 1, 0
      // Predicated region
      $region134: #{custom-call.61} parent=132 // pred_check
        %p1007 = pneg %p1006
      $region135: #{custom-call.61} parent=132 // pred_check_branch
        %1009 = sbr.rel (%p1007) target = $region137
      $region136: #{custom-call.61} parent=132 // pred_region
        %s1010 = sshra.s32 1, 3
        %p1011 = scmp.gt.s32.totalorder %s1010, 0
        // Predicated region
        $region138: #{custom-call.61} parent=136 // pred_check
          %p1012 = pneg %p1011
        $region139: #{custom-call.61} parent=136 // pred_check_branch
          %1014 = sbr.rel (%p1012) target = $region141
        $region140: #{custom-call.61} parent=136 // pred_region
          %s1015 = ssub.s32 %s1010, 1
          %s1016 = smul.u32 %s1015, 128
          %s1017 = sshra.s32 %s1016, 4
          %s1018 = scalar_lea.vmem [#allocation11], %s1017
          %v1019 = vld [vmem:[#allocation11] sm:$0xff]
          // While loop
          $region142: #{custom-call.61} parent=140 // loop_pre_header
            _
          $region143: #{custom-call.61} parent=140 // loop_header
            %s1020 = sphi [#allocation11], %s1042
            %s1021 = sphi %s5, %s1043
            %v1022 = vphi %v1019, %v1044
            %s1023 = ssub.s32 %s1018, 64
            %p1024 = scmp.gt.s32.totalorder %s1020, %s1023
          $region144: #{custom-call.61} parent=140 // loop_header_branch
            %1026 = sbr.rel (%p1024) target = $region148
          $region145: #{custom-call.61} parent=140 // loop_body
            %1027 = vst [vmem:[%s1021] sm:$0xff] %v1022
            %v1028 = vld [vmem:[%s1020 + $0x8] sm:$0xff]
            %1029 = vst [vmem:[%s1021 + $0x8] sm:$0xff] %v1028
            %v1030 = vld [vmem:[%s1020 + $0x10] sm:$0xff]
            %1031 = vst [vmem:[%s1021 + $0x10] sm:$0xff] %v1030
            %v1032 = vld [vmem:[%s1020 + $0x18] sm:$0xff]
            %1033 = vst [vmem:[%s1021 + $0x18] sm:$0xff] %v1032
            %v1034 = vld [vmem:[%s1020 + $0x20] sm:$0xff]
            %1035 = vst [vmem:[%s1021 + $0x20] sm:$0xff] %v1034
            %v1036 = vld [vmem:[%s1020 + $0x28] sm:$0xff]
            %1037 = vst [vmem:[%s1021 + $0x28] sm:$0xff] %v1036
            %v1038 = vld [vmem:[%s1020 + $0x30] sm:$0xff]
            %1039 = vst [vmem:[%s1021 + $0x30] sm:$0xff] %v1038
            %v1040 = vld [vmem:[%s1020 + $0x38] sm:$0xff]
            %1041 = vst [vmem:[%s1021 + $0x38] sm:$0xff] %v1040
          $region146: #{custom-call.61} parent=140 // loop_footer
            %s1042 = scalar_lea.vmem %s1020, 64
            %s1043 = scalar_lea.vmem %s1021, 64
            %v1044 = vld [vmem:[%s1020 + $0x40] sm:$0xff]
          $region147: #{custom-call.61} parent=140 // loop_footer_branch
            %1045 = sbr.rel target = $region143
          $region148: #{custom-call.61} parent=140 // loop_exit
            _
          // While loop
          $region149: #{custom-call.61} parent=140 // loop_pre_header
            _
          $region150: #{custom-call.61} parent=140 // loop_header
            %s1046 = sphi %s1020, %s1054
            %s1047 = sphi %s1021, %s1055
            %v1048 = vphi %v1022, %v1048
            %p1049 = scmp.gt.s32.totalorder %s1046, %s1018
          $region151: #{custom-call.61} parent=140 // loop_header_branch
            %1051 = sbr.rel (%p1049) target = $region155
          $region152: #{custom-call.61} parent=140 // loop_body
            %v1052 = vld [vmem:[%s1046] sm:$0xff]
            %1053 = vst [vmem:[%s1047] sm:$0xff] %v1052
          $region153: #{custom-call.61} parent=140 // loop_footer
            %s1054 = scalar_lea.vmem %s1046, 8
            %s1055 = scalar_lea.vmem %s1047, 8
          $region154: #{custom-call.61} parent=140 // loop_footer_branch
            %1056 = sbr.rel target = $region150
          $region155: #{custom-call.61} parent=140 // loop_exit
            _
        $region141: #{custom-call.61} parent=136 // pred_fallthru
          _
        %s1057 = sand.u32 1, 7
        %s1058 = sshllo.u32 0, %s1057
        %s1059 = smul.u32 %s1010, 128
        %s1060 = sshra.s32 %s1059, 4
        %s1061 = scalar_lea.vmem %s5, %s1060
        %s1062 = smul.u32 %s1010, 128
        %s1063 = sshra.s32 %s1062, 4
        %s1064 = scalar_lea.vmem [#allocation11], %s1063
        %v1065 = vld [vmem:[%s1064] sm:%s1058]
        %1066 = vst [vmem:[%s1061] sm:%s1058] %v1065
      $region137: #{custom-call.61} parent=132 // pred_fallthru
        _
    $region133: #{custom-call.61} parent=1 // pred_fallthru
      _
    %p1068 = scmp.gt.s32.totalorder 4, 0
    // Predicated region
    $region156: #{custom-call.61} parent=1 // pred_check
      %p1069 = pneg %p1068
    $region157: #{custom-call.61} parent=1 // pred_check_branch
      %1071 = sbr.rel (%p1069) target = $region159
    $region158: #{custom-call.61} parent=1 // pred_region
      %s1072 = sshra.s32 4, 3
      %p1073 = scmp.gt.s32.totalorder %s1072, 0
      // Predicated region
      $region160: #{custom-call.61} parent=158 // pred_check
        %p1074 = pneg %p1073
      $region161: #{custom-call.61} parent=158 // pred_check_branch
        %1076 = sbr.rel (%p1074) target = $region163
      $region162: #{custom-call.61} parent=158 // pred_region
        %s1077 = ssub.s32 %s1072, 1
        %s1078 = smul.u32 %s1077, 128
        %s1079 = sshra.s32 %s1078, 4
        %s1080 = scalar_lea.vmem [#allocation13], %s1079
        %v1081 = vld [vmem:[#allocation13] sm:$0xff]
        // While loop
        $region164: #{custom-call.61} parent=162 // loop_pre_header
          _
        $region165: #{custom-call.61} parent=162 // loop_header
          %s1082 = sphi [#allocation13], %s1104
          %s1083 = sphi %s6, %s1105
          %v1084 = vphi %v1081, %v1106
          %s1085 = ssub.s32 %s1080, 64
          %p1086 = scmp.gt.s32.totalorder %s1082, %s1085
        $region166: #{custom-call.61} parent=162 // loop_header_branch
          %1088 = sbr.rel (%p1086) target = $region170
        $region167: #{custom-call.61} parent=162 // loop_body
          %1089 = vst [vmem:[%s1083] sm:$0xff] %v1084
          %v1090 = vld [vmem:[%s1082 + $0x8] sm:$0xff]
          %1091 = vst [vmem:[%s1083 + $0x8] sm:$0xff] %v1090
          %v1092 = vld [vmem:[%s1082 + $0x10] sm:$0xff]
          %1093 = vst [vmem:[%s1083 + $0x10] sm:$0xff] %v1092
          %v1094 = vld [vmem:[%s1082 + $0x18] sm:$0xff]
          %1095 = vst [vmem:[%s1083 + $0x18] sm:$0xff] %v1094
          %v1096 = vld [vmem:[%s1082 + $0x20] sm:$0xff]
          %1097 = vst [vmem:[%s1083 + $0x20] sm:$0xff] %v1096
          %v1098 = vld [vmem:[%s1082 + $0x28] sm:$0xff]
          %1099 = vst [vmem:[%s1083 + $0x28] sm:$0xff] %v1098
          %v1100 = vld [vmem:[%s1082 + $0x30] sm:$0xff]
          %1101 = vst [vmem:[%s1083 + $0x30] sm:$0xff] %v1100
          %v1102 = vld [vmem:[%s1082 + $0x38] sm:$0xff]
          %1103 = vst [vmem:[%s1083 + $0x38] sm:$0xff] %v1102
        $region168: #{custom-call.61} parent=162 // loop_footer
          %s1104 = scalar_lea.vmem %s1082, 64
          %s1105 = scalar_lea.vmem %s1083, 64
          %v1106 = vld [vmem:[%s1082 + $0x40] sm:$0xff]
        $region169: #{custom-call.61} parent=162 // loop_footer_branch
          %1107 = sbr.rel target = $region165
        $region170: #{custom-call.61} parent=162 // loop_exit
          _
        // While loop
        $region171: #{custom-call.61} parent=162 // loop_pre_header
          _
        $region172: #{custom-call.61} parent=162 // loop_header
          %s1108 = sphi %s1082, %s1116
          %s1109 = sphi %s1083, %s1117
          %v1110 = vphi %v1084, %v1110
          %p1111 = scmp.gt.s32.totalorder %s1108, %s1080
        $region173: #{custom-call.61} parent=162 // loop_header_branch
          %1113 = sbr.rel (%p1111) target = $region177
        $region174: #{custom-call.61} parent=162 // loop_body
          %v1114 = vld [vmem:[%s1108] sm:$0xff]
          %1115 = vst [vmem:[%s1109] sm:$0xff] %v1114
        $region175: #{custom-call.61} parent=162 // loop_footer
          %s1116 = scalar_lea.vmem %s1108, 8
          %s1117 = scalar_lea.vmem %s1109, 8
        $region176: #{custom-call.61} parent=162 // loop_footer_branch
          %1118 = sbr.rel target = $region172
        $region177: #{custom-call.61} parent=162 // loop_exit
          _
      $region163: #{custom-call.61} parent=158 // pred_fallthru
        _
      %s1119 = sand.u32 4, 7
      %s1120 = sshllo.u32 0, %s1119
      %s1121 = smul.u32 %s1072, 128
      %s1122 = sshra.s32 %s1121, 4
      %s1123 = scalar_lea.vmem %s6, %s1122
      %s1124 = smul.u32 %s1072, 128
      %s1125 = sshra.s32 %s1124, 4
      %s1126 = scalar_lea.vmem [#allocation13], %s1125
      %v1127 = vld [vmem:[%s1126] sm:%s1120]
      %1128 = vst [vmem:[%s1123] sm:%s1120] %v1127
    $region159: #{custom-call.61} parent=1 // pred_fallthru
      _
    %p1130 = scmp.gt.s32.totalorder 4, 0
    // Predicated region
    $region178: #{custom-call.61} parent=1 // pred_check
      %p1131 = pneg %p1130
    $region179: #{custom-call.61} parent=1 // pred_check_branch
      %1133 = sbr.rel (%p1131) target = $region181
    $region180: #{custom-call.61} parent=1 // pred_region
      %s1134 = sshra.s32 4, 3
      %p1135 = scmp.gt.s32.totalorder %s1134, 0
      // Predicated region
      $region182: #{custom-call.61} parent=180 // pred_check
        %p1136 = pneg %p1135
      $region183: #{custom-call.61} parent=180 // pred_check_branch
        %1138 = sbr.rel (%p1136) target = $region185
      $region184: #{custom-call.61} parent=180 // pred_region
        %s1139 = ssub.s32 %s1134, 1
        %s1140 = smul.u32 %s1139, 128
        %s1141 = sshra.s32 %s1140, 4
        %s1142 = scalar_lea.vmem [#allocation15], %s1141
        %v1143 = vld [vmem:[#allocation15] sm:$0xff]
        // While loop
        $region186: #{custom-call.61} parent=184 // loop_pre_header
          _
        $region187: #{custom-call.61} parent=184 // loop_header
          %s1144 = sphi [#allocation15], %s1166
          %s1145 = sphi %s7, %s1167
          %v1146 = vphi %v1143, %v1168
          %s1147 = ssub.s32 %s1142, 64
          %p1148 = scmp.gt.s32.totalorder %s1144, %s1147
        $region188: #{custom-call.61} parent=184 // loop_header_branch
          %1150 = sbr.rel (%p1148) target = $region192
        $region189: #{custom-call.61} parent=184 // loop_body
          %1151 = vst [vmem:[%s1145] sm:$0xff] %v1146
          %v1152 = vld [vmem:[%s1144 + $0x8] sm:$0xff]
          %1153 = vst [vmem:[%s1145 + $0x8] sm:$0xff] %v1152
          %v1154 = vld [vmem:[%s1144 + $0x10] sm:$0xff]
          %1155 = vst [vmem:[%s1145 + $0x10] sm:$0xff] %v1154
          %v1156 = vld [vmem:[%s1144 + $0x18] sm:$0xff]
          %1157 = vst [vmem:[%s1145 + $0x18] sm:$0xff] %v1156
          %v1158 = vld [vmem:[%s1144 + $0x20] sm:$0xff]
          %1159 = vst [vmem:[%s1145 + $0x20] sm:$0xff] %v1158
          %v1160 = vld [vmem:[%s1144 + $0x28] sm:$0xff]
          %1161 = vst [vmem:[%s1145 + $0x28] sm:$0xff] %v1160
          %v1162 = vld [vmem:[%s1144 + $0x30] sm:$0xff]
          %1163 = vst [vmem:[%s1145 + $0x30] sm:$0xff] %v1162
          %v1164 = vld [vmem:[%s1144 + $0x38] sm:$0xff]
          %1165 = vst [vmem:[%s1145 + $0x38] sm:$0xff] %v1164
        $region190: #{custom-call.61} parent=184 // loop_footer
          %s1166 = scalar_lea.vmem %s1144, 64
          %s1167 = scalar_lea.vmem %s1145, 64
          %v1168 = vld [vmem:[%s1144 + $0x40] sm:$0xff]
        $region191: #{custom-call.61} parent=184 // loop_footer_branch
          %1169 = sbr.rel target = $region187
        $region192: #{custom-call.61} parent=184 // loop_exit
          _
        // While loop
        $region193: #{custom-call.61} parent=184 // loop_pre_header
          _
        $region194: #{custom-call.61} parent=184 // loop_header
          %s1170 = sphi %s1144, %s1178
          %s1171 = sphi %s1145, %s1179
          %v1172 = vphi %v1146, %v1172
          %p1173 = scmp.gt.s32.totalorder %s1170, %s1142
        $region195: #{custom-call.61} parent=184 // loop_header_branch
          %1175 = sbr.rel (%p1173) target = $region199
        $region196: #{custom-call.61} parent=184 // loop_body
          %v1176 = vld [vmem:[%s1170] sm:$0xff]
          %1177 = vst [vmem:[%s1171] sm:$0xff] %v1176
        $region197: #{custom-call.61} parent=184 // loop_footer
          %s1178 = scalar_lea.vmem %s1170, 8
          %s1179 = scalar_lea.vmem %s1171, 8
        $region198: #{custom-call.61} parent=184 // loop_footer_branch
          %1180 = sbr.rel target = $region194
        $region199: #{custom-call.61} parent=184 // loop_exit
          _
      $region185: #{custom-call.61} parent=180 // pred_fallthru
        _
      %s1181 = sand.u32 4, 7
      %s1182 = sshllo.u32 0, %s1181
      %s1183 = smul.u32 %s1134, 128
      %s1184 = sshra.s32 %s1183, 4
      %s1185 = scalar_lea.vmem %s7, %s1184
      %s1186 = smul.u32 %s1134, 128
      %s1187 = sshra.s32 %s1186, 4
      %s1188 = scalar_lea.vmem [#allocation15], %s1187
      %v1189 = vld [vmem:[%s1188] sm:%s1182]
      %1190 = vst [vmem:[%s1185] sm:%s1182] %v1189
    $region181: #{custom-call.61} parent=1 // pred_fallthru
      _
    %p1192 = scmp.gt.s32.totalorder 4, 0
    // Predicated region
    $region200: #{custom-call.61} parent=1 // pred_check
      %p1193 = pneg %p1192
    $region201: #{custom-call.61} parent=1 // pred_check_branch
      %1195 = sbr.rel (%p1193) target = $region203
    $region202: #{custom-call.61} parent=1 // pred_region
      %s1196 = sshra.s32 4, 3
      %p1197 = scmp.gt.s32.totalorder %s1196, 0
      // Predicated region
      $region204: #{custom-call.61} parent=202 // pred_check
        %p1198 = pneg %p1197
      $region205: #{custom-call.61} parent=202 // pred_check_branch
        %1200 = sbr.rel (%p1198) target = $region207
      $region206: #{custom-call.61} parent=202 // pred_region
        %s1201 = ssub.s32 %s1196, 1
        %s1202 = smul.u32 %s1201, 128
        %s1203 = sshra.s32 %s1202, 4
        %s1204 = scalar_lea.vmem [#allocation17], %s1203
        %v1205 = vld [vmem:[#allocation17] sm:$0xff]
        // While loop
        $region208: #{custom-call.61} parent=206 // loop_pre_header
          _
        $region209: #{custom-call.61} parent=206 // loop_header
          %s1206 = sphi [#allocation17], %s1228
          %s1207 = sphi %s8, %s1229
          %v1208 = vphi %v1205, %v1230
          %s1209 = ssub.s32 %s1204, 64
          %p1210 = scmp.gt.s32.totalorder %s1206, %s1209
        $region210: #{custom-call.61} parent=206 // loop_header_branch
          %1212 = sbr.rel (%p1210) target = $region214
        $region211: #{custom-call.61} parent=206 // loop_body
          %1213 = vst [vmem:[%s1207] sm:$0xff] %v1208
          %v1214 = vld [vmem:[%s1206 + $0x8] sm:$0xff]
          %1215 = vst [vmem:[%s1207 + $0x8] sm:$0xff] %v1214
          %v1216 = vld [vmem:[%s1206 + $0x10] sm:$0xff]
          %1217 = vst [vmem:[%s1207 + $0x10] sm:$0xff] %v1216
          %v1218 = vld [vmem:[%s1206 + $0x18] sm:$0xff]
          %1219 = vst [vmem:[%s1207 + $0x18] sm:$0xff] %v1218
          %v1220 = vld [vmem:[%s1206 + $0x20] sm:$0xff]
          %1221 = vst [vmem:[%s1207 + $0x20] sm:$0xff] %v1220
          %v1222 = vld [vmem:[%s1206 + $0x28] sm:$0xff]
          %1223 = vst [vmem:[%s1207 + $0x28] sm:$0xff] %v1222
          %v1224 = vld [vmem:[%s1206 + $0x30] sm:$0xff]
          %1225 = vst [vmem:[%s1207 + $0x30] sm:$0xff] %v1224
          %v1226 = vld [vmem:[%s1206 + $0x38] sm:$0xff]
          %1227 = vst [vmem:[%s1207 + $0x38] sm:$0xff] %v1226
        $region212: #{custom-call.61} parent=206 // loop_footer
          %s1228 = scalar_lea.vmem %s1206, 64
          %s1229 = scalar_lea.vmem %s1207, 64
          %v1230 = vld [vmem:[%s1206 + $0x40] sm:$0xff]
        $region213: #{custom-call.61} parent=206 // loop_footer_branch
          %1231 = sbr.rel target = $region209
        $region214: #{custom-call.61} parent=206 // loop_exit
          _
        // While loop
        $region215: #{custom-call.61} parent=206 // loop_pre_header
          _
        $region216: #{custom-call.61} parent=206 // loop_header
          %s1232 = sphi %s1206, %s1240
          %s1233 = sphi %s1207, %s1241
          %v1234 = vphi %v1208, %v1234
          %p1235 = scmp.gt.s32.totalorder %s1232, %s1204
        $region217: #{custom-call.61} parent=206 // loop_header_branch
          %1237 = sbr.rel (%p1235) target = $region221
        $region218: #{custom-call.61} parent=206 // loop_body
          %v1238 = vld [vmem:[%s1232] sm:$0xff]
          %1239 = vst [vmem:[%s1233] sm:$0xff] %v1238
        $region219: #{custom-call.61} parent=206 // loop_footer
          %s1240 = scalar_lea.vmem %s1232, 8
          %s1241 = scalar_lea.vmem %s1233, 8
        $region220: #{custom-call.61} parent=206 // loop_footer_branch
          %1242 = sbr.rel target = $region216
        $region221: #{custom-call.61} parent=206 // loop_exit
          _
      $region207: #{custom-call.61} parent=202 // pred_fallthru
        _
      %s1243 = sand.u32 4, 7
      %s1244 = sshllo.u32 0, %s1243
      %s1245 = smul.u32 %s1196, 128
      %s1246 = sshra.s32 %s1245, 4
      %s1247 = scalar_lea.vmem %s8, %s1246
      %s1248 = smul.u32 %s1196, 128
      %s1249 = sshra.s32 %s1248, 4
      %s1250 = scalar_lea.vmem [#allocation17], %s1249
      %v1251 = vld [vmem:[%s1250] sm:%s1244]
      %1252 = vst [vmem:[%s1247] sm:%s1244] %v1251
    $region203: #{custom-call.61} parent=1 // pred_fallthru
      _
    %p1254 = scmp.gt.s32.totalorder 4, 0
    // Predicated region
    $region222: #{custom-call.61} parent=1 // pred_check
      %p1255 = pneg %p1254
    $region223: #{custom-call.61} parent=1 // pred_check_branch
      %1257 = sbr.rel (%p1255) target = $region225
    $region224: #{custom-call.61} parent=1 // pred_region
      %s1258 = sshra.s32 4, 3
      %p1259 = scmp.gt.s32.totalorder %s1258, 0
      // Predicated region
      $region226: #{custom-call.61} parent=224 // pred_check
        %p1260 = pneg %p1259
      $region227: #{custom-call.61} parent=224 // pred_check_branch
        %1262 = sbr.rel (%p1260) target = $region229
      $region228: #{custom-call.61} parent=224 // pred_region
        %s1263 = ssub.s32 %s1258, 1
        %s1264 = smul.u32 %s1263, 128
        %s1265 = sshra.s32 %s1264, 4
        %s1266 = scalar_lea.vmem [#allocation19], %s1265
        %v1267 = vld [vmem:[#allocation19] sm:$0xff]
        // While loop
        $region230: #{custom-call.61} parent=228 // loop_pre_header
          _
        $region231: #{custom-call.61} parent=228 // loop_header
          %s1268 = sphi [#allocation19], %s1290
          %s1269 = sphi %s9, %s1291
          %v1270 = vphi %v1267, %v1292
          %s1271 = ssub.s32 %s1266, 64
          %p1272 = scmp.gt.s32.totalorder %s1268, %s1271
        $region232: #{custom-call.61} parent=228 // loop_header_branch
          %1274 = sbr.rel (%p1272) target = $region236
        $region233: #{custom-call.61} parent=228 // loop_body
          %1275 = vst [vmem:[%s1269] sm:$0xff] %v1270
          %v1276 = vld [vmem:[%s1268 + $0x8] sm:$0xff]
          %1277 = vst [vmem:[%s1269 + $0x8] sm:$0xff] %v1276
          %v1278 = vld [vmem:[%s1268 + $0x10] sm:$0xff]
          %1279 = vst [vmem:[%s1269 + $0x10] sm:$0xff] %v1278
          %v1280 = vld [vmem:[%s1268 + $0x18] sm:$0xff]
          %1281 = vst [vmem:[%s1269 + $0x18] sm:$0xff] %v1280
          %v1282 = vld [vmem:[%s1268 + $0x20] sm:$0xff]
          %1283 = vst [vmem:[%s1269 + $0x20] sm:$0xff] %v1282
          %v1284 = vld [vmem:[%s1268 + $0x28] sm:$0xff]
          %1285 = vst [vmem:[%s1269 + $0x28] sm:$0xff] %v1284
          %v1286 = vld [vmem:[%s1268 + $0x30] sm:$0xff]
          %1287 = vst [vmem:[%s1269 + $0x30] sm:$0xff] %v1286
          %v1288 = vld [vmem:[%s1268 + $0x38] sm:$0xff]
          %1289 = vst [vmem:[%s1269 + $0x38] sm:$0xff] %v1288
        $region234: #{custom-call.61} parent=228 // loop_footer
          %s1290 = scalar_lea.vmem %s1268, 64
          %s1291 = scalar_lea.vmem %s1269, 64
          %v1292 = vld [vmem:[%s1268 + $0x40] sm:$0xff]
        $region235: #{custom-call.61} parent=228 // loop_footer_branch
          %1293 = sbr.rel target = $region231
        $region236: #{custom-call.61} parent=228 // loop_exit
          _
        // While loop
        $region237: #{custom-call.61} parent=228 // loop_pre_header
          _
        $region238: #{custom-call.61} parent=228 // loop_header
          %s1294 = sphi %s1268, %s1302
          %s1295 = sphi %s1269, %s1303
          %v1296 = vphi %v1270, %v1296
          %p1297 = scmp.gt.s32.totalorder %s1294, %s1266
        $region239: #{custom-call.61} parent=228 // loop_header_branch
          %1299 = sbr.rel (%p1297) target = $region243
        $region240: #{custom-call.61} parent=228 // loop_body
          %v1300 = vld [vmem:[%s1294] sm:$0xff]
          %1301 = vst [vmem:[%s1295] sm:$0xff] %v1300
        $region241: #{custom-call.61} parent=228 // loop_footer
          %s1302 = scalar_lea.vmem %s1294, 8
          %s1303 = scalar_lea.vmem %s1295, 8
        $region242: #{custom-call.61} parent=228 // loop_footer_branch
          %1304 = sbr.rel target = $region238
        $region243: #{custom-call.61} parent=228 // loop_exit
          _
      $region229: #{custom-call.61} parent=224 // pred_fallthru
        _
      %s1305 = sand.u32 4, 7
      %s1306 = sshllo.u32 0, %s1305
      %s1307 = smul.u32 %s1258, 128
      %s1308 = sshra.s32 %s1307, 4
      %s1309 = scalar_lea.vmem %s9, %s1308
      %s1310 = smul.u32 %s1258, 128
      %s1311 = sshra.s32 %s1310, 4
      %s1312 = scalar_lea.vmem [#allocation19], %s1311
      %v1313 = vld [vmem:[%s1312] sm:%s1306]
      %1314 = vst [vmem:[%s1309] sm:%s1306] %v1313
    $region225: #{custom-call.61} parent=1 // pred_fallthru
      _
    // Predicated region
    $region244: #{custom-call.61} parent=1 // pred_check
      _
    $region245: #{custom-call.61} parent=1 // pred_check_branch
      %1316 = sbr.rel (0) target = $region247
    $region246: #{custom-call.61} parent=1 // pred_region
      _
    $region247: #{custom-call.61} parent=1 // pred_fallthru
      _
    // Predicated region
    $region248: #{custom-call.61} parent=1 // pred_check
      _
    $region249: #{custom-call.61} parent=1 // pred_check_branch
      %1318 = sbr.rel (0) target = $region251
    $region250: #{custom-call.61} parent=1 // pred_region
      _
    $region251: #{custom-call.61} parent=1 // pred_fallthru
      _

// kernel: reverse.8
$region0: #{reverse.8}
  %s0 = inlined_call_operand.vmem [shape: f32[8], index: 0, kind: input, shape index: {}]
  %s1 = inlined_call_operand.vmem [shape: f32[8], index: 1, kind: output, shape index: {}]
  %v2 = vlaneseq
  %v3 = vsub.s32 7, %v2
  %4 = vset.pattern.permute.xlu0 %v3
  $region1: #{reverse.8} parent=0
    #allocation0 [shape = 'u8[8192]{0}', space=vmem, size = 0x2000, scoped, tag = 'operand span for operand 0']
    #allocation1 [shape = 'u8[1024]{0}', space=vmem, size = 0x400, scoped, tag = 'packed  for operand 0']
    #allocation2 [shape = 'u8[4096]{0}', space=vmem, size = 0x1000, scoped, tag = 'operand span for operand 1']
    #allocation3 [shape = 'u8[512]{0}', space=vmem, size = 0x400, scoped, tag = 'packed  for operand 1']
    %s5 = scalar_lea.vmem [#allocation1], 1
    // Predicated region
    $region2: #{reverse.8} parent=1 // pred_check
      _
    $region3: #{reverse.8} parent=1 // pred_check_branch
      %7 = sbr.rel (0) target = $region5
    $region4: #{reverse.8} parent=1 // pred_region
      // Predicated region
      $region6: #{reverse.8} parent=4 // pred_check
        _
      $region7: #{reverse.8} parent=4 // pred_check_branch
        %9 = sbr.rel target = $region9
      $region8: #{reverse.8} parent=4 // pred_region
        // Predicated region
        $region21: #{reverse.8} parent=8 // pred_check
          _
        $region22: #{reverse.8} parent=8 // pred_check_branch
          %24 = sbr.rel (0) target = $region24
        $region23: #{reverse.8} parent=8 // pred_region
          loop: start=0, step=1, limit=1
          $region25: #{reverse.8} parent=23 // loop_pre_header
            _
          $region26: #{reverse.8} parent=23 // loop_header
            %s27 = sphi 0, %s31
            %p28 = scmp.ge.s32.totalorder %s27, 1
            %s32 = sphi %s0, %s0
            %s33 = sphi %s5, %s5
          $region27: #{reverse.8} parent=23 // loop_header_branch
            %30 = sbr.rel (%p28) target = $region31
          $region28: #{reverse.8} parent=23 // loop_body
            %v34 = vld [vmem:[%s32] sm:$0x1]
            %35 = vst [vmem:[%s33] sm:$0x1] %v34
          $region29: #{reverse.8} parent=23 // loop_footer
            %s31 = sadd.s32 1, %s27
          $region30: #{reverse.8} parent=23 // loop_footer_branch
            %26 = sbr.rel target = $region26
          $region31: #{reverse.8} parent=23 // loop_exit
            _
        $region24: #{reverse.8} parent=8 // pred_fallthru
          _
      $region9: #{reverse.8} parent=4 // pred_fallthru
        _
      // Predicated region
      $region10: #{reverse.8} parent=4 // pred_check
        _
      $region11: #{reverse.8} parent=4 // pred_check_branch
        %11 = sbr.rel (0) target = $region13
      $region12: #{reverse.8} parent=4 // pred_region
        loop: start=0, step=1, limit=1
        $region14: #{reverse.8} parent=12 // loop_pre_header
          _
        $region15: #{reverse.8} parent=12 // loop_header
          %s14 = sphi 0, %s18
          %p15 = scmp.ge.s32.totalorder %s14, 1
          %s19 = sphi %s0, %s0
          %s20 = sphi %s5, %s5
        $region16: #{reverse.8} parent=12 // loop_header_branch
          %17 = sbr.rel (%p15) target = $region20
        $region17: #{reverse.8} parent=12 // loop_body
          %v21 = vld [vmem:[%s19] sm:$0x1]
          %22 = vst [vmem:[%s20] sm:$0x1] %v21
        $region18: #{reverse.8} parent=12 // loop_footer
          %s18 = sadd.s32 1, %s14
        $region19: #{reverse.8} parent=12 // loop_footer_branch
          %13 = sbr.rel target = $region15
        $region20: #{reverse.8} parent=12 // loop_exit
          _
      $region13: #{reverse.8} parent=4 // pred_fallthru
        _
    $region5: #{reverse.8} parent=1 // pred_fallthru
      _
    %36 = vnop
    %s38 = sshllo.u32 0, 1
    %s39 = scalar_lea.vmem [#allocation1], 1
    %v40 = vld [vmem:[%s39] sm:%s38]
    %s41 = scalar_lea.vmem [#allocation0], 8
    %42 = vst [vmem:[%s41] sm:%s38] %v40
    %v43 = vld [vmem:[#allocation1] sm:%s38]
    %44 = vst [vmem:[#allocation0] sm:%s38] %v43
    %s45 = scalar_lea.vmem [#allocation0], 7
    %v46 = vld [vmem:[%s45] ss:$-1 sm:$0xff]
    %v47 = vrot.slane %v46, 7
    %48 = vperm.xlu0 %4, %v47
    %v49 = vpop.permute.xlu0 %48
    %50 = vst [vmem:[#allocation2] sm:$0xff] %v49
    %s51 = scalar_lea.vmem [#allocation0], 8
    %s52 = scalar_lea.vmem %s51, 7 [#allocation0]
    %v53 = vld [vmem:[%s52] ss:$-1 sm:$0xff]
    %v54 = vrot.slane %v53, 7
    %55 = vperm.xlu0 %4, %v54
    %v56 = vpop.permute.xlu0 %55
    %v57 = vlaneseq
    %v58 = vshrl.u32 %v57, 7
    %vm59 = vcmp.lt.s32.totalorder %v58, 1
    %60 = vst.msk [vmem:[#allocation2] sm:$0xff] %vm59, %v56
    %s62 = sshllo.u32 0, 1
    %v64 = vld [vmem:[#allocation2] sm:%s62]
    %s65 = sshllo.u32 0, 1
    %66 = vst [vmem:[#allocation3] sm:%s65] %v64
    // Predicated region
    $region32: #{reverse.8} parent=1 // pred_check
      _
    $region33: #{reverse.8} parent=1 // pred_check_branch
      %68 = sbr.rel (0) target = $region35
    $region34: #{reverse.8} parent=1 // pred_region
      // Predicated region
      $region36: #{reverse.8} parent=34 // pred_check
        _
      $region37: #{reverse.8} parent=34 // pred_check_branch
        %70 = sbr.rel target = $region39
      $region38: #{reverse.8} parent=34 // pred_region
        // Predicated region
        $region51: #{reverse.8} parent=38 // pred_check
          _
        $region52: #{reverse.8} parent=38 // pred_check_branch
          %85 = sbr.rel (0) target = $region54
        $region53: #{reverse.8} parent=38 // pred_region
          loop: start=0, step=1, limit=1
          $region55: #{reverse.8} parent=53 // loop_pre_header
            _
          $region56: #{reverse.8} parent=53 // loop_header
            %s88 = sphi 0, %s92
            %p89 = scmp.ge.s32.totalorder %s88, 1
            %s93 = sphi [#allocation3], [#allocation3]
            %s94 = sphi %s1, %s1
          $region57: #{reverse.8} parent=53 // loop_header_branch
            %91 = sbr.rel (%p89) target = $region61
          $region58: #{reverse.8} parent=53 // loop_body
            %v95 = vld [vmem:[%s93] sm:$0x1]
            %96 = vst [vmem:[%s94] sm:$0x1] %v95
          $region59: #{reverse.8} parent=53 // loop_footer
            %s92 = sadd.s32 1, %s88
          $region60: #{reverse.8} parent=53 // loop_footer_branch
            %87 = sbr.rel target = $region56
          $region61: #{reverse.8} parent=53 // loop_exit
            _
        $region54: #{reverse.8} parent=38 // pred_fallthru
          _
      $region39: #{reverse.8} parent=34 // pred_fallthru
        _
      // Predicated region
      $region40: #{reverse.8} parent=34 // pred_check
        _
      $region41: #{reverse.8} parent=34 // pred_check_branch
        %72 = sbr.rel (0) target = $region43
      $region42: #{reverse.8} parent=34 // pred_region
        loop: start=0, step=1, limit=1
        $region44: #{reverse.8} parent=42 // loop_pre_header
          _
        $region45: #{reverse.8} parent=42 // loop_header
          %s75 = sphi 0, %s79
          %p76 = scmp.ge.s32.totalorder %s75, 1
          %s80 = sphi [#allocation3], [#allocation3]
          %s81 = sphi %s1, %s1
        $region46: #{reverse.8} parent=42 // loop_header_branch
          %78 = sbr.rel (%p76) target = $region50
        $region47: #{reverse.8} parent=42 // loop_body
          %v82 = vld [vmem:[%s80] sm:$0x1]
          %83 = vst [vmem:[%s81] sm:$0x1] %v82
        $region48: #{reverse.8} parent=42 // loop_footer
          %s79 = sadd.s32 1, %s75
        $region49: #{reverse.8} parent=42 // loop_footer_branch
          %74 = sbr.rel target = $region45
        $region50: #{reverse.8} parent=42 // loop_exit
          _
      $region43: #{reverse.8} parent=34 // pred_fallthru
        _
    $region35: #{reverse.8} parent=1 // pred_fallthru
      _
    %97 = vnop

// kernel: custom-call.10
$region0: #{custom-call.10}
  %s0 = inlined_call_operand.vmem [shape: f32[8,8], index: 0, kind: input, shape index: {}]
  %s1 = inlined_call_operand.vmem [shape: f32[8,8], index: 1, kind: output, shape index: {0}]
  %s2 = inlined_call_operand.vmem [shape: f32[8], index: 2, kind: output, shape index: {1}]
  %3 = xla_tuple %s1, %s2
  $region1: #{custom-call.10} parent=0
    #allocation0 [shape = 'u8[4096]{0}', space=vmem, size = 0x1000, scoped, tag = 'operand span for operand 0']
    #allocation1 [shape = 'u8[4096]{0}', space=vmem, size = 0x1000, scoped, tag = 'operand span for operand 1']
    #allocation2 [shape = 'u8[4096]{0}', space=vmem, size = 0x1000, scoped, tag = 'operand span for operand 2']
    #allocation3 [shape = 'u8[512]{0}', space=vmem, size = 0x400, scoped, tag = 'packed  for operand 2']
    #allocation4 [shape = 'f32[8,128]{1,0}', space=vmem, size = 0x1000, scoped, tag = 'scratch for Householder reflectors']
    // Predicated region
    $region2: #{custom-call.10} parent=1 // pred_check
      _
    $region3: #{custom-call.10} parent=1 // pred_check_branch
      %5 = sbr.rel (0) target = $region5
    $region4: #{custom-call.10} parent=1 // pred_region
      // Predicated region
      $region6: #{custom-call.10} parent=4 // pred_check
        _
      $region7: #{custom-call.10} parent=4 // pred_check_branch
        %7 = sbr.rel (0) target = $region9
      $region8: #{custom-call.10} parent=4 // pred_region
        // Predicated region
        $region21: #{custom-call.10} parent=8 // pred_check
          _
        $region22: #{custom-call.10} parent=8 // pred_check_branch
          %22 = sbr.rel (0) target = $region24
        $region23: #{custom-call.10} parent=8 // pred_region
          loop: start=0, step=1, limit=1
          $region25: #{custom-call.10} parent=23 // loop_pre_header
            _
          $region26: #{custom-call.10} parent=23 // loop_header
            %s24 = sphi 0, %s28
            %p25 = scmp.ge.s32.totalorder %s24, 1
            %s29 = sphi %s0, %s0
            %s30 = sphi [#allocation0], [#allocation0]
          $region27: #{custom-call.10} parent=23 // loop_header_branch
            %27 = sbr.rel (%p25) target = $region31
          $region28: #{custom-call.10} parent=23 // loop_body
            %v31 = vld [vmem:[%s29] sm:$0xff]
            %32 = vst [vmem:[%s30] sm:$0xff] %v31
          $region29: #{custom-call.10} parent=23 // loop_footer
            %s28 = sadd.s32 1, %s24
          $region30: #{custom-call.10} parent=23 // loop_footer_branch
            %23 = sbr.rel target = $region26
          $region31: #{custom-call.10} parent=23 // loop_exit
            _
        $region24: #{custom-call.10} parent=8 // pred_fallthru
          _
        // Predicated region
        $region32: #{custom-call.10} parent=8 // pred_check
          _
        $region33: #{custom-call.10} parent=8 // pred_check_branch
          %34 = sbr.rel target = $region35
        $region34: #{custom-call.10} parent=8 // pred_region
          _
        $region35: #{custom-call.10} parent=8 // pred_fallthru
          _
      $region9: #{custom-call.10} parent=4 // pred_fallthru
        _
      // Predicated region
      $region10: #{custom-call.10} parent=4 // pred_check
        _
      $region11: #{custom-call.10} parent=4 // pred_check_branch
        %9 = sbr.rel target = $region13
      $region12: #{custom-call.10} parent=4 // pred_region
        loop: start=0, step=1, limit=1
        $region14: #{custom-call.10} parent=12 // loop_pre_header
          _
        $region15: #{custom-call.10} parent=12 // loop_header
          %s12 = sphi 0, %s16
          %p13 = scmp.ge.s32.totalorder %s12, 1
          %s17 = sphi %s0, %s0
          %s18 = sphi [#allocation0], [#allocation0]
        $region16: #{custom-call.10} parent=12 // loop_header_branch
          %15 = sbr.rel (%p13) target = $region20
        $region17: #{custom-call.10} parent=12 // loop_body
          %v19 = vld [vmem:[%s17] sm:$0xff]
          %20 = vst [vmem:[%s18] sm:$0xff] %v19
        $region18: #{custom-call.10} parent=12 // loop_footer
          %s16 = sadd.s32 1, %s12
        $region19: #{custom-call.10} parent=12 // loop_footer_branch
          %11 = sbr.rel target = $region15
        $region20: #{custom-call.10} parent=12 // loop_exit
          _
      $region13: #{custom-call.10} parent=4 // pred_fallthru
        _
    $region5: #{custom-call.10} parent=1 // pred_fallthru
      _
    %35 = vnop
    %v36 = vld [vmem:[#allocation0] sm:$0xff]
    %37 = vst [vmem:[#allocation1] sm:$0xff] %v36
    %38 = vst [vmem:[#allocation2] sm:$0x1] 0.0
    loop: start=0, step=1, limit=8
    $region36: #{custom-call.10} parent=1 // loop_pre_header
      _
    $region37: #{custom-call.10} parent=1 // loop_header
      %s40 = sphi 0, %s44
      %p41 = scmp.ge.s32.totalorder %s40, 8
    $region38: #{custom-call.10} parent=1 // loop_header_branch
      %43 = sbr.rel (%p41) target = $region42
    $region39: #{custom-call.10} parent=1 // loop_body
      %v45 = vld [vmem:[#allocation1] sm:$0xff]
      %v46 = vlaneseq
      %v47 = vshrl.u32 %v46, 7
      %v49 = vstv %s40
      %vm50 = vcmp.gt.s32.totalorder %v47, %v49
      %vm51 = vcmp.lt.s32.totalorder %v47, 8
      %vm52 = vmand %vm50, %vm51
      %v53 = vsel %vm52, %v45, 0.0
      %v54 = vmul.f32 %v53, %v53
      %v55 = vrot.slane %v54, 4
      %v56 = vadd.f32 %v54, %v55
      %v57 = vrot.slane %v56, 2
      %v58 = vadd.f32 %v56, %v57
      %v59 = vrot.slane %v58, 1
      %v60 = vadd.f32 %v58, %v59
      %v61 = vrsqrt.pop %v60
      %v62 = vmul.f32 %v60, %v61
      %vm63 = vcmp.eq.f32.partialorder %v60, inf
      %v64 = vsel %vm63, %v60, %v62
      %vm65 = vcmp.eq.f32.partialorder %v60, 0.0
      %v66 = vand.u32 %v60, 2147483648
      %v67 = vsel %vm65, %v66, %v64
      %vm68 = vcmp.eq.f32.partialorder %v60, 0.0
      %s69 = sshrl.u32 %s40, 3
      %s70 = sand.u32 %s40, 7
      %s71 = smul.addr %s69, 8
      %s72 = sadd.s32 %s70, %s71
      %s73 = scalar_lea.vmem [#allocation1], %s72
      %v74 = vld [vmem:[%s73] ss:$0 sm:$0xff]
      %v75 = vand.u32 2147483647, %v74
      %v76 = vmax.f32 %v75, 0.0
      %v77 = vand.u32 2147483647, %v67
      %v78 = vmax.f32 %v76, %v77
      %v79 = vrcp.pop %v78
      %v80 = vmul.f32 %v75, %v79
      %v81 = vmul.f32 %v80, %v80
      %v82 = vrcp.pop %v78
      %v83 = vmul.f32 0.0, %v82
      %v84 = vmul.f32 %v83, %v83
      %v85 = vadd.f32 %v81, %v84
      %v86 = vrcp.pop %v78
      %v87 = vmul.f32 %v77, %v86
      %v88 = vmul.f32 %v87, %v87
      %v89 = vadd.f32 %v85, %v88
      %vm90 = vcmp.eq.f32.partialorder %v78, 0.0
      %v91 = vrsqrt.pop %v89
      %v92 = vmul.f32 %v89, %v91
      %vm93 = vcmp.eq.f32.partialorder %v89, inf
      %v94 = vsel %vm93, %v89, %v92
      %vm95 = vcmp.eq.f32.partialorder %v89, 0.0
      %v96 = vand.u32 %v89, 2147483648
      %v97 = vsel %vm95, %v96, %v94
      %v98 = vmul.f32 %v78, %v97
      %v99 = vsel %vm90, 0.0, %v98
      %vm100 = vcmp.lt.f32.partialorder %v74, 0.0
      %v101 = vxor.u32 %v99, 2147483648
      %v102 = vsel %vm100, %v99, %v101
      %v103 = vsub.f32 %v102, %v74
      %v104 = vrcp.pop %v102
      %v105 = vmul.f32 %v103, %v104
      %v106 = vsel %vm68, %v74, %v102
      %v107 = vsel %vm68, 0.0, %v105
      %v108 = vsub.f32 %v74, %v106
      %s109 = smov [#allocation1]
      %v110 = vlaneseq
      %v111 = vshrl.u32 %v110, 7
      %v112 = vmov %v111
      %v113 = vld [vmem:[%s109] sm:$0xff]
      %v115 = vstv %s40
      %vm116 = vcmp.gt.s32.totalorder %v112, %v115
      %vm117 = vcmp.lt.s32.totalorder %v112, 8
      %vm118 = vmand %vm116, %vm117
      %v119 = vsel %vm118, %v113, 0.0
      %v120 = vrcp.pop %v108
      %v121 = vmul.f32 %v119, %v120
      %v122 = vsel %vm68, 0.0, %v121
      %v123 = vstv %s40
      %v124 = vlaneseq
      %v125 = vand.u32 %v124, 127
      %vm126 = vcmp.eq.s32.totalorder %v125, %v123
      %v127 = vsel %vm126, %v122, 0.0
      %128 = vadd.xlane.f32.xlu0 %v127
      %v129 = vpop.xlane.xlu0 %128
      %130 = vst [vmem:[#allocation4] sm:$0xff] %v129
      %s131 = scalar_lea.vmem [#allocation4], %s40
      %132 = vst [vmem:[%s131] sm:$0x1] 1.0
      %v133 = vstv %s40
      %v134 = vlaneseq
      %v135 = vand.u32 %v134, 127
      %vm136 = vcmp.eq.s32.totalorder %v135, %v133
      %v137 = vsel %vm136, %v107, 0.0
      %138 = vadd.xlane.f32.xlu0 %v137
      %v139 = vpop.xlane.xlu0 %138
      %v140 = vstv %s40
      %v141 = vlaneseq
      %v142 = vand.u32 %v141, 127
      %vm143 = vcmp.eq.s32.totalorder %v142, %v140
      %v144 = vld [vmem:[#allocation2] ss:$0 sm:$0xff]
      %v145 = vsel %vm143, %v139, %v144
      %146 = vst [vmem:[#allocation2] sm:$0x1] %v145
      %s147 = smov [#allocation1]
      %s148 = smov [#allocation4]
      %v149 = vlaneseq
      %v150 = vshrl.u32 %v149, 7
      %v151 = vmov %v150
      %v153 = vld [vmem:[%s148] sm:$0xff]
      %v154 = vld [vmem:[%s147] sm:$0xff]
      %v155 = vmul.f32 %v153, %v154
      %vm156 = vcmp.lt.s32.totalorder %v151, 8
      %v157 = vsel %vm156, %v155, 0.0
      %v158 = vrot.slane %v157, 4
      %v159 = vadd.f32 %v157, %v158
      %v160 = vrot.slane %v159, 2
      %v161 = vadd.f32 %v159, %v160
      %v162 = vrot.slane %v161, 1
      %v163 = vadd.f32 %v161, %v162
      %s164 = smov %s147
      %s165 = smov %s148
      %v166 = vlaneseq
      %v167 = vshrl.u32 %v166, 7
      %v168 = vmov %v167
      %v169 = vmul.f32 %v163, %v139
      %v171 = vlaneseq
      %v172 = vand.u32 %v171, 127
      %v173 = vld [vmem:[%s165] sm:$0xff]
      %v174 = vmul.f32 %v173, %v169
      %v175 = vld [vmem:[%s164] sm:$0xff]
      %v176 = vstv %s40
      %vm177 = vcmp.gt.s32.totalorder %v172, %v176
      %v178 = vsub.f32 %v175, %v174
      %v179 = vsel %vm177, %v178, %v175
      %v180 = vstv %s40
      %v181 = vlaneseq
      %v182 = vand.u32 %v181, 127
      %vm183 = vcmp.eq.s32.totalorder %v182, %v180
      %v184 = vstv %s40
      %vm185 = vcmp.ge.s32.totalorder %v168, %v184
      %vm186 = vmand %vm183, %vm185
      %v187 = vsel %vm186, %v173, %v179
      %188 = vst [vmem:[%s164] sm:$0xff] %v187
      %s189 = scalar_lea.vmem %s164, %s40
      %v190 = vld [vmem:[%s189] ss:$0 sm:$0xff]
      %v191 = vstv %s40
      %v192 = vlaneseq
      %v193 = vand.u32 %v192, 127
      %vm194 = vcmp.eq.s32.totalorder %v193, %v191
      %v195 = vsel %vm194, %v106, %v190
      %196 = vst [vmem:[%s189] sm:$0x1] %v195
    $region40: #{custom-call.10} parent=1 // loop_footer
      %s44 = sadd.s32 1, %s40
    $region41: #{custom-call.10} parent=1 // loop_footer_branch
      %39 = sbr.rel target = $region37
    $region42: #{custom-call.10} parent=1 // loop_exit
      _
    %s198 = sshllo.u32 0, 1
    %v200 = vld [vmem:[#allocation2] sm:%s198]
    %s201 = sshllo.u32 0, 1
    %202 = vst [vmem:[#allocation3] sm:%s201] %v200
    // Predicated region
    $region43: #{custom-call.10} parent=1 // pred_check
      _
    $region44: #{custom-call.10} parent=1 // pred_check_branch
      %204 = sbr.rel (0) target = $region46
    $region45: #{custom-call.10} parent=1 // pred_region
      // Predicated region
      $region47: #{custom-call.10} parent=45 // pred_check
        _
      $region48: #{custom-call.10} parent=45 // pred_check_branch
        %206 = sbr.rel (0) target = $region50
      $region49: #{custom-call.10} parent=45 // pred_region
        // Predicated region
        $region62: #{custom-call.10} parent=49 // pred_check
          _
        $region63: #{custom-call.10} parent=49 // pred_check_branch
          %221 = sbr.rel (0) target = $region65
        $region64: #{custom-call.10} parent=49 // pred_region
          loop: start=0, step=1, limit=1
          $region66: #{custom-call.10} parent=64 // loop_pre_header
            _
          $region67: #{custom-call.10} parent=64 // loop_header
            %s223 = sphi 0, %s227
            %p224 = scmp.ge.s32.totalorder %s223, 1
            %s228 = sphi [#allocation1], [#allocation1]
            %s229 = sphi %s1, %s1
          $region68: #{custom-call.10} parent=64 // loop_header_branch
            %226 = sbr.rel (%p224) target = $region72
          $region69: #{custom-call.10} parent=64 // loop_body
            %v230 = vld [vmem:[%s228] sm:$0xff]
            %231 = vst [vmem:[%s229] sm:$0xff] %v230
          $region70: #{custom-call.10} parent=64 // loop_footer
            %s227 = sadd.s32 1, %s223
          $region71: #{custom-call.10} parent=64 // loop_footer_branch
            %222 = sbr.rel target = $region67
          $region72: #{custom-call.10} parent=64 // loop_exit
            _
        $region65: #{custom-call.10} parent=49 // pred_fallthru
          _
        // Predicated region
        $region73: #{custom-call.10} parent=49 // pred_check
          _
        $region74: #{custom-call.10} parent=49 // pred_check_branch
          %233 = sbr.rel target = $region76
        $region75: #{custom-call.10} parent=49 // pred_region
          _
        $region76: #{custom-call.10} parent=49 // pred_fallthru
          _
      $region50: #{custom-call.10} parent=45 // pred_fallthru
        _
      // Predicated region
      $region51: #{custom-call.10} parent=45 // pred_check
        _
      $region52: #{custom-call.10} parent=45 // pred_check_branch
        %208 = sbr.rel target = $region54
      $region53: #{custom-call.10} parent=45 // pred_region
        loop: start=0, step=1, limit=1
        $region55: #{custom-call.10} parent=53 // loop_pre_header
          _
        $region56: #{custom-call.10} parent=53 // loop_header
          %s211 = sphi 0, %s215
          %p212 = scmp.ge.s32.totalorder %s211, 1
          %s216 = sphi [#allocation1], [#allocation1]
          %s217 = sphi %s1, %s1
        $region57: #{custom-call.10} parent=53 // loop_header_branch
          %214 = sbr.rel (%p212) target = $region61
        $region58: #{custom-call.10} parent=53 // loop_body
          %v218 = vld [vmem:[%s216] sm:$0xff]
          %219 = vst [vmem:[%s217] sm:$0xff] %v218
        $region59: #{custom-call.10} parent=53 // loop_footer
          %s215 = sadd.s32 1, %s211
        $region60: #{custom-call.10} parent=53 // loop_footer_branch
          %210 = sbr.rel target = $region56
        $region61: #{custom-call.10} parent=53 // loop_exit
          _
      $region54: #{custom-call.10} parent=45 // pred_fallthru
        _
    $region46: #{custom-call.10} parent=1 // pred_fallthru
      _
    %234 = vnop
    // Predicated region
    $region77: #{custom-call.10} parent=1 // pred_check
      _
    $region78: #{custom-call.10} parent=1 // pred_check_branch
      %236 = sbr.rel (0) target = $region80
    $region79: #{custom-call.10} parent=1 // pred_region
      // Predicated region
      $region81: #{custom-call.10} parent=79 // pred_check
        _
      $region82: #{custom-call.10} parent=79 // pred_check_branch
        %238 = sbr.rel (0) target = $region84
      $region83: #{custom-call.10} parent=79 // pred_region
        // Predicated region
        $region85: #{custom-call.10} parent=83 // pred_check
          _
        $region86: #{custom-call.10} parent=83 // pred_check_branch
          %240 = sbr.rel target = $region88
        $region87: #{custom-call.10} parent=83 // pred_region
          // Predicated region
          $region100: #{custom-call.10} parent=87 // pred_check
            _
          $region101: #{custom-call.10} parent=87 // pred_check_branch
            %255 = sbr.rel (0) target = $region103
          $region102: #{custom-call.10} parent=87 // pred_region
            loop: start=0, step=1, limit=1
            $region104: #{custom-call.10} parent=102 // loop_pre_header
              _
            $region105: #{custom-call.10} parent=102 // loop_header
              %s258 = sphi 0, %s262
              %p259 = scmp.ge.s32.totalorder %s258, 1
              %s263 = sphi [#allocation3], [#allocation3]
              %s264 = sphi %s2, %s2
            $region106: #{custom-call.10} parent=102 // loop_header_branch
              %261 = sbr.rel (%p259) target = $region110
            $region107: #{custom-call.10} parent=102 // loop_body
              %v265 = vld [vmem:[%s263] sm:$0x1]
              %266 = vst [vmem:[%s264] sm:$0x1] %v265
            $region108: #{custom-call.10} parent=102 // loop_footer
              %s262 = sadd.s32 1, %s258
            $region109: #{custom-call.10} parent=102 // loop_footer_branch
              %257 = sbr.rel target = $region105
            $region110: #{custom-call.10} parent=102 // loop_exit
              _
          $region103: #{custom-call.10} parent=87 // pred_fallthru
            _
        $region88: #{custom-call.10} parent=83 // pred_fallthru
          _
        // Predicated region
        $region89: #{custom-call.10} parent=83 // pred_check
          _
        $region90: #{custom-call.10} parent=83 // pred_check_branch
          %242 = sbr.rel (0) target = $region92
        $region91: #{custom-call.10} parent=83 // pred_region
          loop: start=0, step=1, limit=1
          $region93: #{custom-call.10} parent=91 // loop_pre_header
            _
          $region94: #{custom-call.10} parent=91 // loop_header
            %s245 = sphi 0, %s249
            %p246 = scmp.ge.s32.totalorder %s245, 1
            %s250 = sphi [#allocation3], [#allocation3]
            %s251 = sphi %s2, %s2
          $region95: #{custom-call.10} parent=91 // loop_header_branch
            %248 = sbr.rel (%p246) target = $region99
          $region96: #{custom-call.10} parent=91 // loop_body
            %v252 = vld [vmem:[%s250] sm:$0x1]
            %253 = vst [vmem:[%s251] sm:$0x1] %v252
          $region97: #{custom-call.10} parent=91 // loop_footer
            %s249 = sadd.s32 1, %s245
          $region98: #{custom-call.10} parent=91 // loop_footer_branch
            %244 = sbr.rel target = $region94
          $region99: #{custom-call.10} parent=91 // loop_exit
            _
        $region92: #{custom-call.10} parent=83 // pred_fallthru
          _
      $region84: #{custom-call.10} parent=79 // pred_fallthru
        _
      %267 = vnop
    $region80: #{custom-call.10} parent=1 // pred_fallthru
      _
    // Predicated region
    $region111: #{custom-call.10} parent=1 // pred_check
      _
    $region112: #{custom-call.10} parent=1 // pred_check_branch
      %269 = sbr.rel (0) target = $region114
    $region113: #{custom-call.10} parent=1 // pred_region
      _
    $region114: #{custom-call.10} parent=1 // pred_fallthru
      _

// kernel: closed_call.24
$region0: #{closed_call.24}
  #allocation0 [shape = 'u32[]', space=smem, size = 0x4, offset = 0x4, fixed_abs, tag = 'smem constant byte address 0x4 - core index']
  #allocation1 [shape = 'u32[144,128]{1,0:T(1,128)}', space=vmem, size = 0x12000, scoped, tag = 'internal scratch']
  %s0 = inlined_call_operand.vmem [shape: f32[16,128], index: 0, kind: input, shape index: {}]
  %s1 = inlined_call_operand.vmem [shape: f32[1,128], index: 1, kind: input, shape index: {}]
  %s2 = inlined_call_operand.vmem [shape: f32[128,128], index: 2, kind: input, shape index: {}]
  %s3 = inlined_call_operand.vmem [shape: f32[16,128], index: 3, kind: input, shape index: {}]
  %s4 = inlined_call_operand.vmem [shape: f32[16,128], index: 4, kind: input, shape index: {}]
  %s5 = inlined_call_operand.vmem [shape: f32[16,128], index: 5, kind: input, shape index: {}]
  %s6 = inlined_call_operand.vmem [shape: f32[128,128], index: 6, kind: input, shape index: {}]
  %s7 = inlined_call_operand.vmem [shape: f32[128,128], index: 7, kind: input, shape index: {}]
  %s8 = inlined_call_operand.vmem [shape: f32[128,128], index: 8, kind: input, shape index: {}]
  %s9 = inlined_call_operand.vmem [shape: f32[128,128], index: 9, kind: input, shape index: {}]
  %s10 = inlined_call_operand.hbm [shape: f32[16,128], index: 10, kind: output, shape index: {0}]
  %s11 = inlined_call_operand.vmem [shape: f32[16,128], index: 11, kind: output, shape index: {1}]
  %s12 = inlined_call_operand.vmem [shape: f32[16,128], index: 12, kind: output, shape index: {2}]
  %13 = xla_tuple %s10, %s11, %s12
  %s14 = sld [smem:[#allocation0]]
  $region66: #{closed_call.24} parent=0
    _
  %s16 = ssub.s32 1, %s14
  %s17 = scalar_select 0, %s16, %s14
  $region1: #{closed_call.24} parent=0
    #allocation2 [shape = 'u8[8192]{0}', space=vmem, size = 0x2000, scoped, tag = 'output window, operand 0, single buffered']
    #allocation3 [shape = 's32[1]{0}', space=sflag, size = 0x4, scoped, tag = 'scoped memory for closed_call.24']
    %18 = vsyncpa [#allocation3], 0
    // Predicated region
    $region2: #{closed_call.24} parent=1 // pred_check
      _
    $region3: #{closed_call.24} parent=1 // pred_check_branch
      %20 = sbr.rel (0) target = $region5
    $region4: #{closed_call.24} parent=1 // pred_region
      _
    $region5: #{closed_call.24} parent=1 // pred_fallthru
      _
    // Predicated region
    $region6: #{closed_call.24} parent=1 // pred_check
      _
    $region7: #{closed_call.24} parent=1 // pred_check_branch
      %22 = sbr.rel (0) target = $region9
    $region8: #{closed_call.24} parent=1 // pred_region
      _
    $region9: #{closed_call.24} parent=1 // pred_fallthru
      _
    // Predicated region
    $region10: #{closed_call.24} parent=1 // pred_check
      _
    $region11: #{closed_call.24} parent=1 // pred_check_branch
      %24 = sbr.rel (0) target = $region13
    $region12: #{closed_call.24} parent=1 // pred_region
      _
    $region13: #{closed_call.24} parent=1 // pred_fallthru
      _
    // Predicated region
    $region14: #{closed_call.24} parent=1 // pred_check
      _
    $region15: #{closed_call.24} parent=1 // pred_check_branch
      %26 = sbr.rel (0) target = $region17
    $region16: #{closed_call.24} parent=1 // pred_region
      _
    $region17: #{closed_call.24} parent=1 // pred_fallthru
      _
    // Predicated region
    $region18: #{closed_call.24} parent=1 // pred_check
      _
    $region19: #{closed_call.24} parent=1 // pred_check_branch
      %28 = sbr.rel (0) target = $region21
    $region20: #{closed_call.24} parent=1 // pred_region
      _
    $region21: #{closed_call.24} parent=1 // pred_fallthru
      _
    // Predicated region
    $region22: #{closed_call.24} parent=1 // pred_check
      _
    $region23: #{closed_call.24} parent=1 // pred_check_branch
      %30 = sbr.rel (0) target = $region25
    $region24: #{closed_call.24} parent=1 // pred_region
      _
    $region25: #{closed_call.24} parent=1 // pred_fallthru
      _
    // Predicated region
    $region26: #{closed_call.24} parent=1 // pred_check
      _
    $region27: #{closed_call.24} parent=1 // pred_check_branch
      %32 = sbr.rel (0) target = $region29
    $region28: #{closed_call.24} parent=1 // pred_region
      _
    $region29: #{closed_call.24} parent=1 // pred_fallthru
      _
    // Predicated region
    $region30: #{closed_call.24} parent=1 // pred_check
      _
    $region31: #{closed_call.24} parent=1 // pred_check_branch
      %34 = sbr.rel (0) target = $region33
    $region32: #{closed_call.24} parent=1 // pred_region
      _
    $region33: #{closed_call.24} parent=1 // pred_fallthru
      _
    // Predicated region
    $region34: #{closed_call.24} parent=1 // pred_check
      _
    $region35: #{closed_call.24} parent=1 // pred_check_branch
      %36 = sbr.rel (0) target = $region37
    $region36: #{closed_call.24} parent=1 // pred_region
      _
    $region37: #{closed_call.24} parent=1 // pred_fallthru
      _
    // Predicated region
    $region38: #{closed_call.24} parent=1 // pred_check
      _
    $region39: #{closed_call.24} parent=1 // pred_check_branch
      %38 = sbr.rel (0) target = $region41
    $region40: #{closed_call.24} parent=1 // pred_region
      _
    $region41: #{closed_call.24} parent=1 // pred_fallthru
      _
    %v39 = vld [vmem:[%s1] sm:$0x1]
    %v40 = vsub.f32 %v39, 0.02
    %v41 = vmax.f32 %v40, 0.0
    %v42 = vld [vmem:[%s0] sm:$0xff]
    %v43 = vld [vmem:[%s0 + $0x8] sm:$0xff]
    %v45 = vlaneseq
    %v46 = vshrl.u32 %v45, 7
    %v47 = vsub.s32 0, %v46
    %v48 = vrot.slane %v41, %v47
    %v50 = vmul.f32 %v42, %v48
    %v51 = vmul.f32 %v43, %v48
    %v52 = vld [vmem:[%s2] sm:$0xff]
    %v53 = vld [vmem:[%s2 + $0x8] sm:$0xff]
    %v54 = vld [vmem:[%s2 + $0x10] sm:$0xff]
    %v55 = vld [vmem:[%s2 + $0x18] sm:$0xff]
    %v56 = vld [vmem:[%s2 + $0x20] sm:$0xff]
    %v57 = vld [vmem:[%s2 + $0x28] sm:$0xff]
    %v58 = vld [vmem:[%s2 + $0x30] sm:$0xff]
    %v59 = vld [vmem:[%s2 + $0x38] sm:$0xff]
    %v60 = vld [vmem:[%s2 + $0x40] sm:$0xff]
    %v61 = vld [vmem:[%s2 + $0x48] sm:$0xff]
    %v62 = vld [vmem:[%s2 + $0x50] sm:$0xff]
    %v63 = vld [vmem:[%s2 + $0x58] sm:$0xff]
    %v64 = vld [vmem:[%s2 + $0x60] sm:$0xff]
    %v65 = vld [vmem:[%s2 + $0x68] sm:$0xff]
    %v66 = vld [vmem:[%s2 + $0x70] sm:$0xff]
    %v67 = vld [vmem:[%s2 + $0x78] sm:$0xff]
    %68 = vmatprep.subr.mxu0 0.0
    %69 = vmatpush1.msra.mxu0 %v52
    %70 = vmatprep.subr.mxu0 0.0
    %71 = vmatpush1.msra.mxu0 %v53
    %72 = vmatprep.subr.mxu0 0.0
    %73 = vmatpush1.msra.mxu0 %v54
    %74 = vmatprep.subr.mxu0 0.0
    %75 = vmatpush1.msra.mxu0 %v55
    %76 = vmatprep.subr.mxu0 0.0
    %77 = vmatpush1.msra.mxu0 %v56
    %78 = vmatprep.subr.mxu0 0.0
    %79 = vmatpush1.msra.mxu0 %v57
    %80 = vmatprep.subr.mxu0 0.0
    %81 = vmatpush1.msra.mxu0 %v58
    %82 = vmatprep.subr.mxu0 0.0
    %83 = vmatpush1.msra.mxu0 %v59
    %84 = vmatprep.subr.mxu0 0.0
    %85 = vmatpush1.msra.mxu0 %v60
    %86 = vmatprep.subr.mxu0 0.0
    %87 = vmatpush1.msra.mxu0 %v61
    %88 = vmatprep.subr.mxu0 0.0
    %89 = vmatpush1.msra.mxu0 %v62
    %90 = vmatprep.subr.mxu0 0.0
    %91 = vmatpush1.msra.mxu0 %v63
    %92 = vmatprep.subr.mxu0 0.0
    %93 = vmatpush1.msra.mxu0 %v64
    %94 = vmatprep.subr.mxu0 0.0
    %95 = vmatpush1.msra.mxu0 %v65
    %96 = vmatprep.subr.mxu0 0.0
    %97 = vmatpush1.msra.mxu0 %v66
    %98 = vmatprep.subr.mxu0 0.0
    %99 = vmatpush1.msra.mxu0 %v67
    %100 = vmatprep.subr.mxu0 0.0
    %101 = vmatpush1.msra.mxu0 0.0
    %102 = vmatprep.subr.mxu0 0.0
    %103 = vmatpush1.msra.mxu0 0.0
    %104 = vmatprep.subr.mxu0 0.0
    %105 = vmatpush1.msra.mxu0 0.0
    %106 = vmatprep.subr.mxu0 0.0
    %107 = vmatpush1.msra.mxu0 0.0
    %108 = vmatprep.subr.mxu0 0.0
    %109 = vmatpush1.msra.mxu0 0.0
    %110 = vmatprep.subr.mxu0 0.0
    %111 = vmatpush1.msra.mxu0 0.0
    %112 = vmatprep.subr.mxu0 0.0
    %113 = vmatpush1.msra.mxu0 0.0
    %114 = vmatprep.subr.mxu0 0.0
    %115 = vmatpush1.msra.mxu0 0.0
    %116 = vmatprep.subr.mxu0 0.0
    %117 = vmatpush1.msra.mxu0 0.0
    %118 = vmatprep.subr.mxu0 0.0
    %119 = vmatpush1.msra.mxu0 0.0
    %120 = vmatprep.subr.mxu0 0.0
    %121 = vmatpush1.msra.mxu0 0.0
    %122 = vmatprep.subr.mxu0 0.0
    %123 = vmatpush1.msra.mxu0 0.0
    %124 = vmatprep.subr.mxu0 0.0
    %125 = vmatpush1.msra.mxu0 0.0
    %126 = vmatprep.subr.mxu0 0.0
    %127 = vmatpush1.msra.mxu0 0.0
    %128 = vmatprep.subr.mxu0 0.0
    %129 = vmatpush1.msra.mxu0 0.0
    %130 = vmatprep.subr.mxu0 0.0
    %131 = vmatpush1.msra.mxu0 0.0
    %132 = vmatprep.mubr.f32.mxu0 0.0
    %133 = vmatmul.mubr.f32.gmra.mrb[0].mxu0 %v50
    %v134 = vpop.f32.mrb[0].mxu0
    %v135 = vadd.f32 0.0, %v134
    %v136 = vpop.f32.mrb[0].mxu0
    %137 = vmatprep.mubr.f32.mxu0 0.0
    %138 = vmatmul.mubr.f32.gmra.mrb[0].mxu0 %v51
    %v139 = vpop.f32.mrb[0].mxu0
    %v140 = vadd.f32 0.0, %v139
    %v141 = vpop.f32.mrb[0].mxu0
    %142 = vdwg.mxu0
    %143 = vst [vmem:[#allocation2] sm:$0xff] %v135
    %144 = vst [vmem:[#allocation2 + $0x8] sm:$0xff] %v140
    %v145 = vld [vmem:[%s3] sm:$0xff]
    %v146 = vld [vmem:[%s3 + $0x8] sm:$0xff]
    %v147 = vld [vmem:[%s5] sm:$0xff]
    %v148 = vld [vmem:[%s5 + $0x8] sm:$0xff]
    %v149 = vld [vmem:[%s8] sm:$0xff]
    %v150 = vld [vmem:[%s8 + $0x8] sm:$0xff]
    %v151 = vld [vmem:[%s8 + $0x10] sm:$0xff]
    %v152 = vld [vmem:[%s8 + $0x18] sm:$0xff]
    %v153 = vld [vmem:[%s8 + $0x20] sm:$0xff]
    %v154 = vld [vmem:[%s8 + $0x28] sm:$0xff]
    %v155 = vld [vmem:[%s8 + $0x30] sm:$0xff]
    %v156 = vld [vmem:[%s8 + $0x38] sm:$0xff]
    %v157 = vld [vmem:[%s8 + $0x40] sm:$0xff]
    %v158 = vld [vmem:[%s8 + $0x48] sm:$0xff]
    %v159 = vld [vmem:[%s8 + $0x50] sm:$0xff]
    %v160 = vld [vmem:[%s8 + $0x58] sm:$0xff]
    %v161 = vld [vmem:[%s8 + $0x60] sm:$0xff]
    %v162 = vld [vmem:[%s8 + $0x68] sm:$0xff]
    %v163 = vld [vmem:[%s8 + $0x70] sm:$0xff]
    %v164 = vld [vmem:[%s8 + $0x78] sm:$0xff]
    %165 = vmatprep.subr.mxu0 0.0
    %166 = vmatpush1.msra.mxu0 %v149
    %167 = vmatprep.subr.mxu0 0.0
    %168 = vmatpush1.msra.mxu0 %v150
    %169 = vmatprep.subr.mxu0 0.0
    %170 = vmatpush1.msra.mxu0 %v151
    %171 = vmatprep.subr.mxu0 0.0
    %172 = vmatpush1.msra.mxu0 %v152
    %173 = vmatprep.subr.mxu0 0.0
    %174 = vmatpush1.msra.mxu0 %v153
    %175 = vmatprep.subr.mxu0 0.0
    %176 = vmatpush1.msra.mxu0 %v154
    %177 = vmatprep.subr.mxu0 0.0
    %178 = vmatpush1.msra.mxu0 %v155
    %179 = vmatprep.subr.mxu0 0.0
    %180 = vmatpush1.msra.mxu0 %v156
    %181 = vmatprep.subr.mxu0 0.0
    %182 = vmatpush1.msra.mxu0 %v157
    %183 = vmatprep.subr.mxu0 0.0
    %184 = vmatpush1.msra.mxu0 %v158
    %185 = vmatprep.subr.mxu0 0.0
    %186 = vmatpush1.msra.mxu0 %v159
    %187 = vmatprep.subr.mxu0 0.0
    %188 = vmatpush1.msra.mxu0 %v160
    %189 = vmatprep.subr.mxu0 0.0
    %190 = vmatpush1.msra.mxu0 %v161
    %191 = vmatprep.subr.mxu0 0.0
    %192 = vmatpush1.msra.mxu0 %v162
    %193 = vmatprep.subr.mxu0 0.0
    %194 = vmatpush1.msra.mxu0 %v163
    %195 = vmatprep.subr.mxu0 0.0
    %196 = vmatpush1.msra.mxu0 %v164
    %197 = vmatprep.subr.mxu0 0.0
    %198 = vmatpush1.msra.mxu0 0.0
    %199 = vmatprep.subr.mxu0 0.0
    %200 = vmatpush1.msra.mxu0 0.0
    %201 = vmatprep.subr.mxu0 0.0
    %202 = vmatpush1.msra.mxu0 0.0
    %203 = vmatprep.subr.mxu0 0.0
    %204 = vmatpush1.msra.mxu0 0.0
    %205 = vmatprep.subr.mxu0 0.0
    %206 = vmatpush1.msra.mxu0 0.0
    %207 = vmatprep.subr.mxu0 0.0
    %208 = vmatpush1.msra.mxu0 0.0
    %209 = vmatprep.subr.mxu0 0.0
    %210 = vmatpush1.msra.mxu0 0.0
    %211 = vmatprep.subr.mxu0 0.0
    %212 = vmatpush1.msra.mxu0 0.0
    %213 = vmatprep.subr.mxu0 0.0
    %214 = vmatpush1.msra.mxu0 0.0
    %215 = vmatprep.subr.mxu0 0.0
    %216 = vmatpush1.msra.mxu0 0.0
    %217 = vmatprep.subr.mxu0 0.0
    %218 = vmatpush1.msra.mxu0 0.0
    %219 = vmatprep.subr.mxu0 0.0
    %220 = vmatpush1.msra.mxu0 0.0
    %221 = vmatprep.subr.mxu0 0.0
    %222 = vmatpush1.msra.mxu0 0.0
    %223 = vmatprep.subr.mxu0 0.0
    %224 = vmatpush1.msra.mxu0 0.0
    %225 = vmatprep.subr.mxu0 0.0
    %226 = vmatpush1.msra.mxu0 0.0
    %227 = vmatprep.subr.mxu0 0.0
    %228 = vmatpush1.msra.mxu0 0.0
    %229 = vmatprep.mubr.f32.mxu0 0.0
    %230 = vmatmul.mubr.f32.gmra.mrb[0].mxu0 %v135
    %v231 = vpop.f32.mrb[0].mxu0
    %v232 = vadd.f32 0.0, %v231
    %v233 = vpop.f32.mrb[0].mxu0
    %234 = vmatprep.mubr.f32.mxu0 0.0
    %235 = vmatmul.mubr.f32.gmra.mrb[0].mxu0 %v140
    %v236 = vpop.f32.mrb[0].mxu0
    %v237 = vadd.f32 0.0, %v236
    %v238 = vpop.f32.mrb[0].mxu0
    %239 = vdwg.mxu0
    %v240 = vadd.f32 %v147, %v232
    %v241 = vadd.f32 %v148, %v237
    %v242 = vld [vmem:[%s9] sm:$0xff]
    %v243 = vld [vmem:[%s9 + $0x8] sm:$0xff]
    %v244 = vld [vmem:[%s9 + $0x10] sm:$0xff]
    %v245 = vld [vmem:[%s9 + $0x18] sm:$0xff]
    %v246 = vld [vmem:[%s9 + $0x20] sm:$0xff]
    %v247 = vld [vmem:[%s9 + $0x28] sm:$0xff]
    %v248 = vld [vmem:[%s9 + $0x30] sm:$0xff]
    %v249 = vld [vmem:[%s9 + $0x38] sm:$0xff]
    %v250 = vld [vmem:[%s9 + $0x40] sm:$0xff]
    %v251 = vld [vmem:[%s9 + $0x48] sm:$0xff]
    %v252 = vld [vmem:[%s9 + $0x50] sm:$0xff]
    %v253 = vld [vmem:[%s9 + $0x58] sm:$0xff]
    %v254 = vld [vmem:[%s9 + $0x60] sm:$0xff]
    %v255 = vld [vmem:[%s9 + $0x68] sm:$0xff]
    %v256 = vld [vmem:[%s9 + $0x70] sm:$0xff]
    %v257 = vld [vmem:[%s9 + $0x78] sm:$0xff]
    %258 = vmatprep.subr.mxu0 0.0
    %259 = vmatpush1.msra.mxu0 %v242
    %260 = vmatprep.subr.mxu0 0.0
    %261 = vmatpush1.msra.mxu0 %v243
    %262 = vmatprep.subr.mxu0 0.0
    %263 = vmatpush1.msra.mxu0 %v244
    %264 = vmatprep.subr.mxu0 0.0
    %265 = vmatpush1.msra.mxu0 %v245
    %266 = vmatprep.subr.mxu0 0.0
    %267 = vmatpush1.msra.mxu0 %v246
    %268 = vmatprep.subr.mxu0 0.0
    %269 = vmatpush1.msra.mxu0 %v247
    %270 = vmatprep.subr.mxu0 0.0
    %271 = vmatpush1.msra.mxu0 %v248
    %272 = vmatprep.subr.mxu0 0.0
    %273 = vmatpush1.msra.mxu0 %v249
    %274 = vmatprep.subr.mxu0 0.0
    %275 = vmatpush1.msra.mxu0 %v250
    %276 = vmatprep.subr.mxu0 0.0
    %277 = vmatpush1.msra.mxu0 %v251
    %278 = vmatprep.subr.mxu0 0.0
    %279 = vmatpush1.msra.mxu0 %v252
    %280 = vmatprep.subr.mxu0 0.0
    %281 = vmatpush1.msra.mxu0 %v253
    %282 = vmatprep.subr.mxu0 0.0
    %283 = vmatpush1.msra.mxu0 %v254
    %284 = vmatprep.subr.mxu0 0.0
    %285 = vmatpush1.msra.mxu0 %v255
    %286 = vmatprep.subr.mxu0 0.0
    %287 = vmatpush1.msra.mxu0 %v256
    %288 = vmatprep.subr.mxu0 0.0
    %289 = vmatpush1.msra.mxu0 %v257
    %290 = vmatprep.subr.mxu0 0.0
    %291 = vmatpush1.msra.mxu0 0.0
    %292 = vmatprep.subr.mxu0 0.0
    %293 = vmatpush1.msra.mxu0 0.0
    %294 = vmatprep.subr.mxu0 0.0
    %295 = vmatpush1.msra.mxu0 0.0
    %296 = vmatprep.subr.mxu0 0.0
    %297 = vmatpush1.msra.mxu0 0.0
    %298 = vmatprep.subr.mxu0 0.0
    %299 = vmatpush1.msra.mxu0 0.0
    %300 = vmatprep.subr.mxu0 0.0
    %301 = vmatpush1.msra.mxu0 0.0
    %302 = vmatprep.subr.mxu0 0.0
    %303 = vmatpush1.msra.mxu0 0.0
    %304 = vmatprep.subr.mxu0 0.0
    %305 = vmatpush1.msra.mxu0 0.0
    %306 = vmatprep.subr.mxu0 0.0
    %307 = vmatpush1.msra.mxu0 0.0
    %308 = vmatprep.subr.mxu0 0.0
    %309 = vmatpush1.msra.mxu0 0.0
    %310 = vmatprep.subr.mxu0 0.0
    %311 = vmatpush1.msra.mxu0 0.0
    %312 = vmatprep.subr.mxu0 0.0
    %313 = vmatpush1.msra.mxu0 0.0
    %314 = vmatprep.subr.mxu0 0.0
    %315 = vmatpush1.msra.mxu0 0.0
    %316 = vmatprep.subr.mxu0 0.0
    %317 = vmatpush1.msra.mxu0 0.0
    %318 = vmatprep.subr.mxu0 0.0
    %319 = vmatpush1.msra.mxu0 0.0
    %320 = vmatprep.subr.mxu0 0.0
    %321 = vmatpush1.msra.mxu0 0.0
    %322 = vmatprep.mubr.f32.mxu0 0.0
    %323 = vmatmul.mubr.f32.gmra.mrb[0].mxu0 %v145
    %v324 = vpop.f32.mrb[0].mxu0
    %v325 = vadd.f32 0.0, %v324
    %v326 = vpop.f32.mrb[0].mxu0
    %327 = vmatprep.mubr.f32.mxu0 0.0
    %328 = vmatmul.mubr.f32.gmra.mrb[0].mxu0 %v146
    %v329 = vpop.f32.mrb[0].mxu0
    %v330 = vadd.f32 0.0, %v329
    %v331 = vpop.f32.mrb[0].mxu0
    %332 = vdwg.mxu0
    %v333 = vadd.f32 %v240, %v325
    %v334 = vadd.f32 %v241, %v330
    %v335 = vmul.f32 %v333, %v333
    %v336 = vmul.f32 %v334, %v334
    %337 = vadd.xlane.f32.xlu0 %v335
    %v338 = vpop.xlane.xlu0 %337
    %339 = vadd.xlane.f32.xlu0 %v336
    %v340 = vpop.xlane.xlu0 %339
    %v341 = vadd.f32 %v338, 1e-30
    %v342 = vadd.f32 %v340, 1e-30
    %v343 = vrsqrt.pop %v341
    %v344 = vrsqrt.pop %v342
    %v345 = vmul.f32 %v343, 0.001
    %v346 = vmul.f32 %v344, 0.001
    %v347 = vsub.f32 1.0, %v345
    %v348 = vsub.f32 1.0, %v346
    %v349 = vmax.f32 %v347, 0.0
    %v350 = vmax.f32 %v348, 0.0
    %v351 = vmul.f32 %v333, %v349
    %v352 = vmul.f32 %v334, %v350
    %353 = vst [vmem:[%s11] sm:$0xff] %v351
    %354 = vst [vmem:[%s11 + $0x8] sm:$0xff] %v352
    %v355 = vld [vmem:[%s4] sm:$0xff]
    %v356 = vld [vmem:[%s4 + $0x8] sm:$0xff]
    %v357 = vld [vmem:[%s6] sm:$0xff]
    %v358 = vld [vmem:[%s6 + $0x8] sm:$0xff]
    %v359 = vld [vmem:[%s6 + $0x10] sm:$0xff]
    %v360 = vld [vmem:[%s6 + $0x18] sm:$0xff]
    %v361 = vld [vmem:[%s6 + $0x20] sm:$0xff]
    %v362 = vld [vmem:[%s6 + $0x28] sm:$0xff]
    %v363 = vld [vmem:[%s6 + $0x30] sm:$0xff]
    %v364 = vld [vmem:[%s6 + $0x38] sm:$0xff]
    %v365 = vld [vmem:[%s6 + $0x40] sm:$0xff]
    %v366 = vld [vmem:[%s6 + $0x48] sm:$0xff]
    %v367 = vld [vmem:[%s6 + $0x50] sm:$0xff]
    %v368 = vld [vmem:[%s6 + $0x58] sm:$0xff]
    %v369 = vld [vmem:[%s6 + $0x60] sm:$0xff]
    %v370 = vld [vmem:[%s6 + $0x68] sm:$0xff]
    %v371 = vld [vmem:[%s6 + $0x70] sm:$0xff]
    %v372 = vld [vmem:[%s6 + $0x78] sm:$0xff]
    %373 = vmatprep.subr.mxu0 0.0
    %374 = vmatpush1.msra.mxu0 %v357
    %375 = vmatprep.subr.mxu0 0.0
    %376 = vmatpush1.msra.mxu0 %v358
    %377 = vmatprep.subr.mxu0 0.0
    %378 = vmatpush1.msra.mxu0 %v359
    %379 = vmatprep.subr.mxu0 0.0
    %380 = vmatpush1.msra.mxu0 %v360
    %381 = vmatprep.subr.mxu0 0.0
    %382 = vmatpush1.msra.mxu0 %v361
    %383 = vmatprep.subr.mxu0 0.0
    %384 = vmatpush1.msra.mxu0 %v362
    %385 = vmatprep.subr.mxu0 0.0
    %386 = vmatpush1.msra.mxu0 %v363
    %387 = vmatprep.subr.mxu0 0.0
    %388 = vmatpush1.msra.mxu0 %v364
    %389 = vmatprep.subr.mxu0 0.0
    %390 = vmatpush1.msra.mxu0 %v365
    %391 = vmatprep.subr.mxu0 0.0
    %392 = vmatpush1.msra.mxu0 %v366
    %393 = vmatprep.subr.mxu0 0.0
    %394 = vmatpush1.msra.mxu0 %v367
    %395 = vmatprep.subr.mxu0 0.0
    %396 = vmatpush1.msra.mxu0 %v368
    %397 = vmatprep.subr.mxu0 0.0
    %398 = vmatpush1.msra.mxu0 %v369
    %399 = vmatprep.subr.mxu0 0.0
    %400 = vmatpush1.msra.mxu0 %v370
    %401 = vmatprep.subr.mxu0 0.0
    %402 = vmatpush1.msra.mxu0 %v371
    %403 = vmatprep.subr.mxu0 0.0
    %404 = vmatpush1.msra.mxu0 %v372
    %405 = vmatprep.subr.mxu0 0.0
    %406 = vmatpush1.msra.mxu0 0.0
    %407 = vmatprep.subr.mxu0 0.0
    %408 = vmatpush1.msra.mxu0 0.0
    %409 = vmatprep.subr.mxu0 0.0
    %410 = vmatpush1.msra.mxu0 0.0
    %411 = vmatprep.subr.mxu0 0.0
    %412 = vmatpush1.msra.mxu0 0.0
    %413 = vmatprep.subr.mxu0 0.0
    %414 = vmatpush1.msra.mxu0 0.0
    %415 = vmatprep.subr.mxu0 0.0
    %416 = vmatpush1.msra.mxu0 0.0
    %417 = vmatprep.subr.mxu0 0.0
    %418 = vmatpush1.msra.mxu0 0.0
    %419 = vmatprep.subr.mxu0 0.0
    %420 = vmatpush1.msra.mxu0 0.0
    %421 = vmatprep.subr.mxu0 0.0
    %422 = vmatpush1.msra.mxu0 0.0
    %423 = vmatprep.subr.mxu0 0.0
    %424 = vmatpush1.msra.mxu0 0.0
    %425 = vmatprep.subr.mxu0 0.0
    %426 = vmatpush1.msra.mxu0 0.0
    %427 = vmatprep.subr.mxu0 0.0
    %428 = vmatpush1.msra.mxu0 0.0
    %429 = vmatprep.subr.mxu0 0.0
    %430 = vmatpush1.msra.mxu0 0.0
    %431 = vmatprep.subr.mxu0 0.0
    %432 = vmatpush1.msra.mxu0 0.0
    %433 = vmatprep.subr.mxu0 0.0
    %434 = vmatpush1.msra.mxu0 0.0
    %435 = vmatprep.subr.mxu0 0.0
    %436 = vmatpush1.msra.mxu0 0.0
    %437 = vmatprep.mubr.f32.mxu0 0.0
    %438 = vmatmul.mubr.f32.gmra.mrb[0].mxu0 %v135
    %v439 = vpop.f32.mrb[0].mxu0
    %v440 = vadd.f32 0.0, %v439
    %v441 = vpop.f32.mrb[0].mxu0
    %442 = vmatprep.mubr.f32.mxu0 0.0
    %443 = vmatmul.mubr.f32.gmra.mrb[0].mxu0 %v140
    %v444 = vpop.f32.mrb[0].mxu0
    %v445 = vadd.f32 0.0, %v444
    %v446 = vpop.f32.mrb[0].mxu0
    %447 = vdwg.mxu0
    %v448 = vadd.f32 %v355, %v440
    %v449 = vadd.f32 %v356, %v445
    %v450 = vld [vmem:[%s7] sm:$0xff]
    %v451 = vld [vmem:[%s7 + $0x8] sm:$0xff]
    %v452 = vld [vmem:[%s7 + $0x10] sm:$0xff]
    %v453 = vld [vmem:[%s7 + $0x18] sm:$0xff]
    %v454 = vld [vmem:[%s7 + $0x20] sm:$0xff]
    %v455 = vld [vmem:[%s7 + $0x28] sm:$0xff]
    %v456 = vld [vmem:[%s7 + $0x30] sm:$0xff]
    %v457 = vld [vmem:[%s7 + $0x38] sm:$0xff]
    %v458 = vld [vmem:[%s7 + $0x40] sm:$0xff]
    %v459 = vld [vmem:[%s7 + $0x48] sm:$0xff]
    %v460 = vld [vmem:[%s7 + $0x50] sm:$0xff]
    %v461 = vld [vmem:[%s7 + $0x58] sm:$0xff]
    %v462 = vld [vmem:[%s7 + $0x60] sm:$0xff]
    %v463 = vld [vmem:[%s7 + $0x68] sm:$0xff]
    %v464 = vld [vmem:[%s7 + $0x70] sm:$0xff]
    %v465 = vld [vmem:[%s7 + $0x78] sm:$0xff]
    %466 = vmatprep.subr.mxu0 0.0
    %467 = vmatpush1.msra.mxu0 %v450
    %468 = vmatprep.subr.mxu0 0.0
    %469 = vmatpush1.msra.mxu0 %v451
    %470 = vmatprep.subr.mxu0 0.0
    %471 = vmatpush1.msra.mxu0 %v452
    %472 = vmatprep.subr.mxu0 0.0
    %473 = vmatpush1.msra.mxu0 %v453
    %474 = vmatprep.subr.mxu0 0.0
    %475 = vmatpush1.msra.mxu0 %v454
    %476 = vmatprep.subr.mxu0 0.0
    %477 = vmatpush1.msra.mxu0 %v455
    %478 = vmatprep.subr.mxu0 0.0
    %479 = vmatpush1.msra.mxu0 %v456
    %480 = vmatprep.subr.mxu0 0.0
    %481 = vmatpush1.msra.mxu0 %v457
    %482 = vmatprep.subr.mxu0 0.0
    %483 = vmatpush1.msra.mxu0 %v458
    %484 = vmatprep.subr.mxu0 0.0
    %485 = vmatpush1.msra.mxu0 %v459
    %486 = vmatprep.subr.mxu0 0.0
    %487 = vmatpush1.msra.mxu0 %v460
    %488 = vmatprep.subr.mxu0 0.0
    %489 = vmatpush1.msra.mxu0 %v461
    %490 = vmatprep.subr.mxu0 0.0
    %491 = vmatpush1.msra.mxu0 %v462
    %492 = vmatprep.subr.mxu0 0.0
    %493 = vmatpush1.msra.mxu0 %v463
    %494 = vmatprep.subr.mxu0 0.0
    %495 = vmatpush1.msra.mxu0 %v464
    %496 = vmatprep.subr.mxu0 0.0
    %497 = vmatpush1.msra.mxu0 %v465
    %498 = vmatprep.subr.mxu0 0.0
    %499 = vmatpush1.msra.mxu0 0.0
    %500 = vmatprep.subr.mxu0 0.0
    %501 = vmatpush1.msra.mxu0 0.0
    %502 = vmatprep.subr.mxu0 0.0
    %503 = vmatpush1.msra.mxu0 0.0
    %504 = vmatprep.subr.mxu0 0.0
    %505 = vmatpush1.msra.mxu0 0.0
    %506 = vmatprep.subr.mxu0 0.0
    %507 = vmatpush1.msra.mxu0 0.0
    %508 = vmatprep.subr.mxu0 0.0
    %509 = vmatpush1.msra.mxu0 0.0
    %510 = vmatprep.subr.mxu0 0.0
    %511 = vmatpush1.msra.mxu0 0.0
    %512 = vmatprep.subr.mxu0 0.0
    %513 = vmatpush1.msra.mxu0 0.0
    %514 = vmatprep.subr.mxu0 0.0
    %515 = vmatpush1.msra.mxu0 0.0
    %516 = vmatprep.subr.mxu0 0.0
    %517 = vmatpush1.msra.mxu0 0.0
    %518 = vmatprep.subr.mxu0 0.0
    %519 = vmatpush1.msra.mxu0 0.0
    %520 = vmatprep.subr.mxu0 0.0
    %521 = vmatpush1.msra.mxu0 0.0
    %522 = vmatprep.subr.mxu0 0.0
    %523 = vmatpush1.msra.mxu0 0.0
    %524 = vmatprep.subr.mxu0 0.0
    %525 = vmatpush1.msra.mxu0 0.0
    %526 = vmatprep.subr.mxu0 0.0
    %527 = vmatpush1.msra.mxu0 0.0
    %528 = vmatprep.subr.mxu0 0.0
    %529 = vmatpush1.msra.mxu0 0.0
    %530 = vmatprep.mubr.f32.mxu0 0.0
    %531 = vmatmul.mubr.f32.gmra.mrb[0].mxu0 %v351
    %v532 = vpop.f32.mrb[0].mxu0
    %v533 = vadd.f32 0.0, %v532
    %v534 = vpop.f32.mrb[0].mxu0
    %535 = vmatprep.mubr.f32.mxu0 0.0
    %536 = vmatmul.mubr.f32.gmra.mrb[0].mxu0 %v352
    %v537 = vpop.f32.mrb[0].mxu0
    %v538 = vadd.f32 0.0, %v537
    %v539 = vpop.f32.mrb[0].mxu0
    %540 = vdwg.mxu0
    %v541 = vadd.f32 %v448, %v533
    %v542 = vadd.f32 %v449, %v538
    %543 = vst [vmem:[%s12] sm:$0xff] %v541
    %544 = vst [vmem:[%s12 + $0x8] sm:$0xff] %v542
    // Predicated region
    $region42: #{closed_call.24} parent=1 // pred_check
      _
    $region43: #{closed_call.24} parent=1 // pred_check_branch
      %546 = sbr.rel (0) target = $region45
    $region44: #{closed_call.24} parent=1 // pred_region
      %s548 = ssub.s32 256, 256
      %549 = vsyncadd [#allocation3], %s548
      %s550 = sshll.u32 [#allocation2], 4
      %s551 = int_to_ptr.vmem [resolvable:$true] %s550
      %556 = dma.vmem_to_hbm [thread:$0]  %s551, 256, %s10, [#allocation3], 128, 128, 8
    $region45: #{closed_call.24} parent=1 // pred_fallthru
      _
    // Predicated region
    $region46: #{closed_call.24} parent=1 // pred_check
      _
    $region47: #{closed_call.24} parent=1 // pred_check_branch
      %558 = sbr.rel (0) target = $region49
    $region48: #{closed_call.24} parent=1 // pred_region
      _
    $region49: #{closed_call.24} parent=1 // pred_fallthru
      _
    // Predicated region
    $region50: #{closed_call.24} parent=1 // pred_check
      _
    $region51: #{closed_call.24} parent=1 // pred_check_branch
      %560 = sbr.rel (0) target = $region53
    $region52: #{closed_call.24} parent=1 // pred_region
      _
    $region53: #{closed_call.24} parent=1 // pred_fallthru
      _
    // Predicated region
    $region54: #{closed_call.24} parent=1 // pred_check
      _
    $region55: #{closed_call.24} parent=1 // pred_check_branch
      %562 = sbr.rel (0) target = $region57
    $region56: #{closed_call.24} parent=1 // pred_region
      %563 = dma.done [#allocation3], 256
    $region57: #{closed_call.24} parent=1 // pred_fallthru
      _
    // Predicated region
    $region58: #{closed_call.24} parent=1 // pred_check
      _
    $region59: #{closed_call.24} parent=1 // pred_check_branch
      %565 = sbr.rel (0) target = $region61
    $region60: #{closed_call.24} parent=1 // pred_region
      _
    $region61: #{closed_call.24} parent=1 // pred_fallthru
      _
    // Predicated region
    $region62: #{closed_call.24} parent=1 // pred_check
      _
    $region63: #{closed_call.24} parent=1 // pred_check_branch
      %567 = sbr.rel (0) target = $region65
    $region64: #{closed_call.24} parent=1 // pred_region
      _
    $region65: #{closed_call.24} parent=1 // pred_fallthru
      _
    %568 = vsyncpa [#allocation3], 1

</llo_original>
